<compile_context>
chip_gen: v6e
topology: v6e:2x2x1
jax: 0.10.0
libtpu: 0.0.40
codegen_flags: <defaults>
</compile_context>

<pallas_src>
import functools
import math

import jax
import jax.numpy as jnp
from jax.experimental import pallas as pl
from jax.experimental.pallas import tpu as pltpu

EPS = 1e-5
EXPANSION = 4
LANE = 128


def _round_up(x, m):
    return (x + m - 1) // m * m


# ------------------------------ fused kernel ---------------------------------

def _bn_train(y, gamma, beta):
    """Training-mode BatchNorm2d: biased per-batch stats, single pass, f32 math."""
    inv_m = 1.0 / y.shape[0]
    mean = jnp.sum(y, axis=0, keepdims=True) * inv_m
    ex2 = jnp.sum(y * y, axis=0, keepdims=True) * inv_m
    var = jnp.maximum(ex2 - mean * mean, 0.0)
    return (y - mean) * jax.lax.rsqrt(var + EPS) * gamma + beta


def _bottleneck_kernel(*refs, N, H, W, stride, has_proj):
    if has_proj:
        (x_ref, xds_ref, w1_ref, w2_ref, w3_ref, ws_ref,
         g1_ref, b1_ref, g2_ref, b2_ref, g3_ref, b3_ref, gs_ref, bs_ref,
         o_ref, y1s_ref) = refs
    else:
        (x_ref, w1_ref, w2_ref, w3_ref,
         g1_ref, b1_ref, g2_ref, b2_ref, g3_ref, b3_ref,
         o_ref, y1s_ref) = refs

    s = stride
    Ho, Wo = H // s, W // s            # output spatial extent == per-residue data extent
    M2 = N * Ho * Wo
    C1p = w1_ref.shape[1]
    Qh, Qw = y1s_ref.shape[1], y1s_ref.shape[2]
    chunk = N * Ho * Wo                # rows per residue chunk of the conv1 output

    # ---- conv1: 1x1 DO-Conv + BN + ReLU over all N*H*W positions -------------
    # x rows arrive residue-major (grouped by ((h+1)%s, (w+1)%s)); the order is
    # irrelevant for a 1x1 conv + BN, and it makes the conv2 tap gather below a
    # handful of stride-free rectangular slices.
    x = x_ref[...]
    y1 = jnp.dot(x.astype(jnp.bfloat16), w1_ref[...],
                 preferred_element_type=jnp.float32)
    y1 = jnp.maximum(_bn_train(y1, g1_ref[...], b1_ref[...]), 0.0)     # (M1, C1p)

    # ---- stage conv1 output into the residue-layout halo scratch -------------
    # y1s_ref[(rh*s+rw)*N + n, q, p, c] holds the zero-padded conv1 output at padded
    # position (hp, wp) = (s*q + rh, s*p + rw) of image n.  Only the halo strips a
    # tap can read are zeroed; the interior is one rectangular store per residue.
    for rh in range(s):
        qh0 = 1 if rh == 0 else 0
        for rw in range(s):
            qw0 = 1 if rw == 0 else 0
            r = rh * s + rw
            rows = slice(r * N, (r + 1) * N)
            if qh0 > 0:
                y1s_ref[rows, 0:qh0, :, :] = jnp.zeros((N, qh0, Qw, C1p), jnp.float32)
            if qh0 + Ho < Qh:
                y1s_ref[rows, qh0 + Ho:Qh, :, :] = jnp.zeros(
                    (N, Qh - qh0 - Ho, Qw, C1p), jnp.float32)
            if qw0 > 0:
                y1s_ref[rows, :, 0:qw0, :] = jnp.zeros((N, Qh, qw0, C1p), jnp.float32)
            if qw0 + Wo < Qw:
                y1s_ref[rows, :, qw0 + Wo:Qw, :] = jnp.zeros(
                    (N, Qh, Qw - qw0 - Wo, C1p), jnp.float32)
            y1s_ref[rows, qh0:qh0 + Ho, qw0:qw0 + Wo, :] = (
                y1[r * chunk:(r + 1) * chunk].reshape(N, Ho, Wo, C1p))

    # ---- conv2: 3x3 stride-s DO-Conv as ONE fused MXU dot (K = 9*C1p) ---------
    # Tap (ky,kx) needs padded positions (s*ho+ky, s*wo+kx): residue (ky%s, kx%s),
    # block coords (ho + ky//s, wo + kx//s) -> one rectangular slab per tap.
    taps = []
    for ky in range(3):
        ay, by = ky // s, ky % s
        for kx in range(3):
            ax, bx = kx // s, kx % s
            r = by * s + bx
            taps.append(y1s_ref[r * N:(r + 1) * N, ay:ay + Ho, ax:ax + Wo, :])
    tap_tile = jnp.concatenate(taps, axis=3).reshape(M2, 9 * C1p)
    acc2 = jnp.dot(tap_tile.astype(jnp.bfloat16), w2_ref[...],
                   preferred_element_type=jnp.float32)                 # (M2, C2p)
    y2 = jnp.maximum(_bn_train(acc2, g2_ref[...], b2_ref[...]), 0.0)

    # ---- conv3: 1x1 DO-Conv + BN (no ReLU) ------------------------------------
    y3 = jnp.dot(y2.astype(jnp.bfloat16), w3_ref[...],
                 preferred_element_type=jnp.float32)                   # (M2, C4p)
    y3 = _bn_train(y3, g3_ref[...], b3_ref[...])

    # ---- shortcut --------------------------------------------------------------
    if has_proj:
        sc = jnp.dot(xds_ref[...].astype(jnp.bfloat16), ws_ref[...],
                     preferred_element_type=jnp.float32)
        sc = _bn_train(sc, gs_ref[...], bs_ref[...])
    else:
        # identity: stride == 1, so residue-major row order equals the natural
        # (n, h, w) order; x was zero-padded to C4p lanes in the wrapper.
        sc = x.astype(jnp.float32)

    # ---- residual add + ReLU: single lane-dense bf16 store ---------------------
    o_ref[...] = jnp.maximum(y3 + sc, 0.0).astype(o_ref.dtype)


# ------------------------------- parameters -----------------------------------

def _kaiming_uniform(key, out_ch, in_ch, d_mul):
    # init.kaiming_uniform_(W, a=sqrt(5)) on (O, I, D_mul) -> bound = 1/sqrt(I*D_mul)
    bound = 1.0 / math.sqrt(in_ch * d_mul)
    return jax.random.uniform(key, (out_ch, in_ch, d_mul), jnp.float32, -bound, bound)


def init_bottleneck_params(key, in_channels, out_channels, stride):
    ks = jax.random.split(key, 4)
    oc4 = out_channels * EXPANSION

    # DOConv 1x1 (M*N == 1 -> DoW == W)
    W1 = _kaiming_uniform(ks[0], out_channels, in_channels, 1)
    w1 = W1.reshape(out_channels, in_channels).T                 # (Cin, C1)

    # DOConv 3x3: D = zeros + D_diag (identity), DoW = einsum('ims,ois->oim', D, W)
    W2 = _kaiming_uniform(ks[1], out_channels, out_channels, 9)
    D = jnp.zeros((out_channels, 9, 9), jnp.float32) + jnp.tile(
        jnp.eye(9, dtype=jnp.float32)[None], (out_channels, 1, 1))
    DoW2 = jnp.einsum('ims,ois->oim', D, W2).reshape(out_channels, out_channels, 3, 3)
    # per-tap matmul weights: (9, cin, cout), tap index = ky*3 + kx
    w2 = jnp.transpose(DoW2, (2, 3, 1, 0)).reshape(9, out_channels, out_channels)

    W3 = _kaiming_uniform(ks[2], oc4, out_channels, 1)
    w3 = W3.reshape(oc4, out_channels).T                         # (C1, 4*C)

    params = {
        'w1': w1, 'g1': jnp.ones(out_channels), 'b1': jnp.zeros(out_channels),
        'w2': w2, 'g2': jnp.ones(out_channels), 'b2': jnp.zeros(out_channels),
        'w3': w3, 'g3': jnp.ones(oc4), 'b3': jnp.zeros(oc4),
        'ws': None, 'gs': None, 'bs': None,
    }
    if stride != 1 or in_channels != oc4:
        Ws = _kaiming_uniform(ks[3], oc4, in_channels, 1)
        params['ws'] = Ws.reshape(oc4, in_channels).T            # (Cin, 4*C)
        params['gs'] = jnp.ones(oc4)
        params['bs'] = jnp.zeros(oc4)
    return params


# --------------------------------- wrapper --------------------------------------

def bottleneck_forward_nhwc(x_nhwc, params, stride):
    """One fused BottleNeck block.  x: (N, H, W, Cin) f32/bf16 NHWC.
    Returns (N, H//stride, W//stride, 4*out_channels) bf16 NHWC.

    NOTE: choosing W//stride as a multiple of 8 keeps the in-kernel reshapes
    layout-preserving (sublane-aligned); other widths still work but may relayout.
    """
    N, H, W, Cin = x_nhwc.shape
    s = stride
    assert s in (1, 2) and H % s == 0 and W % s == 0
    C1 = params['w1'].shape[1]
    C2 = params['w2'].shape[2]
    C4 = params['w3'].shape[1]
    has_proj = params['ws'] is not None
    if not has_proj:
        # PyTorch construction rule: identity shortcut only when stride==1 and
        # in_channels == 4*out_channels (guards the M1==M2 / width assumptions).
        assert s == 1 and Cin == C4

    C1p = _round_up(C1, LANE)
    C2p = _round_up(C2, LANE)
    C4p = _round_up(C4, LANE)             # lane-dense output slab
    Ho, Wo = H // s, W // s
    M1, M2 = N * H * W, N * Ho * Wo
    Qh, Qw = Ho + 2 // s, Wo + 2 // s     # per-residue padded extents (3x3, pad=1)

    # Residue-major row permutation of x (wrapper-side XLA).  This is what lets the
    # kernel read each conv2 tap as one rectangular, stride-free slab.
    chunks = []
    for rh in range(s):
        for rw in range(s):
            chunks.append(x_nhwc[:, (rh - 1) % s::s, (rw - 1) % s::s, :])
    x2d = jnp.concatenate([c.reshape(M2, Cin) for c in chunks], axis=0)   # (M1, Cin)

    Cin_k = Cin
    if not has_proj:
        Cin_k = C4p                        # lane-dense identity shortcut
        x2d = jnp.pad(x2d, ((0, 0), (0, Cin_k - Cin)))

    def pad2(a, rows, cols):
        return jnp.pad(a, ((0, rows - a.shape[0]), (0, cols - a.shape[1])))

    def padv(v, width, value=0.0):
        return jnp.pad(v, (0, width - v.shape[0]),
                       constant_values=value).reshape(1, width)

    # layout plumbing: weights bf16, all channel groups padded to 128-lane multiples
    w1 = pad2(params['w1'], Cin_k, C1p).astype(jnp.bfloat16)
    w2 = jnp.pad(params['w2'], ((0, 0), (0, C1p - C1), (0, C2p - C2)))
    w2 = w2.reshape(9 * C1p, C2p).astype(jnp.bfloat16)   # row index = tap*C1p + cin
    w3 = pad2(params['w3'], C2p, C4p).astype(jnp.bfloat16)
    g1, b1 = padv(params['g1'], C1p, 1.0), padv(params['b1'], C1p)
    g2, b2 = padv(params['g2'], C2p, 1.0), padv(params['b2'], C2p)
    g3, b3 = padv(params['g3'], C4p, 1.0), padv(params['b3'], C4p)

    args = [x2d]
    in_specs = [pl.BlockSpec((M1, Cin_k), lambda i: (0, 0))]
    if has_proj:
        # strided downsample for the 1x1/stride-s projection, done once in XLA
        xds = x_nhwc[:, ::s, ::s, :].reshape(M2, Cin)
        args.append(xds)
        in_specs.append(pl.BlockSpec((M2, Cin), lambda i: (0, 0)))
    args += [w1, w2, w3]
    in_specs += [pl.BlockSpec(w1.shape, lambda i: (0, 0)),
                 pl.BlockSpec(w2.shape, lambda i: (0, 0)),
                 pl.BlockSpec(w3.shape, lambda i: (0, 0))]
    if has_proj:
        ws = pad2(params['ws'], Cin, C4p).astype(jnp.bfloat16)
        gs, bs = padv(params['gs'], C4p, 1.0), padv(params['bs'], C4p)
        args.append(ws)
        in_specs.append(pl.BlockSpec(ws.shape, lambda i: (0, 0)))
        bn_args = [g1, b1, g2, b2, g3, b3, gs, bs]
    else:
        bn_args = [g1, b1, g2, b2, g3, b3]
    args += bn_args
    in_specs += [pl.BlockSpec(a.shape, lambda i: (0, 0)) for a in bn_args]

    kern = functools.partial(_bottleneck_kernel, N=N, H=H, W=W,
                             stride=s, has_proj=has_proj)
    out = pl.pallas_call(
        kern,
        out_shape=jax.ShapeDtypeStruct((M2, C4p), jnp.bfloat16),
        grid=(1,),
        in_specs=in_specs,
        out_specs=pl.BlockSpec((M2, C4p), lambda i: (0, 0)),
        scratch_shapes=[pltpu.VMEM((s * s * N, Qh, Qw, C1p), jnp.float32)],
        compiler_params=pltpu.CompilerParams(
            dimension_semantics=("arbitrary",),
            # v7x-safe (64 MiB physical); raise toward ~100 MiB on v5e/v6e at bigger shapes
            vmem_limit_bytes=48 * 1024 * 1024,
        ),
    )(*args)

    return out[:, :C4].reshape(N, Ho, Wo, C4)             # drop lane padding, stay NHWC


# ----------------------------------- main ----------------------------------------

if __name__ == "__main__":
    key = jax.random.PRNGKey(0)
    k_x, k_p1, k_p2 = jax.random.split(key, 3)

    in_channels, out_channels, stride = 16, 8, 2
    N, H, W = 2, 16, 16
    x_nchw = jax.random.normal(k_x, (N, in_channels, H, W), jnp.float32)   # NCHW input

    # first block of a stage (projection shortcut, stride 2) followed by a second
    # block (identity shortcut, stride 1) — mirrors DoResNet._make_layer chaining.
    p1 = init_bottleneck_params(k_p1, in_channels, out_channels, stride)
    p2 = init_bottleneck_params(k_p2, out_channels * EXPANSION, out_channels, 1)

    x = jnp.transpose(x_nchw, (0, 2, 3, 1))            # NCHW -> NHWC exactly once
    y = bottleneck_forward_nhwc(x, p1, stride)
    y = bottleneck_forward_nhwc(y, p2, 1)
    jax.block_until_ready(y)

    expected = (N, H // stride, W // stride, out_channels * EXPANSION)
    assert y.shape == expected, (y.shape, expected)
    assert y.dtype == jnp.bfloat16
    print("KERNEL_OK")
</pallas_src>

<mosaic_0001>
module attributes {stable_mosaic.version = 11 : i64} {
  func.func @_bottleneck_kernel(%arg0: i32, %arg1: memref<512x16xf32, #tpu.memory_space<vmem>>, %arg2: memref<128x16xf32, #tpu.memory_space<vmem>>, %arg3: memref<16x128xbf16, #tpu.memory_space<vmem>>, %arg4: memref<1152x128xbf16, #tpu.memory_space<vmem>>, %arg5: memref<128x128xbf16, #tpu.memory_space<vmem>>, %arg6: memref<16x128xbf16, #tpu.memory_space<vmem>>, %arg7: memref<1x128xf32, #tpu.memory_space<vmem>>, %arg8: memref<1x128xf32, #tpu.memory_space<vmem>>, %arg9: memref<1x128xf32, #tpu.memory_space<vmem>>, %arg10: memref<1x128xf32, #tpu.memory_space<vmem>>, %arg11: memref<1x128xf32, #tpu.memory_space<vmem>>, %arg12: memref<1x128xf32, #tpu.memory_space<vmem>>, %arg13: memref<1x128xf32, #tpu.memory_space<vmem>>, %arg14: memref<1x128xf32, #tpu.memory_space<vmem>>, %arg15: memref<128x128xbf16, #tpu.memory_space<vmem>>, %arg16: memref<8x9x9x128xf32, #tpu.memory_space<vmem>>) attributes {dimension_semantics = [#tpu.dimension_semantics<arbitrary>], iteration_bounds = array<i64: 1>, scalar_prefetch = 0 : i64, scratch_operands = 1 : i64, tpu.core_type = #tpu.core_type<tc>, window_params = [{pipeline_mode = #tpu.pipeline_mode<synchronous>, transform_indices = @transform_0, window_bounds = array<i64: 512, 16>}, {pipeline_mode = #tpu.pipeline_mode<synchronous>, transform_indices = @transform_1, window_bounds = array<i64: 128, 16>}, {pipeline_mode = #tpu.pipeline_mode<synchronous>, transform_indices = @transform_2, window_bounds = array<i64: 16, 128>}, {pipeline_mode = #tpu.pipeline_mode<synchronous>, transform_indices = @transform_3, window_bounds = array<i64: 1152, 128>}, {pipeline_mode = #tpu.pipeline_mode<synchronous>, transform_indices = @transform_4, window_bounds = array<i64: 128, 128>}, {pipeline_mode = #tpu.pipeline_mode<synchronous>, transform_indices = @transform_5, window_bounds = array<i64: 16, 128>}, {pipeline_mode = #tpu.pipeline_mode<synchronous>, transform_indices = @transform_6, window_bounds = array<i64: 1, 128>}, {pipeline_mode = #tpu.pipeline_mode<synchronous>, transform_indices = @transform_7, window_bounds = array<i64: 1, 128>}, {pipeline_mode = #tpu.pipeline_mode<synchronous>, transform_indices = @transform_8, window_bounds = array<i64: 1, 128>}, {pipeline_mode = #tpu.pipeline_mode<synchronous>, transform_indices = @transform_9, window_bounds = array<i64: 1, 128>}, {pipeline_mode = #tpu.pipeline_mode<synchronous>, transform_indices = @transform_10, window_bounds = array<i64: 1, 128>}, {pipeline_mode = #tpu.pipeline_mode<synchronous>, transform_indices = @transform_11, window_bounds = array<i64: 1, 128>}, {pipeline_mode = #tpu.pipeline_mode<synchronous>, transform_indices = @transform_12, window_bounds = array<i64: 1, 128>}, {pipeline_mode = #tpu.pipeline_mode<synchronous>, transform_indices = @transform_13, window_bounds = array<i64: 1, 128>}, {pipeline_mode = #tpu.pipeline_mode<synchronous>, transform_indices = @transform_14, window_bounds = array<i64: 128, 128>}]} {
    %c0 = arith.constant 0 : index
    %c0_0 = arith.constant 0 : index
    %0 = vector.load %arg1[%c0, %c0_0] : memref<512x16xf32, #tpu.memory_space<vmem>>, vector<512x16xf32>
    %1 = arith.truncf %0 : vector<512x16xf32> to vector<512x16xbf16>
    %c0_1 = arith.constant 0 : index
    %c0_2 = arith.constant 0 : index
    %2 = vector.load %arg3[%c0_1, %c0_2] : memref<16x128xbf16, #tpu.memory_space<vmem>>, vector<16x128xbf16>
    %cst = arith.constant dense<0.000000e+00> : vector<512x128xf32>
    %3 = tpu.matmul %1, %2, %cst {dimension_numbers = #tpu.dot_dimension_numbers<[1], [0], [0], [1], [0, 0, 1, 1], [], []>} : vector<512x16xbf16>, vector<16x128xbf16>, vector<512x128xf32> -> vector<512x128xf32>
    %c0_3 = arith.constant 0 : index
    %c0_4 = arith.constant 0 : index
    %4 = vector.load %arg7[%c0_3, %c0_4] : memref<1x128xf32, #tpu.memory_space<vmem>>, vector<1x128xf32>
    %c0_5 = arith.constant 0 : index
    %c0_6 = arith.constant 0 : index
    %5 = vector.load %arg8[%c0_5, %c0_6] : memref<1x128xf32, #tpu.memory_space<vmem>>, vector<1x128xf32>
    %cst_7 = arith.constant dense<0.000000e+00> : vector<128xf32>
    %6 = vector.multi_reduction <add>, %3, %cst_7 [0] : vector<512x128xf32> to vector<128xf32>
    %7 = vector.shape_cast %6 : vector<128xf32> to vector<1x128xf32>
    %cst_8 = arith.constant 0.001953125 : f32
    %8 = vector.broadcast %cst_8 : f32 to vector<1x128xf32>
    %9 = arith.mulf %7, %8 : vector<1x128xf32>
    %10 = arith.mulf %3, %3 : vector<512x128xf32>
    %cst_9 = arith.constant dense<0.000000e+00> : vector<128xf32>
    %11 = vector.multi_reduction <add>, %10, %cst_9 [0] : vector<512x128xf32> to vector<128xf32>
    %12 = vector.shape_cast %11 : vector<128xf32> to vector<1x128xf32>
    %cst_10 = arith.constant 0.001953125 : f32
    %13 = vector.broadcast %cst_10 : f32 to vector<1x128xf32>
    %14 = arith.mulf %12, %13 : vector<1x128xf32>
    %15 = arith.mulf %9, %9 : vector<1x128xf32>
    %16 = arith.subf %14, %15 : vector<1x128xf32>
    %cst_11 = arith.constant 0.000000e+00 : f32
    %17 = vector.broadcast %cst_11 : f32 to vector<1x128xf32>
    %18 = arith.maximumf %16, %17 : vector<1x128xf32>
    %19 = vector.broadcast %9 : vector<1x128xf32> to vector<512x128xf32>
    %20 = arith.subf %3, %19 : vector<512x128xf32>
    %cst_12 = arith.constant 9.99999974E-6 : f32
    %21 = vector.broadcast %cst_12 : f32 to vector<1x128xf32>
    %22 = arith.addf %18, %21 : vector<1x128xf32>
    %23 = math.rsqrt %22 : vector<1x128xf32>
    %24 = vector.broadcast %23 : vector<1x128xf32> to vector<512x128xf32>
    %25 = arith.mulf %20, %24 : vector<512x128xf32>
    %26 = vector.broadcast %4 : vector<1x128xf32> to vector<512x128xf32>
    %27 = arith.mulf %25, %26 : vector<512x128xf32>
    %28 = vector.broadcast %5 : vector<1x128xf32> to vector<512x128xf32>
    %29 = arith.addf %27, %28 : vector<512x128xf32>
    %cst_13 = arith.constant 0.000000e+00 : f32
    %30 = vector.broadcast %cst_13 : f32 to vector<512x128xf32>
    %31 = arith.maximumf %29, %30 : vector<512x128xf32>
    %cst_14 = arith.constant 0.000000e+00 : f32
    %32 = vector.broadcast %cst_14 : f32 to vector<2x1x9x128xf32>
    %c0_15 = arith.constant 0 : index
    %c0_16 = arith.constant 0 : index
    %c0_17 = arith.constant 0 : index
    %c0_18 = arith.constant 0 : index
    %33 = vector.load %arg16[%c0_15, %c0_16, %c0_17, %c0_18] : memref<8x9x9x128xf32, #tpu.memory_space<vmem>>, vector<2x1x9x128xf32>
    tpu.vector_store %arg16[%c0_15, %c0_16, %c0_17, %c0_18], %32 {strides = array<i32>} : memref<8x9x9x128xf32, #tpu.memory_space<vmem>>, vector<2x1x9x128xf32>,
    %cst_19 = arith.constant 0.000000e+00 : f32
    %34 = vector.broadcast %cst_19 : f32 to vector<2x9x1x128xf32>
    %c0_20 = arith.constant 0 : index
    %c0_21 = arith.constant 0 : index
    %c0_22 = arith.constant 0 : index
    %c0_23 = arith.constant 0 : index
    %35 = vector.load %arg16[%c0_20, %c0_21, %c0_22, %c0_23] : memref<8x9x9x128xf32, #tpu.memory_space<vmem>>, vector<2x9x1x128xf32>
    tpu.vector_store %arg16[%c0_20, %c0_21, %c0_22, %c0_23], %34 {strides = array<i32>} : memref<8x9x9x128xf32, #tpu.memory_space<vmem>>, vector<2x9x1x128xf32>,
    %36 = vector.extract_strided_slice %31 {offsets = [0, 0], sizes = [128, 128], strides = [1, 1]} : vector<512x128xf32> to vector<128x128xf32>
    %37 = vector.shape_cast %36 : vector<128x128xf32> to vector<2x8x8x128xf32>
    %c0_24 = arith.constant 0 : index
    %c1 = arith.constant 1 : index
    %c1_25 = arith.constant 1 : index
    %c0_26 = arith.constant 0 : index
    %38 = vector.load %arg16[%c0_24, %c1, %c1_25, %c0_26] : memref<8x9x9x128xf32, #tpu.memory_space<vmem>>, vector<2x8x8x128xf32>
    tpu.vector_store %arg16[%c0_24, %c1, %c1_25, %c0_26], %37 {strides = array<i32>} : memref<8x9x9x128xf32, #tpu.memory_space<vmem>>, vector<2x8x8x128xf32>,
    %cst_27 = arith.constant 0.000000e+00 : f32
    %39 = vector.broadcast %cst_27 : f32 to vector<2x1x9x128xf32>
    %c2 = arith.constant 2 : index
    %c0_28 = arith.constant 0 : index
    %c0_29 = arith.constant 0 : index
    %c0_30 = arith.constant 0 : index
    %40 = vector.load %arg16[%c2, %c0_28, %c0_29, %c0_30] : memref<8x9x9x128xf32, #tpu.memory_space<vmem>>, vector<2x1x9x128xf32>
    tpu.vector_store %arg16[%c2, %c0_28, %c0_29, %c0_30], %39 {strides = array<i32>} : memref<8x9x9x128xf32, #tpu.memory_space<vmem>>, vector<2x1x9x128xf32>,
    %cst_31 = arith.constant 0.000000e+00 : f32
    %41 = vector.broadcast %cst_31 : f32 to vector<2x9x1x128xf32>
    %c2_32 = arith.constant 2 : index
    %c0_33 = arith.constant 0 : index
    %c8 = arith.constant 8 : index
    %c0_34 = arith.constant 0 : index
    %42 = vector.load %arg16[%c2_32, %c0_33, %c8, %c0_34] : memref<8x9x9x128xf32, #tpu.memory_space<vmem>>, vector<2x9x1x128xf32>
    tpu.vector_store %arg16[%c2_32, %c0_33, %c8, %c0_34], %41 {strides = array<i32>} : memref<8x9x9x128xf32, #tpu.memory_space<vmem>>, vector<2x9x1x128xf32>,
    %43 = vector.extract_strided_slice %31 {offsets = [128, 0], sizes = [128, 128], strides = [1, 1]} : vector<512x128xf32> to vector<128x128xf32>
    %44 = vector.shape_cast %43 : vector<128x128xf32> to vector<2x8x8x128xf32>
    %c2_35 = arith.constant 2 : index
    %c1_36 = arith.constant 1 : index
    %c0_37 = arith.constant 0 : index
    %c0_38 = arith.constant 0 : index
    %45 = vector.load %arg16[%c2_35, %c1_36, %c0_37, %c0_38] : memref<8x9x9x128xf32, #tpu.memory_space<vmem>>, vector<2x8x8x128xf32>
    tpu.vector_store %arg16[%c2_35, %c1_36, %c0_37, %c0_38], %44 {strides = array<i32>} : memref<8x9x9x128xf32, #tpu.memory_space<vmem>>, vector<2x8x8x128xf32>,
    %cst_39 = arith.constant 0.000000e+00 : f32
    %46 = vector.broadcast %cst_39 : f32 to vector<2x1x9x128xf32>
    %c4 = arith.constant 4 : index
    %c8_40 = arith.constant 8 : index
    %c0_41 = arith.constant 0 : index
    %c0_42 = arith.constant 0 : index
    %47 = vector.load %arg16[%c4, %c8_40, %c0_41, %c0_42] : memref<8x9x9x128xf32, #tpu.memory_space<vmem>>, vector<2x1x9x128xf32>
    tpu.vector_store %arg16[%c4, %c8_40, %c0_41, %c0_42], %46 {strides = array<i32>} : memref<8x9x9x128xf32, #tpu.memory_space<vmem>>, vector<2x1x9x128xf32>,
    %cst_43 = arith.constant 0.000000e+00 : f32
    %48 = vector.broadcast %cst_43 : f32 to vector<2x9x1x128xf32>
    %c4_44 = arith.constant 4 : index
    %c0_45 = arith.constant 0 : index
    %c0_46 = arith.constant 0 : index
    %c0_47 = arith.constant 0 : index
    %49 = vector.load %arg16[%c4_44, %c0_45, %c0_46, %c0_47] : memref<8x9x9x128xf32, #tpu.memory_space<vmem>>, vector<2x9x1x128xf32>
    tpu.vector_store %arg16[%c4_44, %c0_45, %c0_46, %c0_47], %48 {strides = array<i32>} : memref<8x9x9x128xf32, #tpu.memory_space<vmem>>, vector<2x9x1x128xf32>,
    %50 = vector.extract_strided_slice %31 {offsets = [256, 0], sizes = [128, 128], strides = [1, 1]} : vector<512x128xf32> to vector<128x128xf32>
    %51 = vector.shape_cast %50 : vector<128x128xf32> to vector<2x8x8x128xf32>
    %c4_48 = arith.constant 4 : index
    %c0_49 = arith.constant 0 : index
    %c1_50 = arith.constant 1 : index
    %c0_51 = arith.constant 0 : index
    %52 = vector.load %arg16[%c4_48, %c0_49, %c1_50, %c0_51] : memref<8x9x9x128xf32, #tpu.memory_space<vmem>>, vector<2x8x8x128xf32>
    tpu.vector_store %arg16[%c4_48, %c0_49, %c1_50, %c0_51], %51 {strides = array<i32>} : memref<8x9x9x128xf32, #tpu.memory_space<vmem>>, vector<2x8x8x128xf32>,
    %cst_52 = arith.constant 0.000000e+00 : f32
    %53 = vector.broadcast %cst_52 : f32 to vector<2x1x9x128xf32>
    %c6 = arith.constant 6 : index
    %c8_53 = arith.constant 8 : index
    %c0_54 = arith.constant 0 : index
    %c0_55 = arith.constant 0 : index
    %54 = vector.load %arg16[%c6, %c8_53, %c0_54, %c0_55] : memref<8x9x9x128xf32, #tpu.memory_space<vmem>>, vector<2x1x9x128xf32>
    tpu.vector_store %arg16[%c6, %c8_53, %c0_54, %c0_55], %53 {strides = array<i32>} : memref<8x9x9x128xf32, #tpu.memory_space<vmem>>, vector<2x1x9x128xf32>,
    %cst_56 = arith.constant 0.000000e+00 : f32
    %55 = vector.broadcast %cst_56 : f32 to vector<2x9x1x128xf32>
    %c6_57 = arith.constant 6 : index
    %c0_58 = arith.constant 0 : index
    %c8_59 = arith.constant 8 : index
    %c0_60 = arith.constant 0 : index
    %56 = vector.load %arg16[%c6_57, %c0_58, %c8_59, %c0_60] : memref<8x9x9x128xf32, #tpu.memory_space<vmem>>, vector<2x9x1x128xf32>
    tpu.vector_store %arg16[%c6_57, %c0_58, %c8_59, %c0_60], %55 {strides = array<i32>} : memref<8x9x9x128xf32, #tpu.memory_space<vmem>>, vector<2x9x1x128xf32>,
    %57 = vector.extract_strided_slice %31 {offsets = [384, 0], sizes = [128, 128], strides = [1, 1]} : vector<512x128xf32> to vector<128x128xf32>
    %58 = vector.shape_cast %57 : vector<128x128xf32> to vector<2x8x8x128xf32>
    %c6_61 = arith.constant 6 : index
    %c0_62 = arith.constant 0 : index
    %c0_63 = arith.constant 0 : index
    %c0_64 = arith.constant 0 : index
    %59 = vector.load %arg16[%c6_61, %c0_62, %c0_63, %c0_64] : memref<8x9x9x128xf32, #tpu.memory_space<vmem>>, vector<2x8x8x128xf32>
    tpu.vector_store %arg16[%c6_61, %c0_62, %c0_63, %c0_64], %58 {strides = array<i32>} : memref<8x9x9x128xf32, #tpu.memory_space<vmem>>, vector<2x8x8x128xf32>,
    %c0_65 = arith.constant 0 : index
    %c0_66 = arith.constant 0 : index
    %c0_67 = arith.constant 0 : index
    %c0_68 = arith.constant 0 : index
    %60 = vector.load %arg16[%c0_65, %c0_66, %c0_67, %c0_68] : memref<8x9x9x128xf32, #tpu.memory_space<vmem>>, vector<2x8x8x128xf32>
    %c2_69 = arith.constant 2 : index
    %c0_70 = arith.constant 0 : index
    %c0_71 = arith.constant 0 : index
    %c0_72 = arith.constant 0 : index
    %61 = vector.load %arg16[%c2_69, %c0_70, %c0_71, %c0_72] : memref<8x9x9x128xf32, #tpu.memory_space<vmem>>, vector<2x8x8x128xf32>
    %c0_73 = arith.constant 0 : index
    %c0_74 = arith.constant 0 : index
    %c1_75 = arith.constant 1 : index
    %c0_76 = arith.constant 0 : index
    %62 = vector.load %arg16[%c0_73, %c0_74, %c1_75, %c0_76] : memref<8x9x9x128xf32, #tpu.memory_space<vmem>>, vector<2x8x8x128xf32>
    %c4_77 = arith.constant 4 : index
    %c0_78 = arith.constant 0 : index
    %c0_79 = arith.constant 0 : index
    %c0_80 = arith.constant 0 : index
    %63 = vector.load %arg16[%c4_77, %c0_78, %c0_79, %c0_80] : memref<8x9x9x128xf32, #tpu.memory_space<vmem>>, vector<2x8x8x128xf32>
    %c6_81 = arith.constant 6 : index
    %c0_82 = arith.constant 0 : index
    %c0_83 = arith.constant 0 : index
    %c0_84 = arith.constant 0 : index
    %64 = vector.load %arg16[%c6_81, %c0_82, %c0_83, %c0_84] : memref<8x9x9x128xf32, #tpu.memory_space<vmem>>, vector<2x8x8x128xf32>
    %c4_85 = arith.constant 4 : index
    %c0_86 = arith.constant 0 : index
    %c1_87 = arith.constant 1 : index
    %c0_88 = arith.constant 0 : index
    %65 = vector.load %arg16[%c4_85, %c0_86, %c1_87, %c0_88] : memref<8x9x9x128xf32, #tpu.memory_space<vmem>>, vector<2x8x8x128xf32>
    %c0_89 = arith.constant 0 : index
    %c1_90 = arith.constant 1 : index
    %c0_91 = arith.constant 0 : index
    %c0_92 = arith.constant 0 : index
    %66 = vector.load %arg16[%c0_89, %c1_90, %c0_91, %c0_92] : memref<8x9x9x128xf32, #tpu.memory_space<vmem>>, vector<2x8x8x128xf32>
    %c2_93 = arith.constant 2 : index
    %c1_94 = arith.constant 1 : index
    %c0_95 = arith.constant 0 : index
    %c0_96 = arith.constant 0 : index
    %67 = vector.load %arg16[%c2_93, %c1_94, %c0_95, %c0_96] : memref<8x9x9x128xf32, #tpu.memory_space<vmem>>, vector<2x8x8x128xf32>
    %c0_97 = arith.constant 0 : index
    %c1_98 = arith.constant 1 : index
    %c1_99 = arith.constant 1 : index
    %c0_100 = arith.constant 0 : index
    %68 = vector.load %arg16[%c0_97, %c1_98, %c1_99, %c0_100] : memref<8x9x9x128xf32, #tpu.memory_space<vmem>>, vector<2x8x8x128xf32>
    %69 = tpu.concatenate %60, %61, %62, %63, %64, %65, %66, %67, %68 in 3 : vector<2x8x8x128xf32>, vector<2x8x8x128xf32>, vector<2x8x8x128xf32>, vector<2x8x8x128xf32>, vector<2x8x8x128xf32>, vector<2x8x8x128xf32>, vector<2x8x8x128xf32>, vector<2x8x8x128xf32>, vector<2x8x8x128xf32> -> vector<2x8x8x1152xf32>
    %70 = vector.shape_cast %69 : vector<2x8x8x1152xf32> to vector<128x1152xf32>
    %71 = arith.truncf %70 : vector<128x1152xf32> to vector<128x1152xbf16>
    %c0_101 = arith.constant 0 : index
    %c0_102 = arith.constant 0 : index
    %72 = vector.load %arg4[%c0_101, %c0_102] : memref<1152x128xbf16, #tpu.memory_space<vmem>>, vector<1152x128xbf16>
    %cst_103 = arith.constant dense<0.000000e+00> : vector<128x128xf32>
    %73 = tpu.matmul %71, %72, %cst_103 {dimension_numbers = #tpu.dot_dimension_numbers<[1], [0], [0], [1], [0, 0, 1, 1], [], []>} : vector<128x1152xbf16>, vector<1152x128xbf16>, vector<128x128xf32> -> vector<128x128xf32>
    %c0_104 = arith.constant 0 : index
    %c0_105 = arith.constant 0 : index
    %74 = vector.load %arg9[%c0_104, %c0_105] : memref<1x128xf32, #tpu.memory_space<vmem>>, vector<1x128xf32>
    %c0_106 = arith.constant 0 : index
    %c0_107 = arith.constant 0 : index
    %75 = vector.load %arg10[%c0_106, %c0_107] : memref<1x128xf32, #tpu.memory_space<vmem>>, vector<1x128xf32>
    %cst_108 = arith.constant dense<0.000000e+00> : vector<128xf32>
    %76 = vector.multi_reduction <add>, %73, %cst_108 [0] : vector<128x128xf32> to vector<128xf32>
    %77 = vector.shape_cast %76 : vector<128xf32> to vector<1x128xf32>
    %cst_109 = arith.constant 7.812500e-03 : f32
    %78 = vector.broadcast %cst_109 : f32 to vector<1x128xf32>
    %79 = arith.mulf %77, %78 : vector<1x128xf32>
    %80 = arith.mulf %73, %73 : vector<128x128xf32>
    %cst_110 = arith.constant dense<0.000000e+00> : vector<128xf32>
    %81 = vector.multi_reduction <add>, %80, %cst_110 [0] : vector<128x128xf32> to vector<128xf32>
    %82 = vector.shape_cast %81 : vector<128xf32> to vector<1x128xf32>
    %cst_111 = arith.constant 7.812500e-03 : f32
    %83 = vector.broadcast %cst_111 : f32 to vector<1x128xf32>
    %84 = arith.mulf %82, %83 : vector<1x128xf32>
    %85 = arith.mulf %79, %79 : vector<1x128xf32>
    %86 = arith.subf %84, %85 : vector<1x128xf32>
    %cst_112 = arith.constant 0.000000e+00 : f32
    %87 = vector.broadcast %cst_112 : f32 to vector<1x128xf32>
    %88 = arith.maximumf %86, %87 : vector<1x128xf32>
    %89 = vector.broadcast %79 : vector<1x128xf32> to vector<128x128xf32>
    %90 = arith.subf %73, %89 : vector<128x128xf32>
    %cst_113 = arith.constant 9.99999974E-6 : f32
    %91 = vector.broadcast %cst_113 : f32 to vector<1x128xf32>
    %92 = arith.addf %88, %91 : vector<1x128xf32>
    %93 = math.rsqrt %92 : vector<1x128xf32>
    %94 = vector.broadcast %93 : vector<1x128xf32> to vector<128x128xf32>
    %95 = arith.mulf %90, %94 : vector<128x128xf32>
    %96 = vector.broadcast %74 : vector<1x128xf32> to vector<128x128xf32>
    %97 = arith.mulf %95, %96 : vector<128x128xf32>
    %98 = vector.broadcast %75 : vector<1x128xf32> to vector<128x128xf32>
    %99 = arith.addf %97, %98 : vector<128x128xf32>
    %cst_114 = arith.constant 0.000000e+00 : f32
    %100 = vector.broadcast %cst_114 : f32 to vector<128x128xf32>
    %101 = arith.maximumf %99, %100 : vector<128x128xf32>
    %102 = arith.truncf %101 : vector<128x128xf32> to vector<128x128xbf16>
    %c0_115 = arith.constant 0 : index
    %c0_116 = arith.constant 0 : index
    %103 = vector.load %arg5[%c0_115, %c0_116] : memref<128x128xbf16, #tpu.memory_space<vmem>>, vector<128x128xbf16>
    %cst_117 = arith.constant dense<0.000000e+00> : vector<128x128xf32>
    %104 = tpu.matmul %102, %103, %cst_117 {dimension_numbers = #tpu.dot_dimension_numbers<[1], [0], [0], [1], [0, 0, 1, 1], [], []>} : vector<128x128xbf16>, vector<128x128xbf16>, vector<128x128xf32> -> vector<128x128xf32>
    %c0_118 = arith.constant 0 : index
    %c0_119 = arith.constant 0 : index
    %105 = vector.load %arg11[%c0_118, %c0_119] : memref<1x128xf32, #tpu.memory_space<vmem>>, vector<1x128xf32>
    %c0_120 = arith.constant 0 : index
    %c0_121 = arith.constant 0 : index
    %106 = vector.load %arg12[%c0_120, %c0_121] : memref<1x128xf32, #tpu.memory_space<vmem>>, vector<1x128xf32>
    %cst_122 = arith.constant dense<0.000000e+00> : vector<128xf32>
    %107 = vector.multi_reduction <add>, %104, %cst_122 [0] : vector<128x128xf32> to vector<128xf32>
    %108 = vector.shape_cast %107 : vector<128xf32> to vector<1x128xf32>
    %cst_123 = arith.constant 7.812500e-03 : f32
    %109 = vector.broadcast %cst_123 : f32 to vector<1x128xf32>
    %110 = arith.mulf %108, %109 : vector<1x128xf32>
    %111 = arith.mulf %104, %104 : vector<128x128xf32>
    %cst_124 = arith.constant dense<0.000000e+00> : vector<128xf32>
    %112 = vector.multi_reduction <add>, %111, %cst_124 [0] : vector<128x128xf32> to vector<128xf32>
    %113 = vector.shape_cast %112 : vector<128xf32> to vector<1x128xf32>
    %cst_125 = arith.constant 7.812500e-03 : f32
    %114 = vector.broadcast %cst_125 : f32 to vector<1x128xf32>
    %115 = arith.mulf %113, %114 : vector<1x128xf32>
    %116 = arith.mulf %110, %110 : vector<1x128xf32>
    %117 = arith.subf %115, %116 : vector<1x128xf32>
    %cst_126 = arith.constant 0.000000e+00 : f32
    %118 = vector.broadcast %cst_126 : f32 to vector<1x128xf32>
    %119 = arith.maximumf %117, %118 : vector<1x128xf32>
    %120 = vector.broadcast %110 : vector<1x128xf32> to vector<128x128xf32>
    %121 = arith.subf %104, %120 : vector<128x128xf32>
    %cst_127 = arith.constant 9.99999974E-6 : f32
    %122 = vector.broadcast %cst_127 : f32 to vector<1x128xf32>
    %123 = arith.addf %119, %122 : vector<1x128xf32>
    %124 = math.rsqrt %123 : vector<1x128xf32>
    %125 = vector.broadcast %124 : vector<1x128xf32> to vector<128x128xf32>
    %126 = arith.mulf %121, %125 : vector<128x128xf32>
    %127 = vector.broadcast %105 : vector<1x128xf32> to vector<128x128xf32>
    %128 = arith.mulf %126, %127 : vector<128x128xf32>
    %129 = vector.broadcast %106 : vector<1x128xf32> to vector<128x128xf32>
    %130 = arith.addf %128, %129 : vector<128x128xf32>
    %c0_128 = arith.constant 0 : index
    %c0_129 = arith.constant 0 : index
    %131 = vector.load %arg2[%c0_128, %c0_129] : memref<128x16xf32, #tpu.memory_space<vmem>>, vector<128x16xf32>
    %132 = arith.truncf %131 : vector<128x16xf32> to vector<128x16xbf16>
    %c0_130 = arith.constant 0 : index
    %c0_131 = arith.constant 0 : index
    %133 = vector.load %arg6[%c0_130, %c0_131] : memref<16x128xbf16, #tpu.memory_space<vmem>>, vector<16x128xbf16>
    %cst_132 = arith.constant dense<0.000000e+00> : vector<128x128xf32>
    %134 = tpu.matmul %132, %133, %cst_132 {dimension_numbers = #tpu.dot_dimension_numbers<[1], [0], [0], [1], [0, 0, 1, 1], [], []>} : vector<128x16xbf16>, vector<16x128xbf16>, vector<128x128xf32> -> vector<128x128xf32>
    %c0_133 = arith.constant 0 : index
    %c0_134 = arith.constant 0 : index
    %135 = vector.load %arg13[%c0_133, %c0_134] : memref<1x128xf32, #tpu.memory_space<vmem>>, vector<1x128xf32>
    %c0_135 = arith.constant 0 : index
    %c0_136 = arith.constant 0 : index
    %136 = vector.load %arg14[%c0_135, %c0_136] : memref<1x128xf32, #tpu.memory_space<vmem>>, vector<1x128xf32>
    %cst_137 = arith.constant dense<0.000000e+00> : vector<128xf32>
    %137 = vector.multi_reduction <add>, %134, %cst_137 [0] : vector<128x128xf32> to vector<128xf32>
    %138 = vector.shape_cast %137 : vector<128xf32> to vector<1x128xf32>
    %cst_138 = arith.constant 7.812500e-03 : f32
    %139 = vector.broadcast %cst_138 : f32 to vector<1x128xf32>
    %140 = arith.mulf %138, %139 : vector<1x128xf32>
    %141 = arith.mulf %134, %134 : vector<128x128xf32>
    %cst_139 = arith.constant dense<0.000000e+00> : vector<128xf32>
    %142 = vector.multi_reduction <add>, %141, %cst_139 [0] : vector<128x128xf32> to vector<128xf32>
    %143 = vector.shape_cast %142 : vector<128xf32> to vector<1x128xf32>
    %cst_140 = arith.constant 7.812500e-03 : f32
    %144 = vector.broadcast %cst_140 : f32 to vector<1x128xf32>
    %145 = arith.mulf %143, %144 : vector<1x128xf32>
    %146 = arith.mulf %140, %140 : vector<1x128xf32>
    %147 = arith.subf %145, %146 : vector<1x128xf32>
    %cst_141 = arith.constant 0.000000e+00 : f32
    %148 = vector.broadcast %cst_141 : f32 to vector<1x128xf32>
    %149 = arith.maximumf %147, %148 : vector<1x128xf32>
    %150 = vector.broadcast %140 : vector<1x128xf32> to vector<128x128xf32>
    %151 = arith.subf %134, %150 : vector<128x128xf32>
    %cst_142 = arith.constant 9.99999974E-6 : f32
    %152 = vector.broadcast %cst_142 : f32 to vector<1x128xf32>
    %153 = arith.addf %149, %152 : vector<1x128xf32>
    %154 = math.rsqrt %153 : vector<1x128xf32>
    %155 = vector.broadcast %154 : vector<1x128xf32> to vector<128x128xf32>
    %156 = arith.mulf %151, %155 : vector<128x128xf32>
    %157 = vector.broadcast %135 : vector<1x128xf32> to vector<128x128xf32>
    %158 = arith.mulf %156, %157 : vector<128x128xf32>
    %159 = vector.broadcast %136 : vector<1x128xf32> to vector<128x128xf32>
    %160 = arith.addf %158, %159 : vector<128x128xf32>
    %161 = arith.addf %130, %160 : vector<128x128xf32>
    %cst_143 = arith.constant 0.000000e+00 : f32
    %162 = vector.broadcast %cst_143 : f32 to vector<128x128xf32>
    %163 = arith.maximumf %161, %162 : vector<128x128xf32>
    %164 = arith.truncf %163 : vector<128x128xf32> to vector<128x128xbf16>
    %c0_144 = arith.constant 0 : index
    %c0_145 = arith.constant 0 : index
    %165 = vector.load %arg15[%c0_144, %c0_145] : memref<128x128xbf16, #tpu.memory_space<vmem>>, vector<128x128xbf16>
    tpu.vector_store %arg15[%c0_144, %c0_145], %164 {strides = array<i32>} : memref<128x128xbf16, #tpu.memory_space<vmem>>, vector<128x128xbf16>,
    return
  }
  func.func @transform_0(%arg0: i32) -> (i32, i32) {
    %c0_i32 = arith.constant 0 : i32
    %c0_i32_0 = arith.constant 0 : i32
    %c0_i32_1 = arith.constant 0 : i32
    return %c0_i32, %c0_i32_0 : i32, i32
  }
  func.func @transform_1(%arg0: i32) -> (i32, i32) {
    %c0_i32 = arith.constant 0 : i32
    %c0_i32_0 = arith.constant 0 : i32
    %c0_i32_1 = arith.constant 0 : i32
    return %c0_i32, %c0_i32_0 : i32, i32
  }
  func.func @transform_2(%arg0: i32) -> (i32, i32) {
    %c0_i32 = arith.constant 0 : i32
    %c0_i32_0 = arith.constant 0 : i32
    %c0_i32_1 = arith.constant 0 : i32
    return %c0_i32, %c0_i32_0 : i32, i32
  }
  func.func @transform_3(%arg0: i32) -> (i32, i32) {
    %c0_i32 = arith.constant 0 : i32
    %c0_i32_0 = arith.constant 0 : i32
    %c0_i32_1 = arith.constant 0 : i32
    return %c0_i32, %c0_i32_0 : i32, i32
  }
  func.func @transform_4(%arg0: i32) -> (i32, i32) {
    %c0_i32 = arith.constant 0 : i32
    %c0_i32_0 = arith.constant 0 : i32
    %c0_i32_1 = arith.constant 0 : i32
    return %c0_i32, %c0_i32_0 : i32, i32
  }
  func.func @transform_5(%arg0: i32) -> (i32, i32) {
    %c0_i32 = arith.constant 0 : i32
    %c0_i32_0 = arith.constant 0 : i32
    %c0_i32_1 = arith.constant 0 : i32
    return %c0_i32, %c0_i32_0 : i32, i32
  }
  func.func @transform_6(%arg0: i32) -> (i32, i32) {
    %c0_i32 = arith.constant 0 : i32
    %c0_i32_0 = arith.constant 0 : i32
    %c0_i32_1 = arith.constant 0 : i32
    return %c0_i32, %c0_i32_0 : i32, i32
  }
  func.func @transform_7(%arg0: i32) -> (i32, i32) {
    %c0_i32 = arith.constant 0 : i32
    %c0_i32_0 = arith.constant 0 : i32
    %c0_i32_1 = arith.constant 0 : i32
    return %c0_i32, %c0_i32_0 : i32, i32
  }
  func.func @transform_8(%arg0: i32) -> (i32, i32) {
    %c0_i32 = arith.constant 0 : i32
    %c0_i32_0 = arith.constant 0 : i32
    %c0_i32_1 = arith.constant 0 : i32
    return %c0_i32, %c0_i32_0 : i32, i32
  }
  func.func @transform_9(%arg0: i32) -> (i32, i32) {
    %c0_i32 = arith.constant 0 : i32
    %c0_i32_0 = arith.constant 0 : i32
    %c0_i32_1 = arith.constant 0 : i32
    return %c0_i32, %c0_i32_0 : i32, i32
  }
  func.func @transform_10(%arg0: i32) -> (i32, i32) {
    %c0_i32 = arith.constant 0 : i32
    %c0_i32_0 = arith.constant 0 : i32
    %c0_i32_1 = arith.constant 0 : i32
    return %c0_i32, %c0_i32_0 : i32, i32
  }
  func.func @transform_11(%arg0: i32) -> (i32, i32) {
    %c0_i32 = arith.constant 0 : i32
    %c0_i32_0 = arith.constant 0 : i32
    %c0_i32_1 = arith.constant 0 : i32
    return %c0_i32, %c0_i32_0 : i32, i32
  }
  func.func @transform_12(%arg0: i32) -> (i32, i32) {
    %c0_i32 = arith.constant 0 : i32
    %c0_i32_0 = arith.constant 0 : i32
    %c0_i32_1 = arith.constant 0 : i32
    return %c0_i32, %c0_i32_0 : i32, i32
  }
  func.func @transform_13(%arg0: i32) -> (i32, i32) {
    %c0_i32 = arith.constant 0 : i32
    %c0_i32_0 = arith.constant 0 : i32
    %c0_i32_1 = arith.constant 0 : i32
    return %c0_i32, %c0_i32_0 : i32, i32
  }
  func.func @transform_14(%arg0: i32) -> (i32, i32) {
    %c0_i32 = arith.constant 0 : i32
    %c0_i32_0 = arith.constant 0 : i32
    %c0_i32_1 = arith.constant 0 : i32
    return %c0_i32, %c0_i32_0 : i32, i32
  }
}

</mosaic_0001>

<llo_original>
// kernel: tpu_custom_call.1
$region0: #{tpu_custom_call.1}
  #allocation0 [shape = 'u32[]', space=smem, size = 0x4, offset = 0x4, fixed_abs, tag = 'smem constant byte address 0x4 - core index']
  #allocation1 [shape = 'u32[144,128]{1,0:T(1,128)}', space=vmem, size = 0x12000, scoped, tag = 'internal scratch']
  #allocation2 [shape = 'f32[8,9,9,128]{3,2,1,0:T(8,128)}', space=vmem, size = 0x90000, scoped, tag = 'scratch operand']
  %s0 = inlined_call_operand.vmem [shape: f32[512,16], index: 0, kind: input, shape index: {}]
  %s1 = inlined_call_operand.vmem [shape: f32[128,16], index: 1, kind: input, shape index: {}]
  %s2 = inlined_call_operand.vmem [shape: bf16[16,128], index: 2, kind: input, shape index: {}]
  %s3 = inlined_call_operand.vmem [shape: bf16[1152,128], index: 3, kind: input, shape index: {}]
  %s4 = inlined_call_operand.vmem [shape: bf16[128,128], index: 4, kind: input, shape index: {}]
  %s5 = inlined_call_operand.vmem [shape: bf16[16,128], index: 5, kind: input, shape index: {}]
  %s6 = inlined_call_operand.vmem [shape: f32[1,128], index: 6, kind: input, shape index: {}]
  %s7 = inlined_call_operand.vmem [shape: f32[1,128], index: 7, kind: input, shape index: {}]
  %s8 = inlined_call_operand.vmem [shape: f32[1,128], index: 8, kind: input, shape index: {}]
  %s9 = inlined_call_operand.vmem [shape: f32[1,128], index: 9, kind: input, shape index: {}]
  %s10 = inlined_call_operand.vmem [shape: f32[1,128], index: 10, kind: input, shape index: {}]
  %s11 = inlined_call_operand.vmem [shape: f32[1,128], index: 11, kind: input, shape index: {}]
  %s12 = inlined_call_operand.vmem [shape: f32[1,128], index: 12, kind: input, shape index: {}]
  %s13 = inlined_call_operand.vmem [shape: f32[1,128], index: 13, kind: input, shape index: {}]
  %s14 = inlined_call_operand.hbm [shape: bf16[128,128], index: 14, kind: output, shape index: {}]
  %s15 = sld [smem:[#allocation0]]
  $region66: #{tpu_custom_call.1} parent=0
    _
  %s17 = ssub.s32 1, %s15
  %s18 = scalar_select 0, %s17, %s15
  $region1: #{tpu_custom_call.1} parent=0
    #allocation3 [shape = 'u8[32768]{0}', space=vmem, size = 0x8000, scoped, tag = 'output window, operand 0, single buffered']
    #allocation4 [shape = 's32[1]{0}', space=sflag, size = 0x4, scoped, tag = 'scoped memory for tpu_custom_call.1']
    %19 = vsyncpa [#allocation4], 0
    // Predicated region
    $region2: #{tpu_custom_call.1} parent=1 // pred_check
      _
    $region3: #{tpu_custom_call.1} parent=1 // pred_check_branch
      %21 = sbr.rel (0) target = $region5
    $region4: #{tpu_custom_call.1} parent=1 // pred_region
      _
    $region5: #{tpu_custom_call.1} parent=1 // pred_fallthru
      _
    // Predicated region
    $region6: #{tpu_custom_call.1} parent=1 // pred_check
      _
    $region7: #{tpu_custom_call.1} parent=1 // pred_check_branch
      %23 = sbr.rel (0) target = $region9
    $region8: #{tpu_custom_call.1} parent=1 // pred_region
      _
    $region9: #{tpu_custom_call.1} parent=1 // pred_fallthru
      _
    // Predicated region
    $region10: #{tpu_custom_call.1} parent=1 // pred_check
      _
    $region11: #{tpu_custom_call.1} parent=1 // pred_check_branch
      %25 = sbr.rel (0) target = $region13
    $region12: #{tpu_custom_call.1} parent=1 // pred_region
      _
    $region13: #{tpu_custom_call.1} parent=1 // pred_fallthru
      _
    // Predicated region
    $region14: #{tpu_custom_call.1} parent=1 // pred_check
      _
    $region15: #{tpu_custom_call.1} parent=1 // pred_check_branch
      %27 = sbr.rel (0) target = $region17
    $region16: #{tpu_custom_call.1} parent=1 // pred_region
      _
    $region17: #{tpu_custom_call.1} parent=1 // pred_fallthru
      _
    // Predicated region
    $region18: #{tpu_custom_call.1} parent=1 // pred_check
      _
    $region19: #{tpu_custom_call.1} parent=1 // pred_check_branch
      %29 = sbr.rel (0) target = $region21
    $region20: #{tpu_custom_call.1} parent=1 // pred_region
      _
    $region21: #{tpu_custom_call.1} parent=1 // pred_fallthru
      _
    // Predicated region
    $region22: #{tpu_custom_call.1} parent=1 // pred_check
      _
    $region23: #{tpu_custom_call.1} parent=1 // pred_check_branch
      %31 = sbr.rel (0) target = $region25
    $region24: #{tpu_custom_call.1} parent=1 // pred_region
      _
    $region25: #{tpu_custom_call.1} parent=1 // pred_fallthru
      _
    // Predicated region
    $region26: #{tpu_custom_call.1} parent=1 // pred_check
      _
    $region27: #{tpu_custom_call.1} parent=1 // pred_check_branch
      %33 = sbr.rel (0) target = $region29
    $region28: #{tpu_custom_call.1} parent=1 // pred_region
      _
    $region29: #{tpu_custom_call.1} parent=1 // pred_fallthru
      _
    // Predicated region
    $region30: #{tpu_custom_call.1} parent=1 // pred_check
      _
    $region31: #{tpu_custom_call.1} parent=1 // pred_check_branch
      %35 = sbr.rel (0) target = $region33
    $region32: #{tpu_custom_call.1} parent=1 // pred_region
      _
    $region33: #{tpu_custom_call.1} parent=1 // pred_fallthru
      _
    // Predicated region
    $region34: #{tpu_custom_call.1} parent=1 // pred_check
      _
    $region35: #{tpu_custom_call.1} parent=1 // pred_check_branch
      %37 = sbr.rel (0) target = $region37
    $region36: #{tpu_custom_call.1} parent=1 // pred_region
      _
    $region37: #{tpu_custom_call.1} parent=1 // pred_fallthru
      _
    // Predicated region
    $region38: #{tpu_custom_call.1} parent=1 // pred_check
      _
    $region39: #{tpu_custom_call.1} parent=1 // pred_check_branch
      %39 = sbr.rel (0) target = $region41
    $region40: #{tpu_custom_call.1} parent=1 // pred_region
      _
    $region41: #{tpu_custom_call.1} parent=1 // pred_fallthru
      _
    // Predicated region
    $region42: #{tpu_custom_call.1} parent=1 // pred_check
      _
    $region43: #{tpu_custom_call.1} parent=1 // pred_check_branch
      %41 = sbr.rel (0) target = $region45
    $region44: #{tpu_custom_call.1} parent=1 // pred_region
      _
    $region45: #{tpu_custom_call.1} parent=1 // pred_fallthru
      _
    // Predicated region
    $region46: #{tpu_custom_call.1} parent=1 // pred_check
      _
    $region47: #{tpu_custom_call.1} parent=1 // pred_check_branch
      %43 = sbr.rel (0) target = $region49
    $region48: #{tpu_custom_call.1} parent=1 // pred_region
      _
    $region49: #{tpu_custom_call.1} parent=1 // pred_fallthru
      _
    // Predicated region
    $region50: #{tpu_custom_call.1} parent=1 // pred_check
      _
    $region51: #{tpu_custom_call.1} parent=1 // pred_check_branch
      %45 = sbr.rel (0) target = $region53
    $region52: #{tpu_custom_call.1} parent=1 // pred_region
      _
    $region53: #{tpu_custom_call.1} parent=1 // pred_fallthru
      _
    // Predicated region
    $region54: #{tpu_custom_call.1} parent=1 // pred_check
      _
    $region55: #{tpu_custom_call.1} parent=1 // pred_check_branch
      %47 = sbr.rel (0) target = $region57
    $region56: #{tpu_custom_call.1} parent=1 // pred_region
      _
    $region57: #{tpu_custom_call.1} parent=1 // pred_fallthru
      _
    %v49 = vld [vmem:[%s0] sm:$0xff]
    %v50 = vld [vmem:[%s0 + $0x8] sm:$0xff]
    %v51 = vld [vmem:[%s0 + $0x10] sm:$0xff]
    %v52 = vld [vmem:[%s0 + $0x18] sm:$0xff]
    %v53 = vld [vmem:[%s0 + $0x20] sm:$0xff]
    %v54 = vld [vmem:[%s0 + $0x28] sm:$0xff]
    %v55 = vld [vmem:[%s0 + $0x30] sm:$0xff]
    %v56 = vld [vmem:[%s0 + $0x38] sm:$0xff]
    %v57 = vld [vmem:[%s0 + $0x40] sm:$0xff]
    %v58 = vld [vmem:[%s0 + $0x48] sm:$0xff]
    %v59 = vld [vmem:[%s0 + $0x50] sm:$0xff]
    %v60 = vld [vmem:[%s0 + $0x58] sm:$0xff]
    %v61 = vld [vmem:[%s0 + $0x60] sm:$0xff]
    %v62 = vld [vmem:[%s0 + $0x68] sm:$0xff]
    %v63 = vld [vmem:[%s0 + $0x70] sm:$0xff]
    %v64 = vld [vmem:[%s0 + $0x78] sm:$0xff]
    %v65 = vld [vmem:[%s0 + $0x80] sm:$0xff]
    %v66 = vld [vmem:[%s0 + $0x88] sm:$0xff]
    %v67 = vld [vmem:[%s0 + $0x90] sm:$0xff]
    %v68 = vld [vmem:[%s0 + $0x98] sm:$0xff]
    %v69 = vld [vmem:[%s0 + $0xa0] sm:$0xff]
    %v70 = vld [vmem:[%s0 + $0xa8] sm:$0xff]
    %v71 = vld [vmem:[%s0 + $0xb0] sm:$0xff]
    %v72 = vld [vmem:[%s0 + $0xb8] sm:$0xff]
    %v73 = vld [vmem:[%s0 + $0xc0] sm:$0xff]
    %v74 = vld [vmem:[%s0 + $0xc8] sm:$0xff]
    %v75 = vld [vmem:[%s0 + $0xd0] sm:$0xff]
    %v76 = vld [vmem:[%s0 + $0xd8] sm:$0xff]
    %v77 = vld [vmem:[%s0 + $0xe0] sm:$0xff]
    %v78 = vld [vmem:[%s0 + $0xe8] sm:$0xff]
    %v79 = vld [vmem:[%s0 + $0xf0] sm:$0xff]
    %v80 = vld [vmem:[%s0 + $0xf8] sm:$0xff]
    %v81 = vld [vmem:[%s0 + $0x100] sm:$0xff]
    %v82 = vld [vmem:[%s0 + $0x108] sm:$0xff]
    %v83 = vld [vmem:[%s0 + $0x110] sm:$0xff]
    %v84 = vld [vmem:[%s0 + $0x118] sm:$0xff]
    %v85 = vld [vmem:[%s0 + $0x120] sm:$0xff]
    %v86 = vld [vmem:[%s0 + $0x128] sm:$0xff]
    %v87 = vld [vmem:[%s0 + $0x130] sm:$0xff]
    %v88 = vld [vmem:[%s0 + $0x138] sm:$0xff]
    %v89 = vld [vmem:[%s0 + $0x140] sm:$0xff]
    %v90 = vld [vmem:[%s0 + $0x148] sm:$0xff]
    %v91 = vld [vmem:[%s0 + $0x150] sm:$0xff]
    %v92 = vld [vmem:[%s0 + $0x158] sm:$0xff]
    %v93 = vld [vmem:[%s0 + $0x160] sm:$0xff]
    %v94 = vld [vmem:[%s0 + $0x168] sm:$0xff]
    %v95 = vld [vmem:[%s0 + $0x170] sm:$0xff]
    %v96 = vld [vmem:[%s0 + $0x178] sm:$0xff]
    %v97 = vld [vmem:[%s0 + $0x180] sm:$0xff]
    %v98 = vld [vmem:[%s0 + $0x188] sm:$0xff]
    %v99 = vld [vmem:[%s0 + $0x190] sm:$0xff]
    %v100 = vld [vmem:[%s0 + $0x198] sm:$0xff]
    %v101 = vld [vmem:[%s0 + $0x1a0] sm:$0xff]
    %v102 = vld [vmem:[%s0 + $0x1a8] sm:$0xff]
    %v103 = vld [vmem:[%s0 + $0x1b0] sm:$0xff]
    %v104 = vld [vmem:[%s0 + $0x1b8] sm:$0xff]
    %v105 = vld [vmem:[%s0 + $0x1c0] sm:$0xff]
    %v106 = vld [vmem:[%s0 + $0x1c8] sm:$0xff]
    %v107 = vld [vmem:[%s0 + $0x1d0] sm:$0xff]
    %v108 = vld [vmem:[%s0 + $0x1d8] sm:$0xff]
    %v109 = vld [vmem:[%s0 + $0x1e0] sm:$0xff]
    %v110 = vld [vmem:[%s0 + $0x1e8] sm:$0xff]
    %v111 = vld [vmem:[%s0 + $0x1f0] sm:$0xff]
    %v112 = vld [vmem:[%s0 + $0x1f8] sm:$0xff]
    %v113 = vpack.c.bf16 %v50, %v49
    %v114 = vpack.c.bf16 %v52, %v51
    %v115 = vpack.c.bf16 %v54, %v53
    %v116 = vpack.c.bf16 %v56, %v55
    %v117 = vpack.c.bf16 %v58, %v57
    %v118 = vpack.c.bf16 %v60, %v59
    %v119 = vpack.c.bf16 %v62, %v61
    %v120 = vpack.c.bf16 %v64, %v63
    %v121 = vpack.c.bf16 %v66, %v65
    %v122 = vpack.c.bf16 %v68, %v67
    %v123 = vpack.c.bf16 %v70, %v69
    %v124 = vpack.c.bf16 %v72, %v71
    %v125 = vpack.c.bf16 %v74, %v73
    %v126 = vpack.c.bf16 %v76, %v75
    %v127 = vpack.c.bf16 %v78, %v77
    %v128 = vpack.c.bf16 %v80, %v79
    %v129 = vpack.c.bf16 %v82, %v81
    %v130 = vpack.c.bf16 %v84, %v83
    %v131 = vpack.c.bf16 %v86, %v85
    %v132 = vpack.c.bf16 %v88, %v87
    %v133 = vpack.c.bf16 %v90, %v89
    %v134 = vpack.c.bf16 %v92, %v91
    %v135 = vpack.c.bf16 %v94, %v93
    %v136 = vpack.c.bf16 %v96, %v95
    %v137 = vpack.c.bf16 %v98, %v97
    %v138 = vpack.c.bf16 %v100, %v99
    %v139 = vpack.c.bf16 %v102, %v101
    %v140 = vpack.c.bf16 %v104, %v103
    %v141 = vpack.c.bf16 %v106, %v105
    %v142 = vpack.c.bf16 %v108, %v107
    %v143 = vpack.c.bf16 %v110, %v109
    %v144 = vpack.c.bf16 %v112, %v111
    %v145 = vld [vmem:[%s2] sm:$0xf]
    %v146 = vld [vmem:[%s2 + $0x4] sm:$0xf]
    %v149 = vunpack.c.l.b16 %v145
    %v150 = vunpack.c.l.b16 %v146
    %v151 = vpack.c.b16 %v150, %v149
    %vm153 = vcmask 130048
    %v155 = vsel %vm153, %v113, 0
    %v158 = vsel %vm153, %v114, 0
    %v161 = vsel %vm153, %v115, 0
    %v164 = vsel %vm153, %v116, 0
    %v167 = vsel %vm153, %v117, 0
    %v170 = vsel %vm153, %v118, 0
    %v173 = vsel %vm153, %v119, 0
    %v176 = vsel %vm153, %v120, 0
    %v179 = vsel %vm153, %v121, 0
    %v182 = vsel %vm153, %v122, 0
    %v185 = vsel %vm153, %v123, 0
    %v188 = vsel %vm153, %v124, 0
    %v191 = vsel %vm153, %v125, 0
    %v194 = vsel %vm153, %v126, 0
    %v197 = vsel %vm153, %v127, 0
    %v200 = vsel %vm153, %v128, 0
    %v203 = vsel %vm153, %v129, 0
    %v206 = vsel %vm153, %v130, 0
    %v209 = vsel %vm153, %v131, 0
    %v212 = vsel %vm153, %v132, 0
    %v215 = vsel %vm153, %v133, 0
    %v218 = vsel %vm153, %v134, 0
    %v221 = vsel %vm153, %v135, 0
    %v224 = vsel %vm153, %v136, 0
    %v227 = vsel %vm153, %v137, 0
    %v230 = vsel %vm153, %v138, 0
    %v233 = vsel %vm153, %v139, 0
    %v236 = vsel %vm153, %v140, 0
    %v239 = vsel %vm153, %v141, 0
    %v242 = vsel %vm153, %v142, 0
    %v245 = vsel %vm153, %v143, 0
    %v248 = vsel %vm153, %v144, 0
    %250 = vmatprep.subr.bf16.mxu0 0
    %251 = vmatpush1.bf16.msra.mxu0 0
    %252 = vmatprep.subr.bf16.mxu0 0
    %253 = vmatpush1.bf16.msra.mxu0 0
    %254 = vmatprep.subr.bf16.mxu0 0
    %255 = vmatpush1.bf16.msra.mxu0 0
    %256 = vmatprep.subr.bf16.mxu0 0
    %257 = vmatpush1.bf16.msra.mxu0 0
    %258 = vmatprep.subr.bf16.mxu0 0
    %259 = vmatpush1.bf16.msra.mxu0 0
    %260 = vmatprep.subr.bf16.mxu0 0
    %261 = vmatpush1.bf16.msra.mxu0 0
    %262 = vmatprep.subr.bf16.mxu0 0
    %263 = vmatpush1.bf16.msra.mxu0 0
    %264 = vmatprep.subr.bf16.mxu0 0
    %265 = vmatpush1.bf16.msra.mxu0 %v151
    %266 = vmatprep.subr.bf16.mxu0 0
    %267 = vmatpush2.bf16.msra.mxu0 0
    %268 = vmatprep.subr.bf16.mxu0 0
    %269 = vmatpush2.bf16.msra.mxu0 0
    %270 = vmatprep.subr.bf16.mxu0 0
    %271 = vmatpush2.bf16.msra.mxu0 0
    %272 = vmatprep.subr.bf16.mxu0 0
    %273 = vmatpush2.bf16.msra.mxu0 0
    %274 = vmatprep.subr.bf16.mxu0 0
    %275 = vmatpush2.bf16.msra.mxu0 0
    %276 = vmatprep.subr.bf16.mxu0 0
    %277 = vmatpush2.bf16.msra.mxu0 0
    %278 = vmatprep.subr.bf16.mxu0 0
    %279 = vmatpush2.bf16.msra.mxu0 0
    %280 = vmatprep.subr.bf16.mxu0 0
    %281 = vmatpush2.bf16.msra.mxu0 0
    %282 = vmatprep.mubr.bf16.mxu0 0
    %283 = vmatmul.mubr.bf16.gmra.mxu0 %v155
    %v284 = vpop.f32.mrf.mxu0
    %v285 = vadd.f32 0.0, %v284
    %v286 = vpop.f32.mrf.mxu0
    %v287 = vpop.f32.mrf.mxu0
    %v288 = vadd.f32 0.0, %v287
    %v289 = vpop.f32.mrf.mxu0
    %290 = vmatprep.mubr.bf16.mxu0 0
    %291 = vmatmul.mubr.bf16.gmra.mxu0 %v158
    %v292 = vpop.f32.mrf.mxu0
    %v293 = vadd.f32 0.0, %v292
    %v294 = vpop.f32.mrf.mxu0
    %v295 = vpop.f32.mrf.mxu0
    %v296 = vadd.f32 0.0, %v295
    %v297 = vpop.f32.mrf.mxu0
    %298 = vmatprep.mubr.bf16.mxu0 0
    %299 = vmatmul.mubr.bf16.gmra.mxu0 %v161
    %v300 = vpop.f32.mrf.mxu0
    %v301 = vadd.f32 0.0, %v300
    %v302 = vpop.f32.mrf.mxu0
    %v303 = vpop.f32.mrf.mxu0
    %v304 = vadd.f32 0.0, %v303
    %v305 = vpop.f32.mrf.mxu0
    %306 = vmatprep.mubr.bf16.mxu0 0
    %307 = vmatmul.mubr.bf16.gmra.mxu0 %v164
    %v308 = vpop.f32.mrf.mxu0
    %v309 = vadd.f32 0.0, %v308
    %v310 = vpop.f32.mrf.mxu0
    %v311 = vpop.f32.mrf.mxu0
    %v312 = vadd.f32 0.0, %v311
    %v313 = vpop.f32.mrf.mxu0
    %314 = vmatprep.mubr.bf16.mxu0 0
    %315 = vmatmul.mubr.bf16.gmra.mxu0 %v167
    %v316 = vpop.f32.mrf.mxu0
    %v317 = vadd.f32 0.0, %v316
    %v318 = vpop.f32.mrf.mxu0
    %v319 = vpop.f32.mrf.mxu0
    %v320 = vadd.f32 0.0, %v319
    %v321 = vpop.f32.mrf.mxu0
    %322 = vmatprep.mubr.bf16.mxu0 0
    %323 = vmatmul.mubr.bf16.gmra.mxu0 %v170
    %v324 = vpop.f32.mrf.mxu0
    %v325 = vadd.f32 0.0, %v324
    %v326 = vpop.f32.mrf.mxu0
    %v327 = vpop.f32.mrf.mxu0
    %v328 = vadd.f32 0.0, %v327
    %v329 = vpop.f32.mrf.mxu0
    %330 = vmatprep.mubr.bf16.mxu0 0
    %331 = vmatmul.mubr.bf16.gmra.mxu0 %v173
    %v332 = vpop.f32.mrf.mxu0
    %v333 = vadd.f32 0.0, %v332
    %v334 = vpop.f32.mrf.mxu0
    %v335 = vpop.f32.mrf.mxu0
    %v336 = vadd.f32 0.0, %v335
    %v337 = vpop.f32.mrf.mxu0
    %338 = vmatprep.mubr.bf16.mxu0 0
    %339 = vmatmul.mubr.bf16.gmra.mxu0 %v176
    %v340 = vpop.f32.mrf.mxu0
    %v341 = vadd.f32 0.0, %v340
    %v342 = vpop.f32.mrf.mxu0
    %v343 = vpop.f32.mrf.mxu0
    %v344 = vadd.f32 0.0, %v343
    %v345 = vpop.f32.mrf.mxu0
    %346 = vmatprep.mubr.bf16.mxu0 0
    %347 = vmatmul.mubr.bf16.gmra.mxu0 %v179
    %v348 = vpop.f32.mrf.mxu0
    %v349 = vadd.f32 0.0, %v348
    %v350 = vpop.f32.mrf.mxu0
    %v351 = vpop.f32.mrf.mxu0
    %v352 = vadd.f32 0.0, %v351
    %v353 = vpop.f32.mrf.mxu0
    %354 = vmatprep.mubr.bf16.mxu0 0
    %355 = vmatmul.mubr.bf16.gmra.mxu0 %v182
    %v356 = vpop.f32.mrf.mxu0
    %v357 = vadd.f32 0.0, %v356
    %v358 = vpop.f32.mrf.mxu0
    %v359 = vpop.f32.mrf.mxu0
    %v360 = vadd.f32 0.0, %v359
    %v361 = vpop.f32.mrf.mxu0
    %362 = vmatprep.mubr.bf16.mxu0 0
    %363 = vmatmul.mubr.bf16.gmra.mxu0 %v185
    %v364 = vpop.f32.mrf.mxu0
    %v365 = vadd.f32 0.0, %v364
    %v366 = vpop.f32.mrf.mxu0
    %v367 = vpop.f32.mrf.mxu0
    %v368 = vadd.f32 0.0, %v367
    %v369 = vpop.f32.mrf.mxu0
    %370 = vmatprep.mubr.bf16.mxu0 0
    %371 = vmatmul.mubr.bf16.gmra.mxu0 %v188
    %v372 = vpop.f32.mrf.mxu0
    %v373 = vadd.f32 0.0, %v372
    %v374 = vpop.f32.mrf.mxu0
    %v375 = vpop.f32.mrf.mxu0
    %v376 = vadd.f32 0.0, %v375
    %v377 = vpop.f32.mrf.mxu0
    %378 = vmatprep.mubr.bf16.mxu0 0
    %379 = vmatmul.mubr.bf16.gmra.mxu0 %v191
    %v380 = vpop.f32.mrf.mxu0
    %v381 = vadd.f32 0.0, %v380
    %v382 = vpop.f32.mrf.mxu0
    %v383 = vpop.f32.mrf.mxu0
    %v384 = vadd.f32 0.0, %v383
    %v385 = vpop.f32.mrf.mxu0
    %386 = vmatprep.mubr.bf16.mxu0 0
    %387 = vmatmul.mubr.bf16.gmra.mxu0 %v194
    %v388 = vpop.f32.mrf.mxu0
    %v389 = vadd.f32 0.0, %v388
    %v390 = vpop.f32.mrf.mxu0
    %v391 = vpop.f32.mrf.mxu0
    %v392 = vadd.f32 0.0, %v391
    %v393 = vpop.f32.mrf.mxu0
    %394 = vmatprep.mubr.bf16.mxu0 0
    %395 = vmatmul.mubr.bf16.gmra.mxu0 %v197
    %v396 = vpop.f32.mrf.mxu0
    %v397 = vadd.f32 0.0, %v396
    %v398 = vpop.f32.mrf.mxu0
    %v399 = vpop.f32.mrf.mxu0
    %v400 = vadd.f32 0.0, %v399
    %v401 = vpop.f32.mrf.mxu0
    %402 = vmatprep.mubr.bf16.mxu0 0
    %403 = vmatmul.mubr.bf16.gmra.mxu0 %v200
    %v404 = vpop.f32.mrf.mxu0
    %v405 = vadd.f32 0.0, %v404
    %v406 = vpop.f32.mrf.mxu0
    %v407 = vpop.f32.mrf.mxu0
    %v408 = vadd.f32 0.0, %v407
    %v409 = vpop.f32.mrf.mxu0
    %410 = vmatprep.mubr.bf16.mxu0 0
    %411 = vmatmul.mubr.bf16.gmra.mxu0 %v203
    %v412 = vpop.f32.mrf.mxu0
    %v413 = vadd.f32 0.0, %v412
    %v414 = vpop.f32.mrf.mxu0
    %v415 = vpop.f32.mrf.mxu0
    %v416 = vadd.f32 0.0, %v415
    %v417 = vpop.f32.mrf.mxu0
    %418 = vmatprep.mubr.bf16.mxu0 0
    %419 = vmatmul.mubr.bf16.gmra.mxu0 %v206
    %v420 = vpop.f32.mrf.mxu0
    %v421 = vadd.f32 0.0, %v420
    %v422 = vpop.f32.mrf.mxu0
    %v423 = vpop.f32.mrf.mxu0
    %v424 = vadd.f32 0.0, %v423
    %v425 = vpop.f32.mrf.mxu0
    %426 = vmatprep.mubr.bf16.mxu0 0
    %427 = vmatmul.mubr.bf16.gmra.mxu0 %v209
    %v428 = vpop.f32.mrf.mxu0
    %v429 = vadd.f32 0.0, %v428
    %v430 = vpop.f32.mrf.mxu0
    %v431 = vpop.f32.mrf.mxu0
    %v432 = vadd.f32 0.0, %v431
    %v433 = vpop.f32.mrf.mxu0
    %434 = vmatprep.mubr.bf16.mxu0 0
    %435 = vmatmul.mubr.bf16.gmra.mxu0 %v212
    %v436 = vpop.f32.mrf.mxu0
    %v437 = vadd.f32 0.0, %v436
    %v438 = vpop.f32.mrf.mxu0
    %v439 = vpop.f32.mrf.mxu0
    %v440 = vadd.f32 0.0, %v439
    %v441 = vpop.f32.mrf.mxu0
    %442 = vmatprep.mubr.bf16.mxu0 0
    %443 = vmatmul.mubr.bf16.gmra.mxu0 %v215
    %v444 = vpop.f32.mrf.mxu0
    %v445 = vadd.f32 0.0, %v444
    %v446 = vpop.f32.mrf.mxu0
    %v447 = vpop.f32.mrf.mxu0
    %v448 = vadd.f32 0.0, %v447
    %v449 = vpop.f32.mrf.mxu0
    %450 = vmatprep.mubr.bf16.mxu0 0
    %451 = vmatmul.mubr.bf16.gmra.mxu0 %v218
    %v452 = vpop.f32.mrf.mxu0
    %v453 = vadd.f32 0.0, %v452
    %v454 = vpop.f32.mrf.mxu0
    %v455 = vpop.f32.mrf.mxu0
    %v456 = vadd.f32 0.0, %v455
    %v457 = vpop.f32.mrf.mxu0
    %458 = vmatprep.mubr.bf16.mxu0 0
    %459 = vmatmul.mubr.bf16.gmra.mxu0 %v221
    %v460 = vpop.f32.mrf.mxu0
    %v461 = vadd.f32 0.0, %v460
    %v462 = vpop.f32.mrf.mxu0
    %v463 = vpop.f32.mrf.mxu0
    %v464 = vadd.f32 0.0, %v463
    %v465 = vpop.f32.mrf.mxu0
    %466 = vmatprep.mubr.bf16.mxu0 0
    %467 = vmatmul.mubr.bf16.gmra.mxu0 %v224
    %v468 = vpop.f32.mrf.mxu0
    %v469 = vadd.f32 0.0, %v468
    %v470 = vpop.f32.mrf.mxu0
    %v471 = vpop.f32.mrf.mxu0
    %v472 = vadd.f32 0.0, %v471
    %v473 = vpop.f32.mrf.mxu0
    %474 = vmatprep.mubr.bf16.mxu0 0
    %475 = vmatmul.mubr.bf16.gmra.mxu0 %v227
    %v476 = vpop.f32.mrf.mxu0
    %v477 = vadd.f32 0.0, %v476
    %v478 = vpop.f32.mrf.mxu0
    %v479 = vpop.f32.mrf.mxu0
    %v480 = vadd.f32 0.0, %v479
    %v481 = vpop.f32.mrf.mxu0
    %482 = vmatprep.mubr.bf16.mxu0 0
    %483 = vmatmul.mubr.bf16.gmra.mxu0 %v230
    %v484 = vpop.f32.mrf.mxu0
    %v485 = vadd.f32 0.0, %v484
    %v486 = vpop.f32.mrf.mxu0
    %v487 = vpop.f32.mrf.mxu0
    %v488 = vadd.f32 0.0, %v487
    %v489 = vpop.f32.mrf.mxu0
    %490 = vmatprep.mubr.bf16.mxu0 0
    %491 = vmatmul.mubr.bf16.gmra.mxu0 %v233
    %v492 = vpop.f32.mrf.mxu0
    %v493 = vadd.f32 0.0, %v492
    %v494 = vpop.f32.mrf.mxu0
    %v495 = vpop.f32.mrf.mxu0
    %v496 = vadd.f32 0.0, %v495
    %v497 = vpop.f32.mrf.mxu0
    %498 = vmatprep.mubr.bf16.mxu0 0
    %499 = vmatmul.mubr.bf16.gmra.mxu0 %v236
    %v500 = vpop.f32.mrf.mxu0
    %v501 = vadd.f32 0.0, %v500
    %v502 = vpop.f32.mrf.mxu0
    %v503 = vpop.f32.mrf.mxu0
    %v504 = vadd.f32 0.0, %v503
    %v505 = vpop.f32.mrf.mxu0
    %506 = vmatprep.mubr.bf16.mxu0 0
    %507 = vmatmul.mubr.bf16.gmra.mxu0 %v239
    %v508 = vpop.f32.mrf.mxu0
    %v509 = vadd.f32 0.0, %v508
    %v510 = vpop.f32.mrf.mxu0
    %v511 = vpop.f32.mrf.mxu0
    %v512 = vadd.f32 0.0, %v511
    %v513 = vpop.f32.mrf.mxu0
    %514 = vmatprep.mubr.bf16.mxu0 0
    %515 = vmatmul.mubr.bf16.gmra.mxu0 %v242
    %v516 = vpop.f32.mrf.mxu0
    %v517 = vadd.f32 0.0, %v516
    %v518 = vpop.f32.mrf.mxu0
    %v519 = vpop.f32.mrf.mxu0
    %v520 = vadd.f32 0.0, %v519
    %v521 = vpop.f32.mrf.mxu0
    %522 = vmatprep.mubr.bf16.mxu0 0
    %523 = vmatmul.mubr.bf16.gmra.mxu0 %v245
    %v524 = vpop.f32.mrf.mxu0
    %v525 = vadd.f32 0.0, %v524
    %v526 = vpop.f32.mrf.mxu0
    %v527 = vpop.f32.mrf.mxu0
    %v528 = vadd.f32 0.0, %v527
    %v529 = vpop.f32.mrf.mxu0
    %530 = vmatprep.mubr.bf16.mxu0 0
    %531 = vmatmul.mubr.bf16.gmra.mxu0 %v248
    %v532 = vpop.f32.mrf.mxu0
    %v533 = vadd.f32 0.0, %v532
    %v534 = vpop.f32.mrf.mxu0
    %v535 = vpop.f32.mrf.mxu0
    %v536 = vadd.f32 0.0, %v535
    %v537 = vpop.f32.mrf.mxu0
    %538 = vdwg.mxu0
    %v539 = vld [vmem:[%s6] sm:$0x1]
    %v540 = vld [vmem:[%s7] sm:$0x1]
    %v541 = vadd.f32 %v285, %v288
    %v542 = vadd.f32 %v541, %v293
    %v543 = vadd.f32 %v542, %v296
    %v544 = vadd.f32 %v543, %v301
    %v545 = vadd.f32 %v544, %v304
    %v546 = vadd.f32 %v545, %v309
    %v547 = vadd.f32 %v546, %v312
    %v548 = vadd.f32 %v547, %v317
    %v549 = vadd.f32 %v548, %v320
    %v550 = vadd.f32 %v549, %v325
    %v551 = vadd.f32 %v550, %v328
    %v552 = vadd.f32 %v551, %v333
    %v553 = vadd.f32 %v552, %v336
    %v554 = vadd.f32 %v553, %v341
    %v555 = vadd.f32 %v554, %v344
    %v556 = vadd.f32 %v555, %v349
    %v557 = vadd.f32 %v556, %v352
    %v558 = vadd.f32 %v557, %v357
    %v559 = vadd.f32 %v558, %v360
    %v560 = vadd.f32 %v559, %v365
    %v561 = vadd.f32 %v560, %v368
    %v562 = vadd.f32 %v561, %v373
    %v563 = vadd.f32 %v562, %v376
    %v564 = vadd.f32 %v563, %v381
    %v565 = vadd.f32 %v564, %v384
    %v566 = vadd.f32 %v565, %v389
    %v567 = vadd.f32 %v566, %v392
    %v568 = vadd.f32 %v567, %v397
    %v569 = vadd.f32 %v568, %v400
    %v570 = vadd.f32 %v569, %v405
    %v571 = vadd.f32 %v570, %v408
    %v572 = vadd.f32 %v571, %v413
    %v573 = vadd.f32 %v572, %v416
    %v574 = vadd.f32 %v573, %v421
    %v575 = vadd.f32 %v574, %v424
    %v576 = vadd.f32 %v575, %v429
    %v577 = vadd.f32 %v576, %v432
    %v578 = vadd.f32 %v577, %v437
    %v579 = vadd.f32 %v578, %v440
    %v580 = vadd.f32 %v579, %v445
    %v581 = vadd.f32 %v580, %v448
    %v582 = vadd.f32 %v581, %v453
    %v583 = vadd.f32 %v582, %v456
    %v584 = vadd.f32 %v583, %v461
    %v585 = vadd.f32 %v584, %v464
    %v586 = vadd.f32 %v585, %v469
    %v587 = vadd.f32 %v586, %v472
    %v588 = vadd.f32 %v587, %v477
    %v589 = vadd.f32 %v588, %v480
    %v590 = vadd.f32 %v589, %v485
    %v591 = vadd.f32 %v590, %v488
    %v592 = vadd.f32 %v591, %v493
    %v593 = vadd.f32 %v592, %v496
    %v594 = vadd.f32 %v593, %v501
    %v595 = vadd.f32 %v594, %v504
    %v596 = vadd.f32 %v595, %v509
    %v597 = vadd.f32 %v596, %v512
    %v598 = vadd.f32 %v597, %v517
    %v599 = vadd.f32 %v598, %v520
    %v600 = vadd.f32 %v599, %v525
    %v601 = vadd.f32 %v600, %v528
    %v602 = vadd.f32 %v601, %v533
    %v603 = vadd.f32 %v602, %v536
    %v604 = vrot.slane %v603, 4
    %v605 = vadd.f32 %v603, %v604
    %v606 = vrot.slane %v605, 2
    %v607 = vadd.f32 %v605, %v606
    %v608 = vrot.slane %v607, 1
    %v609 = vadd.f32 %v607, %v608
    %v610 = vmul.f32 %v609, 0.001953125
    %v611 = vmul.f32 %v285, %v285
    %v612 = vmul.f32 %v288, %v288
    %v613 = vmul.f32 %v293, %v293
    %v614 = vmul.f32 %v296, %v296
    %v615 = vmul.f32 %v301, %v301
    %v616 = vmul.f32 %v304, %v304
    %v617 = vmul.f32 %v309, %v309
    %v618 = vmul.f32 %v312, %v312
    %v619 = vmul.f32 %v317, %v317
    %v620 = vmul.f32 %v320, %v320
    %v621 = vmul.f32 %v325, %v325
    %v622 = vmul.f32 %v328, %v328
    %v623 = vmul.f32 %v333, %v333
    %v624 = vmul.f32 %v336, %v336
    %v625 = vmul.f32 %v341, %v341
    %v626 = vmul.f32 %v344, %v344
    %v627 = vmul.f32 %v349, %v349
    %v628 = vmul.f32 %v352, %v352
    %v629 = vmul.f32 %v357, %v357
    %v630 = vmul.f32 %v360, %v360
    %v631 = vmul.f32 %v365, %v365
    %v632 = vmul.f32 %v368, %v368
    %v633 = vmul.f32 %v373, %v373
    %v634 = vmul.f32 %v376, %v376
    %v635 = vmul.f32 %v381, %v381
    %v636 = vmul.f32 %v384, %v384
    %v637 = vmul.f32 %v389, %v389
    %v638 = vmul.f32 %v392, %v392
    %v639 = vmul.f32 %v397, %v397
    %v640 = vmul.f32 %v400, %v400
    %v641 = vmul.f32 %v405, %v405
    %v642 = vmul.f32 %v408, %v408
    %v643 = vmul.f32 %v413, %v413
    %v644 = vmul.f32 %v416, %v416
    %v645 = vmul.f32 %v421, %v421
    %v646 = vmul.f32 %v424, %v424
    %v647 = vmul.f32 %v429, %v429
    %v648 = vmul.f32 %v432, %v432
    %v649 = vmul.f32 %v437, %v437
    %v650 = vmul.f32 %v440, %v440
    %v651 = vmul.f32 %v445, %v445
    %v652 = vmul.f32 %v448, %v448
    %v653 = vmul.f32 %v453, %v453
    %v654 = vmul.f32 %v456, %v456
    %v655 = vmul.f32 %v461, %v461
    %v656 = vmul.f32 %v464, %v464
    %v657 = vmul.f32 %v469, %v469
    %v658 = vmul.f32 %v472, %v472
    %v659 = vmul.f32 %v477, %v477
    %v660 = vmul.f32 %v480, %v480
    %v661 = vmul.f32 %v485, %v485
    %v662 = vmul.f32 %v488, %v488
    %v663 = vmul.f32 %v493, %v493
    %v664 = vmul.f32 %v496, %v496
    %v665 = vmul.f32 %v501, %v501
    %v666 = vmul.f32 %v504, %v504
    %v667 = vmul.f32 %v509, %v509
    %v668 = vmul.f32 %v512, %v512
    %v669 = vmul.f32 %v517, %v517
    %v670 = vmul.f32 %v520, %v520
    %v671 = vmul.f32 %v525, %v525
    %v672 = vmul.f32 %v528, %v528
    %v673 = vmul.f32 %v533, %v533
    %v674 = vmul.f32 %v536, %v536
    %v675 = vadd.f32 %v611, %v612
    %v676 = vadd.f32 %v675, %v613
    %v677 = vadd.f32 %v676, %v614
    %v678 = vadd.f32 %v677, %v615
    %v679 = vadd.f32 %v678, %v616
    %v680 = vadd.f32 %v679, %v617
    %v681 = vadd.f32 %v680, %v618
    %v682 = vadd.f32 %v681, %v619
    %v683 = vadd.f32 %v682, %v620
    %v684 = vadd.f32 %v683, %v621
    %v685 = vadd.f32 %v684, %v622
    %v686 = vadd.f32 %v685, %v623
    %v687 = vadd.f32 %v686, %v624
    %v688 = vadd.f32 %v687, %v625
    %v689 = vadd.f32 %v688, %v626
    %v690 = vadd.f32 %v689, %v627
    %v691 = vadd.f32 %v690, %v628
    %v692 = vadd.f32 %v691, %v629
    %v693 = vadd.f32 %v692, %v630
    %v694 = vadd.f32 %v693, %v631
    %v695 = vadd.f32 %v694, %v632
    %v696 = vadd.f32 %v695, %v633
    %v697 = vadd.f32 %v696, %v634
    %v698 = vadd.f32 %v697, %v635
    %v699 = vadd.f32 %v698, %v636
    %v700 = vadd.f32 %v699, %v637
    %v701 = vadd.f32 %v700, %v638
    %v702 = vadd.f32 %v701, %v639
    %v703 = vadd.f32 %v702, %v640
    %v704 = vadd.f32 %v703, %v641
    %v705 = vadd.f32 %v704, %v642
    %v706 = vadd.f32 %v705, %v643
    %v707 = vadd.f32 %v706, %v644
    %v708 = vadd.f32 %v707, %v645
    %v709 = vadd.f32 %v708, %v646
    %v710 = vadd.f32 %v709, %v647
    %v711 = vadd.f32 %v710, %v648
    %v712 = vadd.f32 %v711, %v649
    %v713 = vadd.f32 %v712, %v650
    %v714 = vadd.f32 %v713, %v651
    %v715 = vadd.f32 %v714, %v652
    %v716 = vadd.f32 %v715, %v653
    %v717 = vadd.f32 %v716, %v654
    %v718 = vadd.f32 %v717, %v655
    %v719 = vadd.f32 %v718, %v656
    %v720 = vadd.f32 %v719, %v657
    %v721 = vadd.f32 %v720, %v658
    %v722 = vadd.f32 %v721, %v659
    %v723 = vadd.f32 %v722, %v660
    %v724 = vadd.f32 %v723, %v661
    %v725 = vadd.f32 %v724, %v662
    %v726 = vadd.f32 %v725, %v663
    %v727 = vadd.f32 %v726, %v664
    %v728 = vadd.f32 %v727, %v665
    %v729 = vadd.f32 %v728, %v666
    %v730 = vadd.f32 %v729, %v667
    %v731 = vadd.f32 %v730, %v668
    %v732 = vadd.f32 %v731, %v669
    %v733 = vadd.f32 %v732, %v670
    %v734 = vadd.f32 %v733, %v671
    %v735 = vadd.f32 %v734, %v672
    %v736 = vadd.f32 %v735, %v673
    %v737 = vadd.f32 %v736, %v674
    %v738 = vrot.slane %v737, 4
    %v739 = vadd.f32 %v737, %v738
    %v740 = vrot.slane %v739, 2
    %v741 = vadd.f32 %v739, %v740
    %v742 = vrot.slane %v741, 1
    %v743 = vadd.f32 %v741, %v742
    %v744 = vmul.f32 %v743, 0.001953125
    %v745 = vmul.f32 %v610, %v610
    %v746 = vsub.f32 %v744, %v745
    %v747 = vmax.f32 %v746, 0.0
    %v748 = vsub.f32 %v285, %v610
    %v749 = vsub.f32 %v288, %v610
    %v750 = vsub.f32 %v293, %v610
    %v751 = vsub.f32 %v296, %v610
    %v752 = vsub.f32 %v301, %v610
    %v753 = vsub.f32 %v304, %v610
    %v754 = vsub.f32 %v309, %v610
    %v755 = vsub.f32 %v312, %v610
    %v756 = vsub.f32 %v317, %v610
    %v757 = vsub.f32 %v320, %v610
    %v758 = vsub.f32 %v325, %v610
    %v759 = vsub.f32 %v328, %v610
    %v760 = vsub.f32 %v333, %v610
    %v761 = vsub.f32 %v336, %v610
    %v762 = vsub.f32 %v341, %v610
    %v763 = vsub.f32 %v344, %v610
    %v764 = vsub.f32 %v349, %v610
    %v765 = vsub.f32 %v352, %v610
    %v766 = vsub.f32 %v357, %v610
    %v767 = vsub.f32 %v360, %v610
    %v768 = vsub.f32 %v365, %v610
    %v769 = vsub.f32 %v368, %v610
    %v770 = vsub.f32 %v373, %v610
    %v771 = vsub.f32 %v376, %v610
    %v772 = vsub.f32 %v381, %v610
    %v773 = vsub.f32 %v384, %v610
    %v774 = vsub.f32 %v389, %v610
    %v775 = vsub.f32 %v392, %v610
    %v776 = vsub.f32 %v397, %v610
    %v777 = vsub.f32 %v400, %v610
    %v778 = vsub.f32 %v405, %v610
    %v779 = vsub.f32 %v408, %v610
    %v780 = vsub.f32 %v413, %v610
    %v781 = vsub.f32 %v416, %v610
    %v782 = vsub.f32 %v421, %v610
    %v783 = vsub.f32 %v424, %v610
    %v784 = vsub.f32 %v429, %v610
    %v785 = vsub.f32 %v432, %v610
    %v786 = vsub.f32 %v437, %v610
    %v787 = vsub.f32 %v440, %v610
    %v788 = vsub.f32 %v445, %v610
    %v789 = vsub.f32 %v448, %v610
    %v790 = vsub.f32 %v453, %v610
    %v791 = vsub.f32 %v456, %v610
    %v792 = vsub.f32 %v461, %v610
    %v793 = vsub.f32 %v464, %v610
    %v794 = vsub.f32 %v469, %v610
    %v795 = vsub.f32 %v472, %v610
    %v796 = vsub.f32 %v477, %v610
    %v797 = vsub.f32 %v480, %v610
    %v798 = vsub.f32 %v485, %v610
    %v799 = vsub.f32 %v488, %v610
    %v800 = vsub.f32 %v493, %v610
    %v801 = vsub.f32 %v496, %v610
    %v802 = vsub.f32 %v501, %v610
    %v803 = vsub.f32 %v504, %v610
    %v804 = vsub.f32 %v509, %v610
    %v805 = vsub.f32 %v512, %v610
    %v806 = vsub.f32 %v517, %v610
    %v807 = vsub.f32 %v520, %v610
    %v808 = vsub.f32 %v525, %v610
    %v809 = vsub.f32 %v528, %v610
    %v810 = vsub.f32 %v533, %v610
    %v811 = vsub.f32 %v536, %v610
    %v812 = vadd.f32 %v747, 1e-05
    %v813 = vrsqrt.pop %v812
    %v814 = vmul.f32 %v748, %v813
    %v815 = vmul.f32 %v749, %v813
    %v816 = vmul.f32 %v750, %v813
    %v817 = vmul.f32 %v751, %v813
    %v818 = vmul.f32 %v752, %v813
    %v819 = vmul.f32 %v753, %v813
    %v820 = vmul.f32 %v754, %v813
    %v821 = vmul.f32 %v755, %v813
    %v822 = vmul.f32 %v756, %v813
    %v823 = vmul.f32 %v757, %v813
    %v824 = vmul.f32 %v758, %v813
    %v825 = vmul.f32 %v759, %v813
    %v826 = vmul.f32 %v760, %v813
    %v827 = vmul.f32 %v761, %v813
    %v828 = vmul.f32 %v762, %v813
    %v829 = vmul.f32 %v763, %v813
    %v830 = vmul.f32 %v764, %v813
    %v831 = vmul.f32 %v765, %v813
    %v832 = vmul.f32 %v766, %v813
    %v833 = vmul.f32 %v767, %v813
    %v834 = vmul.f32 %v768, %v813
    %v835 = vmul.f32 %v769, %v813
    %v836 = vmul.f32 %v770, %v813
    %v837 = vmul.f32 %v771, %v813
    %v838 = vmul.f32 %v772, %v813
    %v839 = vmul.f32 %v773, %v813
    %v840 = vmul.f32 %v774, %v813
    %v841 = vmul.f32 %v775, %v813
    %v842 = vmul.f32 %v776, %v813
    %v843 = vmul.f32 %v777, %v813
    %v844 = vmul.f32 %v778, %v813
    %v845 = vmul.f32 %v779, %v813
    %v846 = vmul.f32 %v780, %v813
    %v847 = vmul.f32 %v781, %v813
    %v848 = vmul.f32 %v782, %v813
    %v849 = vmul.f32 %v783, %v813
    %v850 = vmul.f32 %v784, %v813
    %v851 = vmul.f32 %v785, %v813
    %v852 = vmul.f32 %v786, %v813
    %v853 = vmul.f32 %v787, %v813
    %v854 = vmul.f32 %v788, %v813
    %v855 = vmul.f32 %v789, %v813
    %v856 = vmul.f32 %v790, %v813
    %v857 = vmul.f32 %v791, %v813
    %v858 = vmul.f32 %v792, %v813
    %v859 = vmul.f32 %v793, %v813
    %v860 = vmul.f32 %v794, %v813
    %v861 = vmul.f32 %v795, %v813
    %v862 = vmul.f32 %v796, %v813
    %v863 = vmul.f32 %v797, %v813
    %v864 = vmul.f32 %v798, %v813
    %v865 = vmul.f32 %v799, %v813
    %v866 = vmul.f32 %v800, %v813
    %v867 = vmul.f32 %v801, %v813
    %v868 = vmul.f32 %v802, %v813
    %v869 = vmul.f32 %v803, %v813
    %v870 = vmul.f32 %v804, %v813
    %v871 = vmul.f32 %v805, %v813
    %v872 = vmul.f32 %v806, %v813
    %v873 = vmul.f32 %v807, %v813
    %v874 = vmul.f32 %v808, %v813
    %v875 = vmul.f32 %v809, %v813
    %v876 = vmul.f32 %v810, %v813
    %v877 = vmul.f32 %v811, %v813
    %v879 = vlaneseq
    %v880 = vshrl.u32 %v879, 7
    %v881 = vsub.s32 0, %v880
    %v882 = vrot.slane %v539, %v881
    %v884 = vmul.f32 %v814, %v882
    %v885 = vmul.f32 %v815, %v882
    %v886 = vmul.f32 %v816, %v882
    %v887 = vmul.f32 %v817, %v882
    %v888 = vmul.f32 %v818, %v882
    %v889 = vmul.f32 %v819, %v882
    %v890 = vmul.f32 %v820, %v882
    %v891 = vmul.f32 %v821, %v882
    %v892 = vmul.f32 %v822, %v882
    %v893 = vmul.f32 %v823, %v882
    %v894 = vmul.f32 %v824, %v882
    %v895 = vmul.f32 %v825, %v882
    %v896 = vmul.f32 %v826, %v882
    %v897 = vmul.f32 %v827, %v882
    %v898 = vmul.f32 %v828, %v882
    %v899 = vmul.f32 %v829, %v882
    %v900 = vmul.f32 %v830, %v882
    %v901 = vmul.f32 %v831, %v882
    %v902 = vmul.f32 %v832, %v882
    %v903 = vmul.f32 %v833, %v882
    %v904 = vmul.f32 %v834, %v882
    %v905 = vmul.f32 %v835, %v882
    %v906 = vmul.f32 %v836, %v882
    %v907 = vmul.f32 %v837, %v882
    %v908 = vmul.f32 %v838, %v882
    %v909 = vmul.f32 %v839, %v882
    %v910 = vmul.f32 %v840, %v882
    %v911 = vmul.f32 %v841, %v882
    %v912 = vmul.f32 %v842, %v882
    %v913 = vmul.f32 %v843, %v882
    %v914 = vmul.f32 %v844, %v882
    %v915 = vmul.f32 %v845, %v882
    %v916 = vmul.f32 %v846, %v882
    %v917 = vmul.f32 %v847, %v882
    %v918 = vmul.f32 %v848, %v882
    %v919 = vmul.f32 %v849, %v882
    %v920 = vmul.f32 %v850, %v882
    %v921 = vmul.f32 %v851, %v882
    %v922 = vmul.f32 %v852, %v882
    %v923 = vmul.f32 %v853, %v882
    %v924 = vmul.f32 %v854, %v882
    %v925 = vmul.f32 %v855, %v882
    %v926 = vmul.f32 %v856, %v882
    %v927 = vmul.f32 %v857, %v882
    %v928 = vmul.f32 %v858, %v882
    %v929 = vmul.f32 %v859, %v882
    %v930 = vmul.f32 %v860, %v882
    %v931 = vmul.f32 %v861, %v882
    %v932 = vmul.f32 %v862, %v882
    %v933 = vmul.f32 %v863, %v882
    %v934 = vmul.f32 %v864, %v882
    %v935 = vmul.f32 %v865, %v882
    %v936 = vmul.f32 %v866, %v882
    %v937 = vmul.f32 %v867, %v882
    %v938 = vmul.f32 %v868, %v882
    %v939 = vmul.f32 %v869, %v882
    %v940 = vmul.f32 %v870, %v882
    %v941 = vmul.f32 %v871, %v882
    %v942 = vmul.f32 %v872, %v882
    %v943 = vmul.f32 %v873, %v882
    %v944 = vmul.f32 %v874, %v882
    %v945 = vmul.f32 %v875, %v882
    %v946 = vmul.f32 %v876, %v882
    %v947 = vmul.f32 %v877, %v882
    %v949 = vlaneseq
    %v950 = vshrl.u32 %v949, 7
    %v951 = vsub.s32 0, %v950
    %v952 = vrot.slane %v540, %v951
    %v954 = vadd.f32 %v884, %v952
    %v955 = vadd.f32 %v885, %v952
    %v956 = vadd.f32 %v886, %v952
    %v957 = vadd.f32 %v887, %v952
    %v958 = vadd.f32 %v888, %v952
    %v959 = vadd.f32 %v889, %v952
    %v960 = vadd.f32 %v890, %v952
    %v961 = vadd.f32 %v891, %v952
    %v962 = vadd.f32 %v892, %v952
    %v963 = vadd.f32 %v893, %v952
    %v964 = vadd.f32 %v894, %v952
    %v965 = vadd.f32 %v895, %v952
    %v966 = vadd.f32 %v896, %v952
    %v967 = vadd.f32 %v897, %v952
    %v968 = vadd.f32 %v898, %v952
    %v969 = vadd.f32 %v899, %v952
    %v970 = vadd.f32 %v900, %v952
    %v971 = vadd.f32 %v901, %v952
    %v972 = vadd.f32 %v902, %v952
    %v973 = vadd.f32 %v903, %v952
    %v974 = vadd.f32 %v904, %v952
    %v975 = vadd.f32 %v905, %v952
    %v976 = vadd.f32 %v906, %v952
    %v977 = vadd.f32 %v907, %v952
    %v978 = vadd.f32 %v908, %v952
    %v979 = vadd.f32 %v909, %v952
    %v980 = vadd.f32 %v910, %v952
    %v981 = vadd.f32 %v911, %v952
    %v982 = vadd.f32 %v912, %v952
    %v983 = vadd.f32 %v913, %v952
    %v984 = vadd.f32 %v914, %v952
    %v985 = vadd.f32 %v915, %v952
    %v986 = vadd.f32 %v916, %v952
    %v987 = vadd.f32 %v917, %v952
    %v988 = vadd.f32 %v918, %v952
    %v989 = vadd.f32 %v919, %v952
    %v990 = vadd.f32 %v920, %v952
    %v991 = vadd.f32 %v921, %v952
    %v992 = vadd.f32 %v922, %v952
    %v993 = vadd.f32 %v923, %v952
    %v994 = vadd.f32 %v924, %v952
    %v995 = vadd.f32 %v925, %v952
    %v996 = vadd.f32 %v926, %v952
    %v997 = vadd.f32 %v927, %v952
    %v998 = vadd.f32 %v928, %v952
    %v999 = vadd.f32 %v929, %v952
    %v1000 = vadd.f32 %v930, %v952
    %v1001 = vadd.f32 %v931, %v952
    %v1002 = vadd.f32 %v932, %v952
    %v1003 = vadd.f32 %v933, %v952
    %v1004 = vadd.f32 %v934, %v952
    %v1005 = vadd.f32 %v935, %v952
    %v1006 = vadd.f32 %v936, %v952
    %v1007 = vadd.f32 %v937, %v952
    %v1008 = vadd.f32 %v938, %v952
    %v1009 = vadd.f32 %v939, %v952
    %v1010 = vadd.f32 %v940, %v952
    %v1011 = vadd.f32 %v941, %v952
    %v1012 = vadd.f32 %v942, %v952
    %v1013 = vadd.f32 %v943, %v952
    %v1014 = vadd.f32 %v944, %v952
    %v1015 = vadd.f32 %v945, %v952
    %v1016 = vadd.f32 %v946, %v952
    %v1017 = vadd.f32 %v947, %v952
    %v1018 = vmax.f32 %v954, 0.0
    %v1019 = vmax.f32 %v955, 0.0
    %v1020 = vmax.f32 %v956, 0.0
    %v1021 = vmax.f32 %v957, 0.0
    %v1022 = vmax.f32 %v958, 0.0
    %v1023 = vmax.f32 %v959, 0.0
    %v1024 = vmax.f32 %v960, 0.0
    %v1025 = vmax.f32 %v961, 0.0
    %v1026 = vmax.f32 %v962, 0.0
    %v1027 = vmax.f32 %v963, 0.0
    %v1028 = vmax.f32 %v964, 0.0
    %v1029 = vmax.f32 %v965, 0.0
    %v1030 = vmax.f32 %v966, 0.0
    %v1031 = vmax.f32 %v967, 0.0
    %v1032 = vmax.f32 %v968, 0.0
    %v1033 = vmax.f32 %v969, 0.0
    %v1034 = vmax.f32 %v970, 0.0
    %v1035 = vmax.f32 %v971, 0.0
    %v1036 = vmax.f32 %v972, 0.0
    %v1037 = vmax.f32 %v973, 0.0
    %v1038 = vmax.f32 %v974, 0.0
    %v1039 = vmax.f32 %v975, 0.0
    %v1040 = vmax.f32 %v976, 0.0
    %v1041 = vmax.f32 %v977, 0.0
    %v1042 = vmax.f32 %v978, 0.0
    %v1043 = vmax.f32 %v979, 0.0
    %v1044 = vmax.f32 %v980, 0.0
    %v1045 = vmax.f32 %v981, 0.0
    %v1046 = vmax.f32 %v982, 0.0
    %v1047 = vmax.f32 %v983, 0.0
    %v1048 = vmax.f32 %v984, 0.0
    %v1049 = vmax.f32 %v985, 0.0
    %v1050 = vmax.f32 %v986, 0.0
    %v1051 = vmax.f32 %v987, 0.0
    %v1052 = vmax.f32 %v988, 0.0
    %v1053 = vmax.f32 %v989, 0.0
    %v1054 = vmax.f32 %v990, 0.0
    %v1055 = vmax.f32 %v991, 0.0
    %v1056 = vmax.f32 %v992, 0.0
    %v1057 = vmax.f32 %v993, 0.0
    %v1058 = vmax.f32 %v994, 0.0
    %v1059 = vmax.f32 %v995, 0.0
    %v1060 = vmax.f32 %v996, 0.0
    %v1061 = vmax.f32 %v997, 0.0
    %v1062 = vmax.f32 %v998, 0.0
    %v1063 = vmax.f32 %v999, 0.0
    %v1064 = vmax.f32 %v1000, 0.0
    %v1065 = vmax.f32 %v1001, 0.0
    %v1066 = vmax.f32 %v1002, 0.0
    %v1067 = vmax.f32 %v1003, 0.0
    %v1068 = vmax.f32 %v1004, 0.0
    %v1069 = vmax.f32 %v1005, 0.0
    %v1070 = vmax.f32 %v1006, 0.0
    %v1071 = vmax.f32 %v1007, 0.0
    %v1072 = vmax.f32 %v1008, 0.0
    %v1073 = vmax.f32 %v1009, 0.0
    %v1074 = vmax.f32 %v1010, 0.0
    %v1075 = vmax.f32 %v1011, 0.0
    %v1076 = vmax.f32 %v1012, 0.0
    %v1077 = vmax.f32 %v1013, 0.0
    %v1078 = vmax.f32 %v1014, 0.0
    %v1079 = vmax.f32 %v1015, 0.0
    %v1080 = vmax.f32 %v1016, 0.0
    %v1081 = vmax.f32 %v1017, 0.0
    %1082 = vst [vmem:[#allocation2] sm:$0xff] 0.0
    %1083 = vst [vmem:[#allocation2 + $0x8] sm:$0x1] 0.0
    %1084 = vst [vmem:[#allocation2 + $0x90] sm:$0xff] 0.0
    %1085 = vst [vmem:[#allocation2 + $0x98] sm:$0x1] 0.0
    %1086 = vst [vmem:[#allocation2] sm:$0x1] 0.0
    %1087 = vst [vmem:[#allocation2 + $0x10] sm:$0x1] 0.0
    %1088 = vst [vmem:[#allocation2 + $0x20] sm:$0x1] 0.0
    %1089 = vst [vmem:[#allocation2 + $0x30] sm:$0x1] 0.0
    %1090 = vst [vmem:[#allocation2 + $0x40] sm:$0x1] 0.0
    %1091 = vst [vmem:[#allocation2 + $0x50] sm:$0x1] 0.0
    %1092 = vst [vmem:[#allocation2 + $0x60] sm:$0x1] 0.0
    %1093 = vst [vmem:[#allocation2 + $0x70] sm:$0x1] 0.0
    %1094 = vst [vmem:[#allocation2 + $0x80] sm:$0x1] 0.0
    %1095 = vst [vmem:[#allocation2 + $0x90] sm:$0x1] 0.0
    %1096 = vst [vmem:[#allocation2 + $0xa0] sm:$0x1] 0.0
    %1097 = vst [vmem:[#allocation2 + $0xb0] sm:$0x1] 0.0
    %1098 = vst [vmem:[#allocation2 + $0xc0] sm:$0x1] 0.0
    %1099 = vst [vmem:[#allocation2 + $0xd0] sm:$0x1] 0.0
    %1100 = vst [vmem:[#allocation2 + $0xe0] sm:$0x1] 0.0
    %1101 = vst [vmem:[#allocation2 + $0xf0] sm:$0x1] 0.0
    %1102 = vst [vmem:[#allocation2 + $0x100] sm:$0x1] 0.0
    %1103 = vst [vmem:[#allocation2 + $0x110] sm:$0x1] 0.0
    %s1104 = scalar_lea.vmem [#allocation2], 16
    %1105 = vst [vmem:[%s1104 + $0x1] sm:$0xff] %v1018
    %1106 = vst [vmem:[%s1104 + $0x11] sm:$0xff] %v1019
    %1107 = vst [vmem:[%s1104 + $0x21] sm:$0xff] %v1020
    %1108 = vst [vmem:[%s1104 + $0x31] sm:$0xff] %v1021
    %1109 = vst [vmem:[%s1104 + $0x41] sm:$0xff] %v1022
    %1110 = vst [vmem:[%s1104 + $0x51] sm:$0xff] %v1023
    %1111 = vst [vmem:[%s1104 + $0x61] sm:$0xff] %v1024
    %1112 = vst [vmem:[%s1104 + $0x71] sm:$0xff] %v1025
    %1113 = vst [vmem:[%s1104 + $0x91] sm:$0xff] %v1026
    %1114 = vst [vmem:[%s1104 + $0xa1] sm:$0xff] %v1027
    %1115 = vst [vmem:[%s1104 + $0xb1] sm:$0xff] %v1028
    %1116 = vst [vmem:[%s1104 + $0xc1] sm:$0xff] %v1029
    %1117 = vst [vmem:[%s1104 + $0xd1] sm:$0xff] %v1030
    %1118 = vst [vmem:[%s1104 + $0xe1] sm:$0xff] %v1031
    %1119 = vst [vmem:[%s1104 + $0xf1] sm:$0xff] %v1032
    %1120 = vst [vmem:[%s1104 + $0x101] sm:$0xff] %v1033
    %s1121 = scalar_lea.vmem [#allocation2], 288
    %1122 = vst [vmem:[%s1121] sm:$0xff] 0.0
    %1123 = vst [vmem:[%s1121 + $0x8] sm:$0x1] 0.0
    %1124 = vst [vmem:[%s1121 + $0x90] sm:$0xff] 0.0
    %1125 = vst [vmem:[%s1121 + $0x98] sm:$0x1] 0.0
    %1126 = vst [vmem:[%s1121 + $0x8] sm:$0x1] 0.0
    %1127 = vst [vmem:[%s1121 + $0x18] sm:$0x1] 0.0
    %1128 = vst [vmem:[%s1121 + $0x28] sm:$0x1] 0.0
    %1129 = vst [vmem:[%s1121 + $0x38] sm:$0x1] 0.0
    %1130 = vst [vmem:[%s1121 + $0x48] sm:$0x1] 0.0
    %1131 = vst [vmem:[%s1121 + $0x58] sm:$0x1] 0.0
    %1132 = vst [vmem:[%s1121 + $0x68] sm:$0x1] 0.0
    %1133 = vst [vmem:[%s1121 + $0x78] sm:$0x1] 0.0
    %1134 = vst [vmem:[%s1121 + $0x88] sm:$0x1] 0.0
    %1135 = vst [vmem:[%s1121 + $0x98] sm:$0x1] 0.0
    %1136 = vst [vmem:[%s1121 + $0xa8] sm:$0x1] 0.0
    %1137 = vst [vmem:[%s1121 + $0xb8] sm:$0x1] 0.0
    %1138 = vst [vmem:[%s1121 + $0xc8] sm:$0x1] 0.0
    %1139 = vst [vmem:[%s1121 + $0xd8] sm:$0x1] 0.0
    %1140 = vst [vmem:[%s1121 + $0xe8] sm:$0x1] 0.0
    %1141 = vst [vmem:[%s1121 + $0xf8] sm:$0x1] 0.0
    %1142 = vst [vmem:[%s1121 + $0x108] sm:$0x1] 0.0
    %1143 = vst [vmem:[%s1121 + $0x118] sm:$0x1] 0.0
    %s1144 = scalar_lea.vmem [#allocation2], 304
    %1145 = vst [vmem:[%s1144] sm:$0xff] %v1034
    %1146 = vst [vmem:[%s1144 + $0x10] sm:$0xff] %v1035
    %1147 = vst [vmem:[%s1144 + $0x20] sm:$0xff] %v1036
    %1148 = vst [vmem:[%s1144 + $0x30] sm:$0xff] %v1037
    %1149 = vst [vmem:[%s1144 + $0x40] sm:$0xff] %v1038
    %1150 = vst [vmem:[%s1144 + $0x50] sm:$0xff] %v1039
    %1151 = vst [vmem:[%s1144 + $0x60] sm:$0xff] %v1040
    %1152 = vst [vmem:[%s1144 + $0x70] sm:$0xff] %v1041
    %1153 = vst [vmem:[%s1144 + $0x90] sm:$0xff] %v1042
    %1154 = vst [vmem:[%s1144 + $0xa0] sm:$0xff] %v1043
    %1155 = vst [vmem:[%s1144 + $0xb0] sm:$0xff] %v1044
    %1156 = vst [vmem:[%s1144 + $0xc0] sm:$0xff] %v1045
    %1157 = vst [vmem:[%s1144 + $0xd0] sm:$0xff] %v1046
    %1158 = vst [vmem:[%s1144 + $0xe0] sm:$0xff] %v1047
    %1159 = vst [vmem:[%s1144 + $0xf0] sm:$0xff] %v1048
    %1160 = vst [vmem:[%s1144 + $0x100] sm:$0xff] %v1049
    %s1161 = scalar_lea.vmem [#allocation2], 704
    %1162 = vst [vmem:[%s1161] sm:$0xff] 0.0
    %1163 = vst [vmem:[%s1161 + $0x8] sm:$0x1] 0.0
    %1164 = vst [vmem:[%s1161 + $0x90] sm:$0xff] 0.0
    %1165 = vst [vmem:[%s1161 + $0x98] sm:$0x1] 0.0
    %s1166 = scalar_lea.vmem [#allocation2], 576
    %1167 = vst [vmem:[%s1166] sm:$0x1] 0.0
    %1168 = vst [vmem:[%s1166 + $0x10] sm:$0x1] 0.0
    %1169 = vst [vmem:[%s1166 + $0x20] sm:$0x1] 0.0
    %1170 = vst [vmem:[%s1166 + $0x30] sm:$0x1] 0.0
    %1171 = vst [vmem:[%s1166 + $0x40] sm:$0x1] 0.0
    %1172 = vst [vmem:[%s1166 + $0x50] sm:$0x1] 0.0
    %1173 = vst [vmem:[%s1166 + $0x60] sm:$0x1] 0.0
    %1174 = vst [vmem:[%s1166 + $0x70] sm:$0x1] 0.0
    %1175 = vst [vmem:[%s1166 + $0x80] sm:$0x1] 0.0
    %1176 = vst [vmem:[%s1166 + $0x90] sm:$0x1] 0.0
    %1177 = vst [vmem:[%s1166 + $0xa0] sm:$0x1] 0.0
    %1178 = vst [vmem:[%s1166 + $0xb0] sm:$0x1] 0.0
    %1179 = vst [vmem:[%s1166 + $0xc0] sm:$0x1] 0.0
    %1180 = vst [vmem:[%s1166 + $0xd0] sm:$0x1] 0.0
    %1181 = vst [vmem:[%s1166 + $0xe0] sm:$0x1] 0.0
    %1182 = vst [vmem:[%s1166 + $0xf0] sm:$0x1] 0.0
    %1183 = vst [vmem:[%s1166 + $0x100] sm:$0x1] 0.0
    %1184 = vst [vmem:[%s1166 + $0x110] sm:$0x1] 0.0
    %1185 = vst [vmem:[%s1166 + $0x1] sm:$0xff] %v1050
    %1186 = vst [vmem:[%s1166 + $0x11] sm:$0xff] %v1051
    %1187 = vst [vmem:[%s1166 + $0x21] sm:$0xff] %v1052
    %1188 = vst [vmem:[%s1166 + $0x31] sm:$0xff] %v1053
    %1189 = vst [vmem:[%s1166 + $0x41] sm:$0xff] %v1054
    %1190 = vst [vmem:[%s1166 + $0x51] sm:$0xff] %v1055
    %1191 = vst [vmem:[%s1166 + $0x61] sm:$0xff] %v1056
    %1192 = vst [vmem:[%s1166 + $0x71] sm:$0xff] %v1057
    %1193 = vst [vmem:[%s1166 + $0x91] sm:$0xff] %v1058
    %1194 = vst [vmem:[%s1166 + $0xa1] sm:$0xff] %v1059
    %1195 = vst [vmem:[%s1166 + $0xb1] sm:$0xff] %v1060
    %1196 = vst [vmem:[%s1166 + $0xc1] sm:$0xff] %v1061
    %1197 = vst [vmem:[%s1166 + $0xd1] sm:$0xff] %v1062
    %1198 = vst [vmem:[%s1166 + $0xe1] sm:$0xff] %v1063
    %1199 = vst [vmem:[%s1166 + $0xf1] sm:$0xff] %v1064
    %1200 = vst [vmem:[%s1166 + $0x101] sm:$0xff] %v1065
    %s1201 = scalar_lea.vmem [#allocation2], 992
    %1202 = vst [vmem:[%s1201] sm:$0xff] 0.0
    %1203 = vst [vmem:[%s1201 + $0x8] sm:$0x1] 0.0
    %1204 = vst [vmem:[%s1201 + $0x90] sm:$0xff] 0.0
    %1205 = vst [vmem:[%s1201 + $0x98] sm:$0x1] 0.0
    %s1206 = scalar_lea.vmem [#allocation2], 864
    %1207 = vst [vmem:[%s1206 + $0x8] sm:$0x1] 0.0
    %1208 = vst [vmem:[%s1206 + $0x18] sm:$0x1] 0.0
    %1209 = vst [vmem:[%s1206 + $0x28] sm:$0x1] 0.0
    %1210 = vst [vmem:[%s1206 + $0x38] sm:$0x1] 0.0
    %1211 = vst [vmem:[%s1206 + $0x48] sm:$0x1] 0.0
    %1212 = vst [vmem:[%s1206 + $0x58] sm:$0x1] 0.0
    %1213 = vst [vmem:[%s1206 + $0x68] sm:$0x1] 0.0
    %1214 = vst [vmem:[%s1206 + $0x78] sm:$0x1] 0.0
    %1215 = vst [vmem:[%s1206 + $0x88] sm:$0x1] 0.0
    %1216 = vst [vmem:[%s1206 + $0x98] sm:$0x1] 0.0
    %1217 = vst [vmem:[%s1206 + $0xa8] sm:$0x1] 0.0
    %1218 = vst [vmem:[%s1206 + $0xb8] sm:$0x1] 0.0
    %1219 = vst [vmem:[%s1206 + $0xc8] sm:$0x1] 0.0
    %1220 = vst [vmem:[%s1206 + $0xd8] sm:$0x1] 0.0
    %1221 = vst [vmem:[%s1206 + $0xe8] sm:$0x1] 0.0
    %1222 = vst [vmem:[%s1206 + $0xf8] sm:$0x1] 0.0
    %1223 = vst [vmem:[%s1206 + $0x108] sm:$0x1] 0.0
    %1224 = vst [vmem:[%s1206 + $0x118] sm:$0x1] 0.0
    %1225 = vst [vmem:[%s1206] sm:$0xff] %v1066
    %1226 = vst [vmem:[%s1206 + $0x10] sm:$0xff] %v1067
    %1227 = vst [vmem:[%s1206 + $0x20] sm:$0xff] %v1068
    %1228 = vst [vmem:[%s1206 + $0x30] sm:$0xff] %v1069
    %1229 = vst [vmem:[%s1206 + $0x40] sm:$0xff] %v1070
    %1230 = vst [vmem:[%s1206 + $0x50] sm:$0xff] %v1071
    %1231 = vst [vmem:[%s1206 + $0x60] sm:$0xff] %v1072
    %1232 = vst [vmem:[%s1206 + $0x70] sm:$0xff] %v1073
    %1233 = vst [vmem:[%s1206 + $0x90] sm:$0xff] %v1074
    %1234 = vst [vmem:[%s1206 + $0xa0] sm:$0xff] %v1075
    %1235 = vst [vmem:[%s1206 + $0xb0] sm:$0xff] %v1076
    %1236 = vst [vmem:[%s1206 + $0xc0] sm:$0xff] %v1077
    %1237 = vst [vmem:[%s1206 + $0xd0] sm:$0xff] %v1078
    %1238 = vst [vmem:[%s1206 + $0xe0] sm:$0xff] %v1079
    %1239 = vst [vmem:[%s1206 + $0xf0] sm:$0xff] %v1080
    %1240 = vst [vmem:[%s1206 + $0x100] sm:$0xff] %v1081
    %v1241 = vld [vmem:[#allocation2] sm:$0xff]
    %v1242 = vld [vmem:[#allocation2 + $0x10] sm:$0xff]
    %v1243 = vld [vmem:[#allocation2 + $0x20] sm:$0xff]
    %v1244 = vld [vmem:[#allocation2 + $0x30] sm:$0xff]
    %v1245 = vld [vmem:[#allocation2 + $0x40] sm:$0xff]
    %v1246 = vld [vmem:[#allocation2 + $0x50] sm:$0xff]
    %v1247 = vld [vmem:[#allocation2 + $0x60] sm:$0xff]
    %v1248 = vld [vmem:[#allocation2 + $0x70] sm:$0xff]
    %v1249 = vld [vmem:[#allocation2 + $0x90] sm:$0xff]
    %v1250 = vld [vmem:[#allocation2 + $0xa0] sm:$0xff]
    %v1251 = vld [vmem:[#allocation2 + $0xb0] sm:$0xff]
    %v1252 = vld [vmem:[#allocation2 + $0xc0] sm:$0xff]
    %v1253 = vld [vmem:[#allocation2 + $0xd0] sm:$0xff]
    %v1254 = vld [vmem:[#allocation2 + $0xe0] sm:$0xff]
    %v1255 = vld [vmem:[#allocation2 + $0xf0] sm:$0xff]
    %v1256 = vld [vmem:[#allocation2 + $0x100] sm:$0xff]
    %v1257 = vld [vmem:[%s1121] sm:$0xff]
    %v1258 = vld [vmem:[%s1121 + $0x10] sm:$0xff]
    %v1259 = vld [vmem:[%s1121 + $0x20] sm:$0xff]
    %v1260 = vld [vmem:[%s1121 + $0x30] sm:$0xff]
    %v1261 = vld [vmem:[%s1121 + $0x40] sm:$0xff]
    %v1262 = vld [vmem:[%s1121 + $0x50] sm:$0xff]
    %v1263 = vld [vmem:[%s1121 + $0x60] sm:$0xff]
    %v1264 = vld [vmem:[%s1121 + $0x70] sm:$0xff]
    %v1265 = vld [vmem:[%s1121 + $0x90] sm:$0xff]
    %v1266 = vld [vmem:[%s1121 + $0xa0] sm:$0xff]
    %v1267 = vld [vmem:[%s1121 + $0xb0] sm:$0xff]
    %v1268 = vld [vmem:[%s1121 + $0xc0] sm:$0xff]
    %v1269 = vld [vmem:[%s1121 + $0xd0] sm:$0xff]
    %v1270 = vld [vmem:[%s1121 + $0xe0] sm:$0xff]
    %v1271 = vld [vmem:[%s1121 + $0xf0] sm:$0xff]
    %v1272 = vld [vmem:[%s1121 + $0x100] sm:$0xff]
    %v1273 = vld [vmem:[#allocation2 + $0x1] sm:$0xff]
    %v1274 = vld [vmem:[#allocation2 + $0x11] sm:$0xff]
    %v1275 = vld [vmem:[#allocation2 + $0x21] sm:$0xff]
    %v1276 = vld [vmem:[#allocation2 + $0x31] sm:$0xff]
    %v1277 = vld [vmem:[#allocation2 + $0x41] sm:$0xff]
    %v1278 = vld [vmem:[#allocation2 + $0x51] sm:$0xff]
    %v1279 = vld [vmem:[#allocation2 + $0x61] sm:$0xff]
    %v1280 = vld [vmem:[#allocation2 + $0x71] sm:$0xff]
    %v1281 = vld [vmem:[#allocation2 + $0x91] sm:$0xff]
    %v1282 = vld [vmem:[#allocation2 + $0xa1] sm:$0xff]
    %v1283 = vld [vmem:[#allocation2 + $0xb1] sm:$0xff]
    %v1284 = vld [vmem:[#allocation2 + $0xc1] sm:$0xff]
    %v1285 = vld [vmem:[#allocation2 + $0xd1] sm:$0xff]
    %v1286 = vld [vmem:[#allocation2 + $0xe1] sm:$0xff]
    %v1287 = vld [vmem:[#allocation2 + $0xf1] sm:$0xff]
    %v1288 = vld [vmem:[#allocation2 + $0x101] sm:$0xff]
    %v1289 = vld [vmem:[%s1166] sm:$0xff]
    %v1290 = vld [vmem:[%s1166 + $0x10] sm:$0xff]
    %v1291 = vld [vmem:[%s1166 + $0x20] sm:$0xff]
    %v1292 = vld [vmem:[%s1166 + $0x30] sm:$0xff]
    %v1293 = vld [vmem:[%s1166 + $0x40] sm:$0xff]
    %v1294 = vld [vmem:[%s1166 + $0x50] sm:$0xff]
    %v1295 = vld [vmem:[%s1166 + $0x60] sm:$0xff]
    %v1296 = vld [vmem:[%s1166 + $0x70] sm:$0xff]
    %v1297 = vld [vmem:[%s1166 + $0x90] sm:$0xff]
    %v1298 = vld [vmem:[%s1166 + $0xa0] sm:$0xff]
    %v1299 = vld [vmem:[%s1166 + $0xb0] sm:$0xff]
    %v1300 = vld [vmem:[%s1166 + $0xc0] sm:$0xff]
    %v1301 = vld [vmem:[%s1166 + $0xd0] sm:$0xff]
    %v1302 = vld [vmem:[%s1166 + $0xe0] sm:$0xff]
    %v1303 = vld [vmem:[%s1166 + $0xf0] sm:$0xff]
    %v1304 = vld [vmem:[%s1166 + $0x100] sm:$0xff]
    %v1305 = vld [vmem:[%s1206] sm:$0xff]
    %v1306 = vld [vmem:[%s1206 + $0x10] sm:$0xff]
    %v1307 = vld [vmem:[%s1206 + $0x20] sm:$0xff]
    %v1308 = vld [vmem:[%s1206 + $0x30] sm:$0xff]
    %v1309 = vld [vmem:[%s1206 + $0x40] sm:$0xff]
    %v1310 = vld [vmem:[%s1206 + $0x50] sm:$0xff]
    %v1311 = vld [vmem:[%s1206 + $0x60] sm:$0xff]
    %v1312 = vld [vmem:[%s1206 + $0x70] sm:$0xff]
    %v1313 = vld [vmem:[%s1206 + $0x90] sm:$0xff]
    %v1314 = vld [vmem:[%s1206 + $0xa0] sm:$0xff]
    %v1315 = vld [vmem:[%s1206 + $0xb0] sm:$0xff]
    %v1316 = vld [vmem:[%s1206 + $0xc0] sm:$0xff]
    %v1317 = vld [vmem:[%s1206 + $0xd0] sm:$0xff]
    %v1318 = vld [vmem:[%s1206 + $0xe0] sm:$0xff]
    %v1319 = vld [vmem:[%s1206 + $0xf0] sm:$0xff]
    %v1320 = vld [vmem:[%s1206 + $0x100] sm:$0xff]
    %v1321 = vld [vmem:[%s1166 + $0x1] sm:$0xff]
    %v1322 = vld [vmem:[%s1166 + $0x11] sm:$0xff]
    %v1323 = vld [vmem:[%s1166 + $0x21] sm:$0xff]
    %v1324 = vld [vmem:[%s1166 + $0x31] sm:$0xff]
    %v1325 = vld [vmem:[%s1166 + $0x41] sm:$0xff]
    %v1326 = vld [vmem:[%s1166 + $0x51] sm:$0xff]
    %v1327 = vld [vmem:[%s1166 + $0x61] sm:$0xff]
    %v1328 = vld [vmem:[%s1166 + $0x71] sm:$0xff]
    %v1329 = vld [vmem:[%s1166 + $0x91] sm:$0xff]
    %v1330 = vld [vmem:[%s1166 + $0xa1] sm:$0xff]
    %v1331 = vld [vmem:[%s1166 + $0xb1] sm:$0xff]
    %v1332 = vld [vmem:[%s1166 + $0xc1] sm:$0xff]
    %v1333 = vld [vmem:[%s1166 + $0xd1] sm:$0xff]
    %v1334 = vld [vmem:[%s1166 + $0xe1] sm:$0xff]
    %v1335 = vld [vmem:[%s1166 + $0xf1] sm:$0xff]
    %v1336 = vld [vmem:[%s1166 + $0x101] sm:$0xff]
    %v1337 = vld [vmem:[%s1104] sm:$0xff]
    %v1338 = vld [vmem:[%s1104 + $0x10] sm:$0xff]
    %v1339 = vld [vmem:[%s1104 + $0x20] sm:$0xff]
    %v1340 = vld [vmem:[%s1104 + $0x30] sm:$0xff]
    %v1341 = vld [vmem:[%s1104 + $0x40] sm:$0xff]
    %v1342 = vld [vmem:[%s1104 + $0x50] sm:$0xff]
    %v1343 = vld [vmem:[%s1104 + $0x60] sm:$0xff]
    %v1344 = vld [vmem:[%s1104 + $0x70] sm:$0xff]
    %v1345 = vld [vmem:[%s1104 + $0x90] sm:$0xff]
    %v1346 = vld [vmem:[%s1104 + $0xa0] sm:$0xff]
    %v1347 = vld [vmem:[%s1104 + $0xb0] sm:$0xff]
    %v1348 = vld [vmem:[%s1104 + $0xc0] sm:$0xff]
    %v1349 = vld [vmem:[%s1104 + $0xd0] sm:$0xff]
    %v1350 = vld [vmem:[%s1104 + $0xe0] sm:$0xff]
    %v1351 = vld [vmem:[%s1104 + $0xf0] sm:$0xff]
    %v1352 = vld [vmem:[%s1104 + $0x100] sm:$0xff]
    %v1353 = vld [vmem:[%s1144] sm:$0xff]
    %v1354 = vld [vmem:[%s1144 + $0x10] sm:$0xff]
    %v1355 = vld [vmem:[%s1144 + $0x20] sm:$0xff]
    %v1356 = vld [vmem:[%s1144 + $0x30] sm:$0xff]
    %v1357 = vld [vmem:[%s1144 + $0x40] sm:$0xff]
    %v1358 = vld [vmem:[%s1144 + $0x50] sm:$0xff]
    %v1359 = vld [vmem:[%s1144 + $0x60] sm:$0xff]
    %v1360 = vld [vmem:[%s1144 + $0x70] sm:$0xff]
    %v1361 = vld [vmem:[%s1144 + $0x90] sm:$0xff]
    %v1362 = vld [vmem:[%s1144 + $0xa0] sm:$0xff]
    %v1363 = vld [vmem:[%s1144 + $0xb0] sm:$0xff]
    %v1364 = vld [vmem:[%s1144 + $0xc0] sm:$0xff]
    %v1365 = vld [vmem:[%s1144 + $0xd0] sm:$0xff]
    %v1366 = vld [vmem:[%s1144 + $0xe0] sm:$0xff]
    %v1367 = vld [vmem:[%s1144 + $0xf0] sm:$0xff]
    %v1368 = vld [vmem:[%s1144 + $0x100] sm:$0xff]
    %v1369 = vld [vmem:[%s1104 + $0x1] sm:$0xff]
    %v1370 = vld [vmem:[%s1104 + $0x11] sm:$0xff]
    %v1371 = vld [vmem:[%s1104 + $0x21] sm:$0xff]
    %v1372 = vld [vmem:[%s1104 + $0x31] sm:$0xff]
    %v1373 = vld [vmem:[%s1104 + $0x41] sm:$0xff]
    %v1374 = vld [vmem:[%s1104 + $0x51] sm:$0xff]
    %v1375 = vld [vmem:[%s1104 + $0x61] sm:$0xff]
    %v1376 = vld [vmem:[%s1104 + $0x71] sm:$0xff]
    %v1377 = vld [vmem:[%s1104 + $0x91] sm:$0xff]
    %v1378 = vld [vmem:[%s1104 + $0xa1] sm:$0xff]
    %v1379 = vld [vmem:[%s1104 + $0xb1] sm:$0xff]
    %v1380 = vld [vmem:[%s1104 + $0xc1] sm:$0xff]
    %v1381 = vld [vmem:[%s1104 + $0xd1] sm:$0xff]
    %v1382 = vld [vmem:[%s1104 + $0xe1] sm:$0xff]
    %v1383 = vld [vmem:[%s1104 + $0xf1] sm:$0xff]
    %v1384 = vld [vmem:[%s1104 + $0x101] sm:$0xff]
    %v1385 = vpack.c.bf16 %v1242, %v1241
    %v1386 = vpack.c.bf16 %v1258, %v1257
    %v1387 = vpack.c.bf16 %v1274, %v1273
    %v1388 = vpack.c.bf16 %v1290, %v1289
    %v1389 = vpack.c.bf16 %v1306, %v1305
    %v1390 = vpack.c.bf16 %v1322, %v1321
    %v1391 = vpack.c.bf16 %v1338, %v1337
    %v1392 = vpack.c.bf16 %v1354, %v1353
    %v1393 = vpack.c.bf16 %v1370, %v1369
    %v1394 = vpack.c.bf16 %v1244, %v1243
    %v1395 = vpack.c.bf16 %v1260, %v1259
    %v1396 = vpack.c.bf16 %v1276, %v1275
    %v1397 = vpack.c.bf16 %v1292, %v1291
    %v1398 = vpack.c.bf16 %v1308, %v1307
    %v1399 = vpack.c.bf16 %v1324, %v1323
    %v1400 = vpack.c.bf16 %v1340, %v1339
    %v1401 = vpack.c.bf16 %v1356, %v1355
    %v1402 = vpack.c.bf16 %v1372, %v1371
    %v1403 = vpack.c.bf16 %v1246, %v1245
    %v1404 = vpack.c.bf16 %v1262, %v1261
    %v1405 = vpack.c.bf16 %v1278, %v1277
    %v1406 = vpack.c.bf16 %v1294, %v1293
    %v1407 = vpack.c.bf16 %v1310, %v1309
    %v1408 = vpack.c.bf16 %v1326, %v1325
    %v1409 = vpack.c.bf16 %v1342, %v1341
    %v1410 = vpack.c.bf16 %v1358, %v1357
    %v1411 = vpack.c.bf16 %v1374, %v1373
    %v1412 = vpack.c.bf16 %v1248, %v1247
    %v1413 = vpack.c.bf16 %v1264, %v1263
    %v1414 = vpack.c.bf16 %v1280, %v1279
    %v1415 = vpack.c.bf16 %v1296, %v1295
    %v1416 = vpack.c.bf16 %v1312, %v1311
    %v1417 = vpack.c.bf16 %v1328, %v1327
    %v1418 = vpack.c.bf16 %v1344, %v1343
    %v1419 = vpack.c.bf16 %v1360, %v1359
    %v1420 = vpack.c.bf16 %v1376, %v1375
    %v1421 = vpack.c.bf16 %v1250, %v1249
    %v1422 = vpack.c.bf16 %v1266, %v1265
    %v1423 = vpack.c.bf16 %v1282, %v1281
    %v1424 = vpack.c.bf16 %v1298, %v1297
    %v1425 = vpack.c.bf16 %v1314, %v1313
    %v1426 = vpack.c.bf16 %v1330, %v1329
    %v1427 = vpack.c.bf16 %v1346, %v1345
    %v1428 = vpack.c.bf16 %v1362, %v1361
    %v1429 = vpack.c.bf16 %v1378, %v1377
    %v1430 = vpack.c.bf16 %v1252, %v1251
    %v1431 = vpack.c.bf16 %v1268, %v1267
    %v1432 = vpack.c.bf16 %v1284, %v1283
    %v1433 = vpack.c.bf16 %v1300, %v1299
    %v1434 = vpack.c.bf16 %v1316, %v1315
    %v1435 = vpack.c.bf16 %v1332, %v1331
    %v1436 = vpack.c.bf16 %v1348, %v1347
    %v1437 = vpack.c.bf16 %v1364, %v1363
    %v1438 = vpack.c.bf16 %v1380, %v1379
    %v1439 = vpack.c.bf16 %v1254, %v1253
    %v1440 = vpack.c.bf16 %v1270, %v1269
    %v1441 = vpack.c.bf16 %v1286, %v1285
    %v1442 = vpack.c.bf16 %v1302, %v1301
    %v1443 = vpack.c.bf16 %v1318, %v1317
    %v1444 = vpack.c.bf16 %v1334, %v1333
    %v1445 = vpack.c.bf16 %v1350, %v1349
    %v1446 = vpack.c.bf16 %v1366, %v1365
    %v1447 = vpack.c.bf16 %v1382, %v1381
    %v1448 = vpack.c.bf16 %v1256, %v1255
    %v1449 = vpack.c.bf16 %v1272, %v1271
    %v1450 = vpack.c.bf16 %v1288, %v1287
    %v1451 = vpack.c.bf16 %v1304, %v1303
    %v1452 = vpack.c.bf16 %v1320, %v1319
    %v1453 = vpack.c.bf16 %v1336, %v1335
    %v1454 = vpack.c.bf16 %v1352, %v1351
    %v1455 = vpack.c.bf16 %v1368, %v1367
    %v1456 = vpack.c.bf16 %v1384, %v1383
    %v1457 = vld [vmem:[%s3] sm:$0xf]
    %v1458 = vld [vmem:[%s3 + $0x4] sm:$0xf]
    %v1459 = vld [vmem:[%s3 + $0x8] sm:$0xf]
    %v1460 = vld [vmem:[%s3 + $0xc] sm:$0xf]
    %v1461 = vld [vmem:[%s3 + $0x10] sm:$0xf]
    %v1462 = vld [vmem:[%s3 + $0x14] sm:$0xf]
    %v1463 = vld [vmem:[%s3 + $0x18] sm:$0xf]
    %v1464 = vld [vmem:[%s3 + $0x1c] sm:$0xf]
    %v1465 = vld [vmem:[%s3 + $0x20] sm:$0xf]
    %v1466 = vld [vmem:[%s3 + $0x24] sm:$0xf]
    %v1467 = vld [vmem:[%s3 + $0x28] sm:$0xf]
    %v1468 = vld [vmem:[%s3 + $0x2c] sm:$0xf]
    %v1469 = vld [vmem:[%s3 + $0x30] sm:$0xf]
    %v1470 = vld [vmem:[%s3 + $0x34] sm:$0xf]
    %v1471 = vld [vmem:[%s3 + $0x38] sm:$0xf]
    %v1472 = vld [vmem:[%s3 + $0x3c] sm:$0xf]
    %v1473 = vld [vmem:[%s3 + $0x40] sm:$0xf]
    %v1474 = vld [vmem:[%s3 + $0x44] sm:$0xf]
    %v1475 = vld [vmem:[%s3 + $0x48] sm:$0xf]
    %v1476 = vld [vmem:[%s3 + $0x4c] sm:$0xf]
    %v1477 = vld [vmem:[%s3 + $0x50] sm:$0xf]
    %v1478 = vld [vmem:[%s3 + $0x54] sm:$0xf]
    %v1479 = vld [vmem:[%s3 + $0x58] sm:$0xf]
    %v1480 = vld [vmem:[%s3 + $0x5c] sm:$0xf]
    %v1481 = vld [vmem:[%s3 + $0x60] sm:$0xf]
    %v1482 = vld [vmem:[%s3 + $0x64] sm:$0xf]
    %v1483 = vld [vmem:[%s3 + $0x68] sm:$0xf]
    %v1484 = vld [vmem:[%s3 + $0x6c] sm:$0xf]
    %v1485 = vld [vmem:[%s3 + $0x70] sm:$0xf]
    %v1486 = vld [vmem:[%s3 + $0x74] sm:$0xf]
    %v1487 = vld [vmem:[%s3 + $0x78] sm:$0xf]
    %v1488 = vld [vmem:[%s3 + $0x7c] sm:$0xf]
    %v1489 = vld [vmem:[%s3 + $0x80] sm:$0xf]
    %v1490 = vld [vmem:[%s3 + $0x84] sm:$0xf]
    %v1491 = vld [vmem:[%s3 + $0x88] sm:$0xf]
    %v1492 = vld [vmem:[%s3 + $0x8c] sm:$0xf]
    %v1493 = vld [vmem:[%s3 + $0x90] sm:$0xf]
    %v1494 = vld [vmem:[%s3 + $0x94] sm:$0xf]
    %v1495 = vld [vmem:[%s3 + $0x98] sm:$0xf]
    %v1496 = vld [vmem:[%s3 + $0x9c] sm:$0xf]
    %v1497 = vld [vmem:[%s3 + $0xa0] sm:$0xf]
    %v1498 = vld [vmem:[%s3 + $0xa4] sm:$0xf]
    %v1499 = vld [vmem:[%s3 + $0xa8] sm:$0xf]
    %v1500 = vld [vmem:[%s3 + $0xac] sm:$0xf]
    %v1501 = vld [vmem:[%s3 + $0xb0] sm:$0xf]
    %v1502 = vld [vmem:[%s3 + $0xb4] sm:$0xf]
    %v1503 = vld [vmem:[%s3 + $0xb8] sm:$0xf]
    %v1504 = vld [vmem:[%s3 + $0xbc] sm:$0xf]
    %v1505 = vld [vmem:[%s3 + $0xc0] sm:$0xf]
    %v1506 = vld [vmem:[%s3 + $0xc4] sm:$0xf]
    %v1507 = vld [vmem:[%s3 + $0xc8] sm:$0xf]
    %v1508 = vld [vmem:[%s3 + $0xcc] sm:$0xf]
    %v1509 = vld [vmem:[%s3 + $0xd0] sm:$0xf]
    %v1510 = vld [vmem:[%s3 + $0xd4] sm:$0xf]
    %v1511 = vld [vmem:[%s3 + $0xd8] sm:$0xf]
    %v1512 = vld [vmem:[%s3 + $0xdc] sm:$0xf]
    %v1513 = vld [vmem:[%s3 + $0xe0] sm:$0xf]
    %v1514 = vld [vmem:[%s3 + $0xe4] sm:$0xf]
    %v1515 = vld [vmem:[%s3 + $0xe8] sm:$0xf]
    %v1516 = vld [vmem:[%s3 + $0xec] sm:$0xf]
    %v1517 = vld [vmem:[%s3 + $0xf0] sm:$0xf]
    %v1518 = vld [vmem:[%s3 + $0xf4] sm:$0xf]
    %v1519 = vld [vmem:[%s3 + $0xf8] sm:$0xf]
    %v1520 = vld [vmem:[%s3 + $0xfc] sm:$0xf]
    %v1521 = vld [vmem:[%s3 + $0x100] sm:$0xf]
    %v1522 = vld [vmem:[%s3 + $0x104] sm:$0xf]
    %v1523 = vld [vmem:[%s3 + $0x108] sm:$0xf]
    %v1524 = vld [vmem:[%s3 + $0x10c] sm:$0xf]
    %v1525 = vld [vmem:[%s3 + $0x110] sm:$0xf]
    %v1526 = vld [vmem:[%s3 + $0x114] sm:$0xf]
    %v1527 = vld [vmem:[%s3 + $0x118] sm:$0xf]
    %v1528 = vld [vmem:[%s3 + $0x11c] sm:$0xf]
    %v1529 = vld [vmem:[%s3 + $0x120] sm:$0xf]
    %v1530 = vld [vmem:[%s3 + $0x124] sm:$0xf]
    %v1531 = vld [vmem:[%s3 + $0x128] sm:$0xf]
    %v1532 = vld [vmem:[%s3 + $0x12c] sm:$0xf]
    %v1533 = vld [vmem:[%s3 + $0x130] sm:$0xf]
    %v1534 = vld [vmem:[%s3 + $0x134] sm:$0xf]
    %v1535 = vld [vmem:[%s3 + $0x138] sm:$0xf]
    %v1536 = vld [vmem:[%s3 + $0x13c] sm:$0xf]
    %v1537 = vld [vmem:[%s3 + $0x140] sm:$0xf]
    %v1538 = vld [vmem:[%s3 + $0x144] sm:$0xf]
    %v1539 = vld [vmem:[%s3 + $0x148] sm:$0xf]
    %v1540 = vld [vmem:[%s3 + $0x14c] sm:$0xf]
    %v1541 = vld [vmem:[%s3 + $0x150] sm:$0xf]
    %v1542 = vld [vmem:[%s3 + $0x154] sm:$0xf]
    %v1543 = vld [vmem:[%s3 + $0x158] sm:$0xf]
    %v1544 = vld [vmem:[%s3 + $0x15c] sm:$0xf]
    %v1545 = vld [vmem:[%s3 + $0x160] sm:$0xf]
    %v1546 = vld [vmem:[%s3 + $0x164] sm:$0xf]
    %v1547 = vld [vmem:[%s3 + $0x168] sm:$0xf]
    %v1548 = vld [vmem:[%s3 + $0x16c] sm:$0xf]
    %v1549 = vld [vmem:[%s3 + $0x170] sm:$0xf]
    %v1550 = vld [vmem:[%s3 + $0x174] sm:$0xf]
    %v1551 = vld [vmem:[%s3 + $0x178] sm:$0xf]
    %v1552 = vld [vmem:[%s3 + $0x17c] sm:$0xf]
    %v1553 = vld [vmem:[%s3 + $0x180] sm:$0xf]
    %v1554 = vld [vmem:[%s3 + $0x184] sm:$0xf]
    %v1555 = vld [vmem:[%s3 + $0x188] sm:$0xf]
    %v1556 = vld [vmem:[%s3 + $0x18c] sm:$0xf]
    %v1557 = vld [vmem:[%s3 + $0x190] sm:$0xf]
    %v1558 = vld [vmem:[%s3 + $0x194] sm:$0xf]
    %v1559 = vld [vmem:[%s3 + $0x198] sm:$0xf]
    %v1560 = vld [vmem:[%s3 + $0x19c] sm:$0xf]
    %v1561 = vld [vmem:[%s3 + $0x1a0] sm:$0xf]
    %v1562 = vld [vmem:[%s3 + $0x1a4] sm:$0xf]
    %v1563 = vld [vmem:[%s3 + $0x1a8] sm:$0xf]
    %v1564 = vld [vmem:[%s3 + $0x1ac] sm:$0xf]
    %v1565 = vld [vmem:[%s3 + $0x1b0] sm:$0xf]
    %v1566 = vld [vmem:[%s3 + $0x1b4] sm:$0xf]
    %v1567 = vld [vmem:[%s3 + $0x1b8] sm:$0xf]
    %v1568 = vld [vmem:[%s3 + $0x1bc] sm:$0xf]
    %v1569 = vld [vmem:[%s3 + $0x1c0] sm:$0xf]
    %v1570 = vld [vmem:[%s3 + $0x1c4] sm:$0xf]
    %v1571 = vld [vmem:[%s3 + $0x1c8] sm:$0xf]
    %v1572 = vld [vmem:[%s3 + $0x1cc] sm:$0xf]
    %v1573 = vld [vmem:[%s3 + $0x1d0] sm:$0xf]
    %v1574 = vld [vmem:[%s3 + $0x1d4] sm:$0xf]
    %v1575 = vld [vmem:[%s3 + $0x1d8] sm:$0xf]
    %v1576 = vld [vmem:[%s3 + $0x1dc] sm:$0xf]
    %v1577 = vld [vmem:[%s3 + $0x1e0] sm:$0xf]
    %v1578 = vld [vmem:[%s3 + $0x1e4] sm:$0xf]
    %v1579 = vld [vmem:[%s3 + $0x1e8] sm:$0xf]
    %v1580 = vld [vmem:[%s3 + $0x1ec] sm:$0xf]
    %v1581 = vld [vmem:[%s3 + $0x1f0] sm:$0xf]
    %v1582 = vld [vmem:[%s3 + $0x1f4] sm:$0xf]
    %v1583 = vld [vmem:[%s3 + $0x1f8] sm:$0xf]
    %v1584 = vld [vmem:[%s3 + $0x1fc] sm:$0xf]
    %v1585 = vld [vmem:[%s3 + $0x200] sm:$0xf]
    %v1586 = vld [vmem:[%s3 + $0x204] sm:$0xf]
    %v1587 = vld [vmem:[%s3 + $0x208] sm:$0xf]
    %v1588 = vld [vmem:[%s3 + $0x20c] sm:$0xf]
    %v1589 = vld [vmem:[%s3 + $0x210] sm:$0xf]
    %v1590 = vld [vmem:[%s3 + $0x214] sm:$0xf]
    %v1591 = vld [vmem:[%s3 + $0x218] sm:$0xf]
    %v1592 = vld [vmem:[%s3 + $0x21c] sm:$0xf]
    %v1593 = vld [vmem:[%s3 + $0x220] sm:$0xf]
    %v1594 = vld [vmem:[%s3 + $0x224] sm:$0xf]
    %v1595 = vld [vmem:[%s3 + $0x228] sm:$0xf]
    %v1596 = vld [vmem:[%s3 + $0x22c] sm:$0xf]
    %v1597 = vld [vmem:[%s3 + $0x230] sm:$0xf]
    %v1598 = vld [vmem:[%s3 + $0x234] sm:$0xf]
    %v1599 = vld [vmem:[%s3 + $0x238] sm:$0xf]
    %v1600 = vld [vmem:[%s3 + $0x23c] sm:$0xf]
    %v1745 = vunpack.c.l.b16 %v1457
    %v1746 = vunpack.c.l.b16 %v1458
    %v1747 = vunpack.c.l.b16 %v1459
    %v1748 = vunpack.c.l.b16 %v1460
    %v1749 = vunpack.c.l.b16 %v1461
    %v1750 = vunpack.c.l.b16 %v1462
    %v1751 = vunpack.c.l.b16 %v1463
    %v1752 = vunpack.c.l.b16 %v1464
    %v1753 = vunpack.c.l.b16 %v1465
    %v1754 = vunpack.c.l.b16 %v1466
    %v1755 = vunpack.c.l.b16 %v1467
    %v1756 = vunpack.c.l.b16 %v1468
    %v1757 = vunpack.c.l.b16 %v1469
    %v1758 = vunpack.c.l.b16 %v1470
    %v1759 = vunpack.c.l.b16 %v1471
    %v1760 = vunpack.c.l.b16 %v1472
    %v1761 = vunpack.c.l.b16 %v1473
    %v1762 = vunpack.c.l.b16 %v1474
    %v1763 = vunpack.c.l.b16 %v1475
    %v1764 = vunpack.c.l.b16 %v1476
    %v1765 = vunpack.c.l.b16 %v1477
    %v1766 = vunpack.c.l.b16 %v1478
    %v1767 = vunpack.c.l.b16 %v1479
    %v1768 = vunpack.c.l.b16 %v1480
    %v1769 = vunpack.c.l.b16 %v1481
    %v1770 = vunpack.c.l.b16 %v1482
    %v1771 = vunpack.c.l.b16 %v1483
    %v1772 = vunpack.c.l.b16 %v1484
    %v1773 = vunpack.c.l.b16 %v1485
    %v1774 = vunpack.c.l.b16 %v1486
    %v1775 = vunpack.c.l.b16 %v1487
    %v1776 = vunpack.c.l.b16 %v1488
    %v1777 = vunpack.c.l.b16 %v1489
    %v1778 = vunpack.c.l.b16 %v1490
    %v1779 = vunpack.c.l.b16 %v1491
    %v1780 = vunpack.c.l.b16 %v1492
    %v1781 = vunpack.c.l.b16 %v1493
    %v1782 = vunpack.c.l.b16 %v1494
    %v1783 = vunpack.c.l.b16 %v1495
    %v1784 = vunpack.c.l.b16 %v1496
    %v1785 = vunpack.c.l.b16 %v1497
    %v1786 = vunpack.c.l.b16 %v1498
    %v1787 = vunpack.c.l.b16 %v1499
    %v1788 = vunpack.c.l.b16 %v1500
    %v1789 = vunpack.c.l.b16 %v1501
    %v1790 = vunpack.c.l.b16 %v1502
    %v1791 = vunpack.c.l.b16 %v1503
    %v1792 = vunpack.c.l.b16 %v1504
    %v1793 = vunpack.c.l.b16 %v1505
    %v1794 = vunpack.c.l.b16 %v1506
    %v1795 = vunpack.c.l.b16 %v1507
    %v1796 = vunpack.c.l.b16 %v1508
    %v1797 = vunpack.c.l.b16 %v1509
    %v1798 = vunpack.c.l.b16 %v1510
    %v1799 = vunpack.c.l.b16 %v1511
    %v1800 = vunpack.c.l.b16 %v1512
    %v1801 = vunpack.c.l.b16 %v1513
    %v1802 = vunpack.c.l.b16 %v1514
    %v1803 = vunpack.c.l.b16 %v1515
    %v1804 = vunpack.c.l.b16 %v1516
    %v1805 = vunpack.c.l.b16 %v1517
    %v1806 = vunpack.c.l.b16 %v1518
    %v1807 = vunpack.c.l.b16 %v1519
    %v1808 = vunpack.c.l.b16 %v1520
    %v1809 = vunpack.c.l.b16 %v1521
    %v1810 = vunpack.c.l.b16 %v1522
    %v1811 = vunpack.c.l.b16 %v1523
    %v1812 = vunpack.c.l.b16 %v1524
    %v1813 = vunpack.c.l.b16 %v1525
    %v1814 = vunpack.c.l.b16 %v1526
    %v1815 = vunpack.c.l.b16 %v1527
    %v1816 = vunpack.c.l.b16 %v1528
    %v1817 = vunpack.c.l.b16 %v1529
    %v1818 = vunpack.c.l.b16 %v1530
    %v1819 = vunpack.c.l.b16 %v1531
    %v1820 = vunpack.c.l.b16 %v1532
    %v1821 = vunpack.c.l.b16 %v1533
    %v1822 = vunpack.c.l.b16 %v1534
    %v1823 = vunpack.c.l.b16 %v1535
    %v1824 = vunpack.c.l.b16 %v1536
    %v1825 = vunpack.c.l.b16 %v1537
    %v1826 = vunpack.c.l.b16 %v1538
    %v1827 = vunpack.c.l.b16 %v1539
    %v1828 = vunpack.c.l.b16 %v1540
    %v1829 = vunpack.c.l.b16 %v1541
    %v1830 = vunpack.c.l.b16 %v1542
    %v1831 = vunpack.c.l.b16 %v1543
    %v1832 = vunpack.c.l.b16 %v1544
    %v1833 = vunpack.c.l.b16 %v1545
    %v1834 = vunpack.c.l.b16 %v1546
    %v1835 = vunpack.c.l.b16 %v1547
    %v1836 = vunpack.c.l.b16 %v1548
    %v1837 = vunpack.c.l.b16 %v1549
    %v1838 = vunpack.c.l.b16 %v1550
    %v1839 = vunpack.c.l.b16 %v1551
    %v1840 = vunpack.c.l.b16 %v1552
    %v1841 = vunpack.c.l.b16 %v1553
    %v1842 = vunpack.c.l.b16 %v1554
    %v1843 = vunpack.c.l.b16 %v1555
    %v1844 = vunpack.c.l.b16 %v1556
    %v1845 = vunpack.c.l.b16 %v1557
    %v1846 = vunpack.c.l.b16 %v1558
    %v1847 = vunpack.c.l.b16 %v1559
    %v1848 = vunpack.c.l.b16 %v1560
    %v1849 = vunpack.c.l.b16 %v1561
    %v1850 = vunpack.c.l.b16 %v1562
    %v1851 = vunpack.c.l.b16 %v1563
    %v1852 = vunpack.c.l.b16 %v1564
    %v1853 = vunpack.c.l.b16 %v1565
    %v1854 = vunpack.c.l.b16 %v1566
    %v1855 = vunpack.c.l.b16 %v1567
    %v1856 = vunpack.c.l.b16 %v1568
    %v1857 = vunpack.c.l.b16 %v1569
    %v1858 = vunpack.c.l.b16 %v1570
    %v1859 = vunpack.c.l.b16 %v1571
    %v1860 = vunpack.c.l.b16 %v1572
    %v1861 = vunpack.c.l.b16 %v1573
    %v1862 = vunpack.c.l.b16 %v1574
    %v1863 = vunpack.c.l.b16 %v1575
    %v1864 = vunpack.c.l.b16 %v1576
    %v1865 = vunpack.c.l.b16 %v1577
    %v1866 = vunpack.c.l.b16 %v1578
    %v1867 = vunpack.c.l.b16 %v1579
    %v1868 = vunpack.c.l.b16 %v1580
    %v1869 = vunpack.c.l.b16 %v1581
    %v1870 = vunpack.c.l.b16 %v1582
    %v1871 = vunpack.c.l.b16 %v1583
    %v1872 = vunpack.c.l.b16 %v1584
    %v1873 = vunpack.c.l.b16 %v1585
    %v1874 = vunpack.c.l.b16 %v1586
    %v1875 = vunpack.c.l.b16 %v1587
    %v1876 = vunpack.c.l.b16 %v1588
    %v1877 = vunpack.c.l.b16 %v1589
    %v1878 = vunpack.c.l.b16 %v1590
    %v1879 = vunpack.c.l.b16 %v1591
    %v1880 = vunpack.c.l.b16 %v1592
    %v1881 = vunpack.c.l.b16 %v1593
    %v1882 = vunpack.c.l.b16 %v1594
    %v1883 = vunpack.c.l.b16 %v1595
    %v1884 = vunpack.c.l.b16 %v1596
    %v1885 = vunpack.c.l.b16 %v1597
    %v1886 = vunpack.c.l.b16 %v1598
    %v1887 = vunpack.c.l.b16 %v1599
    %v1888 = vunpack.c.l.b16 %v1600
    %v1889 = vpack.c.b16 %v1746, %v1745
    %v1890 = vpack.c.b16 %v1748, %v1747
    %v1891 = vpack.c.b16 %v1750, %v1749
    %v1892 = vpack.c.b16 %v1752, %v1751
    %v1893 = vpack.c.b16 %v1754, %v1753
    %v1894 = vpack.c.b16 %v1756, %v1755
    %v1895 = vpack.c.b16 %v1758, %v1757
    %v1896 = vpack.c.b16 %v1760, %v1759
    %v1897 = vpack.c.b16 %v1762, %v1761
    %v1898 = vpack.c.b16 %v1764, %v1763
    %v1899 = vpack.c.b16 %v1766, %v1765
    %v1900 = vpack.c.b16 %v1768, %v1767
    %v1901 = vpack.c.b16 %v1770, %v1769
    %v1902 = vpack.c.b16 %v1772, %v1771
    %v1903 = vpack.c.b16 %v1774, %v1773
    %v1904 = vpack.c.b16 %v1776, %v1775
    %v1905 = vpack.c.b16 %v1778, %v1777
    %v1906 = vpack.c.b16 %v1780, %v1779
    %v1907 = vpack.c.b16 %v1782, %v1781
    %v1908 = vpack.c.b16 %v1784, %v1783
    %v1909 = vpack.c.b16 %v1786, %v1785
    %v1910 = vpack.c.b16 %v1788, %v1787
    %v1911 = vpack.c.b16 %v1790, %v1789
    %v1912 = vpack.c.b16 %v1792, %v1791
    %v1913 = vpack.c.b16 %v1794, %v1793
    %v1914 = vpack.c.b16 %v1796, %v1795
    %v1915 = vpack.c.b16 %v1798, %v1797
    %v1916 = vpack.c.b16 %v1800, %v1799
    %v1917 = vpack.c.b16 %v1802, %v1801
    %v1918 = vpack.c.b16 %v1804, %v1803
    %v1919 = vpack.c.b16 %v1806, %v1805
    %v1920 = vpack.c.b16 %v1808, %v1807
    %v1921 = vpack.c.b16 %v1810, %v1809
    %v1922 = vpack.c.b16 %v1812, %v1811
    %v1923 = vpack.c.b16 %v1814, %v1813
    %v1924 = vpack.c.b16 %v1816, %v1815
    %v1925 = vpack.c.b16 %v1818, %v1817
    %v1926 = vpack.c.b16 %v1820, %v1819
    %v1927 = vpack.c.b16 %v1822, %v1821
    %v1928 = vpack.c.b16 %v1824, %v1823
    %v1929 = vpack.c.b16 %v1826, %v1825
    %v1930 = vpack.c.b16 %v1828, %v1827
    %v1931 = vpack.c.b16 %v1830, %v1829
    %v1932 = vpack.c.b16 %v1832, %v1831
    %v1933 = vpack.c.b16 %v1834, %v1833
    %v1934 = vpack.c.b16 %v1836, %v1835
    %v1935 = vpack.c.b16 %v1838, %v1837
    %v1936 = vpack.c.b16 %v1840, %v1839
    %v1937 = vpack.c.b16 %v1842, %v1841
    %v1938 = vpack.c.b16 %v1844, %v1843
    %v1939 = vpack.c.b16 %v1846, %v1845
    %v1940 = vpack.c.b16 %v1848, %v1847
    %v1941 = vpack.c.b16 %v1850, %v1849
    %v1942 = vpack.c.b16 %v1852, %v1851
    %v1943 = vpack.c.b16 %v1854, %v1853
    %v1944 = vpack.c.b16 %v1856, %v1855
    %v1945 = vpack.c.b16 %v1858, %v1857
    %v1946 = vpack.c.b16 %v1860, %v1859
    %v1947 = vpack.c.b16 %v1862, %v1861
    %v1948 = vpack.c.b16 %v1864, %v1863
    %v1949 = vpack.c.b16 %v1866, %v1865
    %v1950 = vpack.c.b16 %v1868, %v1867
    %v1951 = vpack.c.b16 %v1870, %v1869
    %v1952 = vpack.c.b16 %v1872, %v1871
    %v1953 = vpack.c.b16 %v1874, %v1873
    %v1954 = vpack.c.b16 %v1876, %v1875
    %v1955 = vpack.c.b16 %v1878, %v1877
    %v1956 = vpack.c.b16 %v1880, %v1879
    %v1957 = vpack.c.b16 %v1882, %v1881
    %v1958 = vpack.c.b16 %v1884, %v1883
    %v1959 = vpack.c.b16 %v1886, %v1885
    %v1960 = vpack.c.b16 %v1888, %v1887
    %2033 = vmatprep.subr.bf16.mxu0 0
    %2034 = vmatpush1.bf16.msra.mxu0 %v1896
    %2035 = vmatprep.subr.bf16.mxu0 0
    %2036 = vmatpush1.bf16.msra.mxu0 %v1895
    %2037 = vmatprep.subr.bf16.mxu0 0
    %2038 = vmatpush1.bf16.msra.mxu0 %v1894
    %2039 = vmatprep.subr.bf16.mxu0 0
    %2040 = vmatpush1.bf16.msra.mxu0 %v1893
    %2041 = vmatprep.subr.bf16.mxu0 0
    %2042 = vmatpush1.bf16.msra.mxu0 %v1892
    %2043 = vmatprep.subr.bf16.mxu0 0
    %2044 = vmatpush1.bf16.msra.mxu0 %v1891
    %2045 = vmatprep.subr.bf16.mxu0 0
    %2046 = vmatpush1.bf16.msra.mxu0 %v1890
    %2047 = vmatprep.subr.bf16.mxu0 0
    %2048 = vmatpush1.bf16.msra.mxu0 %v1889
    %2049 = vmatprep.subr.bf16.mxu0 0
    %2050 = vmatpush2.bf16.msra.mxu0 %v1904
    %2051 = vmatprep.subr.bf16.mxu0 0
    %2052 = vmatpush2.bf16.msra.mxu0 %v1903
    %2053 = vmatprep.subr.bf16.mxu0 0
    %2054 = vmatpush2.bf16.msra.mxu0 %v1902
    %2055 = vmatprep.subr.bf16.mxu0 0
    %2056 = vmatpush2.bf16.msra.mxu0 %v1901
    %2057 = vmatprep.subr.bf16.mxu0 0
    %2058 = vmatpush2.bf16.msra.mxu0 %v1900
    %2059 = vmatprep.subr.bf16.mxu0 0
    %2060 = vmatpush2.bf16.msra.mxu0 %v1899
    %2061 = vmatprep.subr.bf16.mxu0 0
    %2062 = vmatpush2.bf16.msra.mxu0 %v1898
    %2063 = vmatprep.subr.bf16.mxu0 0
    %2064 = vmatpush2.bf16.msra.mxu0 %v1897
    %2065 = vmatprep.mubr.bf16.mxu0 %v1386
    %2066 = vmatmul.mubr.bf16.gmra.mxu0 %v1385
    %v2067 = vpop.f32.mrf.mxu0
    %v2068 = vadd.f32 0.0, %v2067
    %v2069 = vpop.f32.mrf.mxu0
    %v2070 = vpop.f32.mrf.mxu0
    %v2071 = vadd.f32 0.0, %v2070
    %v2072 = vpop.f32.mrf.mxu0
    %2073 = vmatprep.mubr.bf16.mxu0 %v1395
    %2074 = vmatmul.mubr.bf16.gmra.mxu0 %v1394
    %v2075 = vpop.f32.mrf.mxu0
    %v2076 = vadd.f32 0.0, %v2075
    %v2077 = vpop.f32.mrf.mxu0
    %v2078 = vpop.f32.mrf.mxu0
    %v2079 = vadd.f32 0.0, %v2078
    %v2080 = vpop.f32.mrf.mxu0
    %2081 = vmatprep.mubr.bf16.mxu0 %v1404
    %2082 = vmatmul.mubr.bf16.gmra.mxu0 %v1403
    %v2083 = vpop.f32.mrf.mxu0
    %v2084 = vadd.f32 0.0, %v2083
    %v2085 = vpop.f32.mrf.mxu0
    %v2086 = vpop.f32.mrf.mxu0
    %v2087 = vadd.f32 0.0, %v2086
    %v2088 = vpop.f32.mrf.mxu0
    %2089 = vmatprep.mubr.bf16.mxu0 %v1413
    %2090 = vmatmul.mubr.bf16.gmra.mxu0 %v1412
    %v2091 = vpop.f32.mrf.mxu0
    %v2092 = vadd.f32 0.0, %v2091
    %v2093 = vpop.f32.mrf.mxu0
    %v2094 = vpop.f32.mrf.mxu0
    %v2095 = vadd.f32 0.0, %v2094
    %v2096 = vpop.f32.mrf.mxu0
    %2097 = vmatprep.mubr.bf16.mxu0 %v1422
    %2098 = vmatmul.mubr.bf16.gmra.mxu0 %v1421
    %v2099 = vpop.f32.mrf.mxu0
    %v2100 = vadd.f32 0.0, %v2099
    %v2101 = vpop.f32.mrf.mxu0
    %v2102 = vpop.f32.mrf.mxu0
    %v2103 = vadd.f32 0.0, %v2102
    %v2104 = vpop.f32.mrf.mxu0
    %2105 = vmatprep.mubr.bf16.mxu0 %v1431
    %2106 = vmatmul.mubr.bf16.gmra.mxu0 %v1430
    %v2107 = vpop.f32.mrf.mxu0
    %v2108 = vadd.f32 0.0, %v2107
    %v2109 = vpop.f32.mrf.mxu0
    %v2110 = vpop.f32.mrf.mxu0
    %v2111 = vadd.f32 0.0, %v2110
    %v2112 = vpop.f32.mrf.mxu0
    %2113 = vmatprep.mubr.bf16.mxu0 %v1440
    %2114 = vmatmul.mubr.bf16.gmra.mxu0 %v1439
    %v2115 = vpop.f32.mrf.mxu0
    %v2116 = vadd.f32 0.0, %v2115
    %v2117 = vpop.f32.mrf.mxu0
    %v2118 = vpop.f32.mrf.mxu0
    %v2119 = vadd.f32 0.0, %v2118
    %v2120 = vpop.f32.mrf.mxu0
    %2121 = vmatprep.mubr.bf16.mxu0 %v1449
    %2122 = vmatmul.mubr.bf16.gmra.mxu0 %v1448
    %v2123 = vpop.f32.mrf.mxu0
    %v2124 = vadd.f32 0.0, %v2123
    %v2125 = vpop.f32.mrf.mxu0
    %v2126 = vpop.f32.mrf.mxu0
    %v2127 = vadd.f32 0.0, %v2126
    %v2128 = vpop.f32.mrf.mxu0
    %2129 = vdwg.mxu0
    %2130 = vmatprep.subr.bf16.mxu0 0
    %2131 = vmatpush1.bf16.msra.mxu0 %v1912
    %2132 = vmatprep.subr.bf16.mxu0 0
    %2133 = vmatpush1.bf16.msra.mxu0 %v1911
    %2134 = vmatprep.subr.bf16.mxu0 0
    %2135 = vmatpush1.bf16.msra.mxu0 %v1910
    %2136 = vmatprep.subr.bf16.mxu0 0
    %2137 = vmatpush1.bf16.msra.mxu0 %v1909
    %2138 = vmatprep.subr.bf16.mxu0 0
    %2139 = vmatpush1.bf16.msra.mxu0 %v1908
    %2140 = vmatprep.subr.bf16.mxu0 0
    %2141 = vmatpush1.bf16.msra.mxu0 %v1907
    %2142 = vmatprep.subr.bf16.mxu0 0
    %2143 = vmatpush1.bf16.msra.mxu0 %v1906
    %2144 = vmatprep.subr.bf16.mxu0 0
    %2145 = vmatpush1.bf16.msra.mxu0 %v1905
    %2146 = vmatprep.subr.bf16.mxu0 0
    %2147 = vmatpush2.bf16.msra.mxu0 %v1920
    %2148 = vmatprep.subr.bf16.mxu0 0
    %2149 = vmatpush2.bf16.msra.mxu0 %v1919
    %2150 = vmatprep.subr.bf16.mxu0 0
    %2151 = vmatpush2.bf16.msra.mxu0 %v1918
    %2152 = vmatprep.subr.bf16.mxu0 0
    %2153 = vmatpush2.bf16.msra.mxu0 %v1917
    %2154 = vmatprep.subr.bf16.mxu0 0
    %2155 = vmatpush2.bf16.msra.mxu0 %v1916
    %2156 = vmatprep.subr.bf16.mxu0 0
    %2157 = vmatpush2.bf16.msra.mxu0 %v1915
    %2158 = vmatprep.subr.bf16.mxu0 0
    %2159 = vmatpush2.bf16.msra.mxu0 %v1914
    %2160 = vmatprep.subr.bf16.mxu0 0
    %2161 = vmatpush2.bf16.msra.mxu0 %v1913
    %2162 = vmatprep.mubr.bf16.mxu0 %v1388
    %2163 = vmatmul.mubr.bf16.gmra.mxu0 %v1387
    %v2164 = vpop.f32.mrf.mxu0
    %v2165 = vadd.f32 %v2068, %v2164
    %v2166 = vpop.f32.mrf.mxu0
    %v2167 = vpop.f32.mrf.mxu0
    %v2168 = vadd.f32 %v2071, %v2167
    %v2169 = vpop.f32.mrf.mxu0
    %2170 = vmatprep.mubr.bf16.mxu0 %v1397
    %2171 = vmatmul.mubr.bf16.gmra.mxu0 %v1396
    %v2172 = vpop.f32.mrf.mxu0
    %v2173 = vadd.f32 %v2076, %v2172
    %v2174 = vpop.f32.mrf.mxu0
    %v2175 = vpop.f32.mrf.mxu0
    %v2176 = vadd.f32 %v2079, %v2175
    %v2177 = vpop.f32.mrf.mxu0
    %2178 = vmatprep.mubr.bf16.mxu0 %v1406
    %2179 = vmatmul.mubr.bf16.gmra.mxu0 %v1405
    %v2180 = vpop.f32.mrf.mxu0
    %v2181 = vadd.f32 %v2084, %v2180
    %v2182 = vpop.f32.mrf.mxu0
    %v2183 = vpop.f32.mrf.mxu0
    %v2184 = vadd.f32 %v2087, %v2183
    %v2185 = vpop.f32.mrf.mxu0
    %2186 = vmatprep.mubr.bf16.mxu0 %v1415
    %2187 = vmatmul.mubr.bf16.gmra.mxu0 %v1414
    %v2188 = vpop.f32.mrf.mxu0
    %v2189 = vadd.f32 %v2092, %v2188
    %v2190 = vpop.f32.mrf.mxu0
    %v2191 = vpop.f32.mrf.mxu0
    %v2192 = vadd.f32 %v2095, %v2191
    %v2193 = vpop.f32.mrf.mxu0
    %2194 = vmatprep.mubr.bf16.mxu0 %v1424
    %2195 = vmatmul.mubr.bf16.gmra.mxu0 %v1423
    %v2196 = vpop.f32.mrf.mxu0
    %v2197 = vadd.f32 %v2100, %v2196
    %v2198 = vpop.f32.mrf.mxu0
    %v2199 = vpop.f32.mrf.mxu0
    %v2200 = vadd.f32 %v2103, %v2199
    %v2201 = vpop.f32.mrf.mxu0
    %2202 = vmatprep.mubr.bf16.mxu0 %v1433
    %2203 = vmatmul.mubr.bf16.gmra.mxu0 %v1432
    %v2204 = vpop.f32.mrf.mxu0
    %v2205 = vadd.f32 %v2108, %v2204
    %v2206 = vpop.f32.mrf.mxu0
    %v2207 = vpop.f32.mrf.mxu0
    %v2208 = vadd.f32 %v2111, %v2207
    %v2209 = vpop.f32.mrf.mxu0
    %2210 = vmatprep.mubr.bf16.mxu0 %v1442
    %2211 = vmatmul.mubr.bf16.gmra.mxu0 %v1441
    %v2212 = vpop.f32.mrf.mxu0
    %v2213 = vadd.f32 %v2116, %v2212
    %v2214 = vpop.f32.mrf.mxu0
    %v2215 = vpop.f32.mrf.mxu0
    %v2216 = vadd.f32 %v2119, %v2215
    %v2217 = vpop.f32.mrf.mxu0
    %2218 = vmatprep.mubr.bf16.mxu0 %v1451
    %2219 = vmatmul.mubr.bf16.gmra.mxu0 %v1450
    %v2220 = vpop.f32.mrf.mxu0
    %v2221 = vadd.f32 %v2124, %v2220
    %v2222 = vpop.f32.mrf.mxu0
    %v2223 = vpop.f32.mrf.mxu0
    %v2224 = vadd.f32 %v2127, %v2223
    %v2225 = vpop.f32.mrf.mxu0
    %2226 = vdwg.mxu0
    %2227 = vmatprep.subr.bf16.mxu0 0
    %2228 = vmatpush1.bf16.msra.mxu0 %v1928
    %2229 = vmatprep.subr.bf16.mxu0 0
    %2230 = vmatpush1.bf16.msra.mxu0 %v1927
    %2231 = vmatprep.subr.bf16.mxu0 0
    %2232 = vmatpush1.bf16.msra.mxu0 %v1926
    %2233 = vmatprep.subr.bf16.mxu0 0
    %2234 = vmatpush1.bf16.msra.mxu0 %v1925
    %2235 = vmatprep.subr.bf16.mxu0 0
    %2236 = vmatpush1.bf16.msra.mxu0 %v1924
    %2237 = vmatprep.subr.bf16.mxu0 0
    %2238 = vmatpush1.bf16.msra.mxu0 %v1923
    %2239 = vmatprep.subr.bf16.mxu0 0
    %2240 = vmatpush1.bf16.msra.mxu0 %v1922
    %2241 = vmatprep.subr.bf16.mxu0 0
    %2242 = vmatpush1.bf16.msra.mxu0 %v1921
    %2243 = vmatprep.subr.bf16.mxu0 0
    %2244 = vmatpush2.bf16.msra.mxu0 %v1936
    %2245 = vmatprep.subr.bf16.mxu0 0
    %2246 = vmatpush2.bf16.msra.mxu0 %v1935
    %2247 = vmatprep.subr.bf16.mxu0 0
    %2248 = vmatpush2.bf16.msra.mxu0 %v1934
    %2249 = vmatprep.subr.bf16.mxu0 0
    %2250 = vmatpush2.bf16.msra.mxu0 %v1933
    %2251 = vmatprep.subr.bf16.mxu0 0
    %2252 = vmatpush2.bf16.msra.mxu0 %v1932
    %2253 = vmatprep.subr.bf16.mxu0 0
    %2254 = vmatpush2.bf16.msra.mxu0 %v1931
    %2255 = vmatprep.subr.bf16.mxu0 0
    %2256 = vmatpush2.bf16.msra.mxu0 %v1930
    %2257 = vmatprep.subr.bf16.mxu0 0
    %2258 = vmatpush2.bf16.msra.mxu0 %v1929
    %2259 = vmatprep.mubr.bf16.mxu0 %v1390
    %2260 = vmatmul.mubr.bf16.gmra.mxu0 %v1389
    %v2261 = vpop.f32.mrf.mxu0
    %v2262 = vadd.f32 %v2165, %v2261
    %v2263 = vpop.f32.mrf.mxu0
    %v2264 = vpop.f32.mrf.mxu0
    %v2265 = vadd.f32 %v2168, %v2264
    %v2266 = vpop.f32.mrf.mxu0
    %2267 = vmatprep.mubr.bf16.mxu0 %v1399
    %2268 = vmatmul.mubr.bf16.gmra.mxu0 %v1398
    %v2269 = vpop.f32.mrf.mxu0
    %v2270 = vadd.f32 %v2173, %v2269
    %v2271 = vpop.f32.mrf.mxu0
    %v2272 = vpop.f32.mrf.mxu0
    %v2273 = vadd.f32 %v2176, %v2272
    %v2274 = vpop.f32.mrf.mxu0
    %2275 = vmatprep.mubr.bf16.mxu0 %v1408
    %2276 = vmatmul.mubr.bf16.gmra.mxu0 %v1407
    %v2277 = vpop.f32.mrf.mxu0
    %v2278 = vadd.f32 %v2181, %v2277
    %v2279 = vpop.f32.mrf.mxu0
    %v2280 = vpop.f32.mrf.mxu0
    %v2281 = vadd.f32 %v2184, %v2280
    %v2282 = vpop.f32.mrf.mxu0
    %2283 = vmatprep.mubr.bf16.mxu0 %v1417
    %2284 = vmatmul.mubr.bf16.gmra.mxu0 %v1416
    %v2285 = vpop.f32.mrf.mxu0
    %v2286 = vadd.f32 %v2189, %v2285
    %v2287 = vpop.f32.mrf.mxu0
    %v2288 = vpop.f32.mrf.mxu0
    %v2289 = vadd.f32 %v2192, %v2288
    %v2290 = vpop.f32.mrf.mxu0
    %2291 = vmatprep.mubr.bf16.mxu0 %v1426
    %2292 = vmatmul.mubr.bf16.gmra.mxu0 %v1425
    %v2293 = vpop.f32.mrf.mxu0
    %v2294 = vadd.f32 %v2197, %v2293
    %v2295 = vpop.f32.mrf.mxu0
    %v2296 = vpop.f32.mrf.mxu0
    %v2297 = vadd.f32 %v2200, %v2296
    %v2298 = vpop.f32.mrf.mxu0
    %2299 = vmatprep.mubr.bf16.mxu0 %v1435
    %2300 = vmatmul.mubr.bf16.gmra.mxu0 %v1434
    %v2301 = vpop.f32.mrf.mxu0
    %v2302 = vadd.f32 %v2205, %v2301
    %v2303 = vpop.f32.mrf.mxu0
    %v2304 = vpop.f32.mrf.mxu0
    %v2305 = vadd.f32 %v2208, %v2304
    %v2306 = vpop.f32.mrf.mxu0
    %2307 = vmatprep.mubr.bf16.mxu0 %v1444
    %2308 = vmatmul.mubr.bf16.gmra.mxu0 %v1443
    %v2309 = vpop.f32.mrf.mxu0
    %v2310 = vadd.f32 %v2213, %v2309
    %v2311 = vpop.f32.mrf.mxu0
    %v2312 = vpop.f32.mrf.mxu0
    %v2313 = vadd.f32 %v2216, %v2312
    %v2314 = vpop.f32.mrf.mxu0
    %2315 = vmatprep.mubr.bf16.mxu0 %v1453
    %2316 = vmatmul.mubr.bf16.gmra.mxu0 %v1452
    %v2317 = vpop.f32.mrf.mxu0
    %v2318 = vadd.f32 %v2221, %v2317
    %v2319 = vpop.f32.mrf.mxu0
    %v2320 = vpop.f32.mrf.mxu0
    %v2321 = vadd.f32 %v2224, %v2320
    %v2322 = vpop.f32.mrf.mxu0
    %2323 = vdwg.mxu0
    %2324 = vmatprep.subr.bf16.mxu0 0
    %2325 = vmatpush1.bf16.msra.mxu0 %v1944
    %2326 = vmatprep.subr.bf16.mxu0 0
    %2327 = vmatpush1.bf16.msra.mxu0 %v1943
    %2328 = vmatprep.subr.bf16.mxu0 0
    %2329 = vmatpush1.bf16.msra.mxu0 %v1942
    %2330 = vmatprep.subr.bf16.mxu0 0
    %2331 = vmatpush1.bf16.msra.mxu0 %v1941
    %2332 = vmatprep.subr.bf16.mxu0 0
    %2333 = vmatpush1.bf16.msra.mxu0 %v1940
    %2334 = vmatprep.subr.bf16.mxu0 0
    %2335 = vmatpush1.bf16.msra.mxu0 %v1939
    %2336 = vmatprep.subr.bf16.mxu0 0
    %2337 = vmatpush1.bf16.msra.mxu0 %v1938
    %2338 = vmatprep.subr.bf16.mxu0 0
    %2339 = vmatpush1.bf16.msra.mxu0 %v1937
    %2340 = vmatprep.subr.bf16.mxu0 0
    %2341 = vmatpush2.bf16.msra.mxu0 %v1952
    %2342 = vmatprep.subr.bf16.mxu0 0
    %2343 = vmatpush2.bf16.msra.mxu0 %v1951
    %2344 = vmatprep.subr.bf16.mxu0 0
    %2345 = vmatpush2.bf16.msra.mxu0 %v1950
    %2346 = vmatprep.subr.bf16.mxu0 0
    %2347 = vmatpush2.bf16.msra.mxu0 %v1949
    %2348 = vmatprep.subr.bf16.mxu0 0
    %2349 = vmatpush2.bf16.msra.mxu0 %v1948
    %2350 = vmatprep.subr.bf16.mxu0 0
    %2351 = vmatpush2.bf16.msra.mxu0 %v1947
    %2352 = vmatprep.subr.bf16.mxu0 0
    %2353 = vmatpush2.bf16.msra.mxu0 %v1946
    %2354 = vmatprep.subr.bf16.mxu0 0
    %2355 = vmatpush2.bf16.msra.mxu0 %v1945
    %2356 = vmatprep.mubr.bf16.mxu0 %v1392
    %2357 = vmatmul.mubr.bf16.gmra.mxu0 %v1391
    %v2358 = vpop.f32.mrf.mxu0
    %v2359 = vadd.f32 %v2262, %v2358
    %v2360 = vpop.f32.mrf.mxu0
    %v2361 = vpop.f32.mrf.mxu0
    %v2362 = vadd.f32 %v2265, %v2361
    %v2363 = vpop.f32.mrf.mxu0
    %2364 = vmatprep.mubr.bf16.mxu0 %v1401
    %2365 = vmatmul.mubr.bf16.gmra.mxu0 %v1400
    %v2366 = vpop.f32.mrf.mxu0
    %v2367 = vadd.f32 %v2270, %v2366
    %v2368 = vpop.f32.mrf.mxu0
    %v2369 = vpop.f32.mrf.mxu0
    %v2370 = vadd.f32 %v2273, %v2369
    %v2371 = vpop.f32.mrf.mxu0
    %2372 = vmatprep.mubr.bf16.mxu0 %v1410
    %2373 = vmatmul.mubr.bf16.gmra.mxu0 %v1409
    %v2374 = vpop.f32.mrf.mxu0
    %v2375 = vadd.f32 %v2278, %v2374
    %v2376 = vpop.f32.mrf.mxu0
    %v2377 = vpop.f32.mrf.mxu0
    %v2378 = vadd.f32 %v2281, %v2377
    %v2379 = vpop.f32.mrf.mxu0
    %2380 = vmatprep.mubr.bf16.mxu0 %v1419
    %2381 = vmatmul.mubr.bf16.gmra.mxu0 %v1418
    %v2382 = vpop.f32.mrf.mxu0
    %v2383 = vadd.f32 %v2286, %v2382
    %v2384 = vpop.f32.mrf.mxu0
    %v2385 = vpop.f32.mrf.mxu0
    %v2386 = vadd.f32 %v2289, %v2385
    %v2387 = vpop.f32.mrf.mxu0
    %2388 = vmatprep.mubr.bf16.mxu0 %v1428
    %2389 = vmatmul.mubr.bf16.gmra.mxu0 %v1427
    %v2390 = vpop.f32.mrf.mxu0
    %v2391 = vadd.f32 %v2294, %v2390
    %v2392 = vpop.f32.mrf.mxu0
    %v2393 = vpop.f32.mrf.mxu0
    %v2394 = vadd.f32 %v2297, %v2393
    %v2395 = vpop.f32.mrf.mxu0
    %2396 = vmatprep.mubr.bf16.mxu0 %v1437
    %2397 = vmatmul.mubr.bf16.gmra.mxu0 %v1436
    %v2398 = vpop.f32.mrf.mxu0
    %v2399 = vadd.f32 %v2302, %v2398
    %v2400 = vpop.f32.mrf.mxu0
    %v2401 = vpop.f32.mrf.mxu0
    %v2402 = vadd.f32 %v2305, %v2401
    %v2403 = vpop.f32.mrf.mxu0
    %2404 = vmatprep.mubr.bf16.mxu0 %v1446
    %2405 = vmatmul.mubr.bf16.gmra.mxu0 %v1445
    %v2406 = vpop.f32.mrf.mxu0
    %v2407 = vadd.f32 %v2310, %v2406
    %v2408 = vpop.f32.mrf.mxu0
    %v2409 = vpop.f32.mrf.mxu0
    %v2410 = vadd.f32 %v2313, %v2409
    %v2411 = vpop.f32.mrf.mxu0
    %2412 = vmatprep.mubr.bf16.mxu0 %v1455
    %2413 = vmatmul.mubr.bf16.gmra.mxu0 %v1454
    %v2414 = vpop.f32.mrf.mxu0
    %v2415 = vadd.f32 %v2318, %v2414
    %v2416 = vpop.f32.mrf.mxu0
    %v2417 = vpop.f32.mrf.mxu0
    %v2418 = vadd.f32 %v2321, %v2417
    %v2419 = vpop.f32.mrf.mxu0
    %2420 = vdwg.mxu0
    %2421 = vmatprep.subr.bf16.mxu0 0
    %2422 = vmatpush1.bf16.msra.mxu0 %v1960
    %2423 = vmatprep.subr.bf16.mxu0 0
    %2424 = vmatpush1.bf16.msra.mxu0 %v1959
    %2425 = vmatprep.subr.bf16.mxu0 0
    %2426 = vmatpush1.bf16.msra.mxu0 %v1958
    %2427 = vmatprep.subr.bf16.mxu0 0
    %2428 = vmatpush1.bf16.msra.mxu0 %v1957
    %2429 = vmatprep.subr.bf16.mxu0 0
    %2430 = vmatpush1.bf16.msra.mxu0 %v1956
    %2431 = vmatprep.subr.bf16.mxu0 0
    %2432 = vmatpush1.bf16.msra.mxu0 %v1955
    %2433 = vmatprep.subr.bf16.mxu0 0
    %2434 = vmatpush1.bf16.msra.mxu0 %v1954
    %2435 = vmatprep.subr.bf16.mxu0 0
    %2436 = vmatpush1.bf16.msra.mxu0 %v1953
    %2437 = vmatprep.subr.bf16.mxu0 0
    %2438 = vmatpush2.bf16.msra.mxu0 0
    %2439 = vmatprep.subr.bf16.mxu0 0
    %2440 = vmatpush2.bf16.msra.mxu0 0
    %2441 = vmatprep.subr.bf16.mxu0 0
    %2442 = vmatpush2.bf16.msra.mxu0 0
    %2443 = vmatprep.subr.bf16.mxu0 0
    %2444 = vmatpush2.bf16.msra.mxu0 0
    %2445 = vmatprep.subr.bf16.mxu0 0
    %2446 = vmatpush2.bf16.msra.mxu0 0
    %2447 = vmatprep.subr.bf16.mxu0 0
    %2448 = vmatpush2.bf16.msra.mxu0 0
    %2449 = vmatprep.subr.bf16.mxu0 0
    %2450 = vmatpush2.bf16.msra.mxu0 0
    %2451 = vmatprep.subr.bf16.mxu0 0
    %2452 = vmatpush2.bf16.msra.mxu0 0
    %2453 = vmatprep.mubr.bf16.mxu0 0
    %2454 = vmatmul.mubr.bf16.gmra.mxu0 %v1393
    %v2455 = vpop.f32.mrf.mxu0
    %v2456 = vadd.f32 %v2359, %v2455
    %v2457 = vpop.f32.mrf.mxu0
    %v2458 = vpop.f32.mrf.mxu0
    %v2459 = vadd.f32 %v2362, %v2458
    %v2460 = vpop.f32.mrf.mxu0
    %2461 = vmatprep.mubr.bf16.mxu0 0
    %2462 = vmatmul.mubr.bf16.gmra.mxu0 %v1402
    %v2463 = vpop.f32.mrf.mxu0
    %v2464 = vadd.f32 %v2367, %v2463
    %v2465 = vpop.f32.mrf.mxu0
    %v2466 = vpop.f32.mrf.mxu0
    %v2467 = vadd.f32 %v2370, %v2466
    %v2468 = vpop.f32.mrf.mxu0
    %2469 = vmatprep.mubr.bf16.mxu0 0
    %2470 = vmatmul.mubr.bf16.gmra.mxu0 %v1411
    %v2471 = vpop.f32.mrf.mxu0
    %v2472 = vadd.f32 %v2375, %v2471
    %v2473 = vpop.f32.mrf.mxu0
    %v2474 = vpop.f32.mrf.mxu0
    %v2475 = vadd.f32 %v2378, %v2474
    %v2476 = vpop.f32.mrf.mxu0
    %2477 = vmatprep.mubr.bf16.mxu0 0
    %2478 = vmatmul.mubr.bf16.gmra.mxu0 %v1420
    %v2479 = vpop.f32.mrf.mxu0
    %v2480 = vadd.f32 %v2383, %v2479
    %v2481 = vpop.f32.mrf.mxu0
    %v2482 = vpop.f32.mrf.mxu0
    %v2483 = vadd.f32 %v2386, %v2482
    %v2484 = vpop.f32.mrf.mxu0
    %2485 = vmatprep.mubr.bf16.mxu0 0
    %2486 = vmatmul.mubr.bf16.gmra.mxu0 %v1429
    %v2487 = vpop.f32.mrf.mxu0
    %v2488 = vadd.f32 %v2391, %v2487
    %v2489 = vpop.f32.mrf.mxu0
    %v2490 = vpop.f32.mrf.mxu0
    %v2491 = vadd.f32 %v2394, %v2490
    %v2492 = vpop.f32.mrf.mxu0
    %2493 = vmatprep.mubr.bf16.mxu0 0
    %2494 = vmatmul.mubr.bf16.gmra.mxu0 %v1438
    %v2495 = vpop.f32.mrf.mxu0
    %v2496 = vadd.f32 %v2399, %v2495
    %v2497 = vpop.f32.mrf.mxu0
    %v2498 = vpop.f32.mrf.mxu0
    %v2499 = vadd.f32 %v2402, %v2498
    %v2500 = vpop.f32.mrf.mxu0
    %2501 = vmatprep.mubr.bf16.mxu0 0
    %2502 = vmatmul.mubr.bf16.gmra.mxu0 %v1447
    %v2503 = vpop.f32.mrf.mxu0
    %v2504 = vadd.f32 %v2407, %v2503
    %v2505 = vpop.f32.mrf.mxu0
    %v2506 = vpop.f32.mrf.mxu0
    %v2507 = vadd.f32 %v2410, %v2506
    %v2508 = vpop.f32.mrf.mxu0
    %2509 = vmatprep.mubr.bf16.mxu0 0
    %2510 = vmatmul.mubr.bf16.gmra.mxu0 %v1456
    %v2511 = vpop.f32.mrf.mxu0
    %v2512 = vadd.f32 %v2415, %v2511
    %v2513 = vpop.f32.mrf.mxu0
    %v2514 = vpop.f32.mrf.mxu0
    %v2515 = vadd.f32 %v2418, %v2514
    %v2516 = vpop.f32.mrf.mxu0
    %2517 = vdwg.mxu0
    %v2518 = vld [vmem:[%s8] sm:$0x1]
    %v2519 = vld [vmem:[%s9] sm:$0x1]
    %v2520 = vadd.f32 %v2456, %v2459
    %v2521 = vadd.f32 %v2520, %v2464
    %v2522 = vadd.f32 %v2521, %v2467
    %v2523 = vadd.f32 %v2522, %v2472
    %v2524 = vadd.f32 %v2523, %v2475
    %v2525 = vadd.f32 %v2524, %v2480
    %v2526 = vadd.f32 %v2525, %v2483
    %v2527 = vadd.f32 %v2526, %v2488
    %v2528 = vadd.f32 %v2527, %v2491
    %v2529 = vadd.f32 %v2528, %v2496
    %v2530 = vadd.f32 %v2529, %v2499
    %v2531 = vadd.f32 %v2530, %v2504
    %v2532 = vadd.f32 %v2531, %v2507
    %v2533 = vadd.f32 %v2532, %v2512
    %v2534 = vadd.f32 %v2533, %v2515
    %v2535 = vrot.slane %v2534, 4
    %v2536 = vadd.f32 %v2534, %v2535
    %v2537 = vrot.slane %v2536, 2
    %v2538 = vadd.f32 %v2536, %v2537
    %v2539 = vrot.slane %v2538, 1
    %v2540 = vadd.f32 %v2538, %v2539
    %v2541 = vmul.f32 %v2540, 0.0078125
    %v2542 = vmul.f32 %v2456, %v2456
    %v2543 = vmul.f32 %v2459, %v2459
    %v2544 = vmul.f32 %v2464, %v2464
    %v2545 = vmul.f32 %v2467, %v2467
    %v2546 = vmul.f32 %v2472, %v2472
    %v2547 = vmul.f32 %v2475, %v2475
    %v2548 = vmul.f32 %v2480, %v2480
    %v2549 = vmul.f32 %v2483, %v2483
    %v2550 = vmul.f32 %v2488, %v2488
    %v2551 = vmul.f32 %v2491, %v2491
    %v2552 = vmul.f32 %v2496, %v2496
    %v2553 = vmul.f32 %v2499, %v2499
    %v2554 = vmul.f32 %v2504, %v2504
    %v2555 = vmul.f32 %v2507, %v2507
    %v2556 = vmul.f32 %v2512, %v2512
    %v2557 = vmul.f32 %v2515, %v2515
    %v2558 = vadd.f32 %v2542, %v2543
    %v2559 = vadd.f32 %v2558, %v2544
    %v2560 = vadd.f32 %v2559, %v2545
    %v2561 = vadd.f32 %v2560, %v2546
    %v2562 = vadd.f32 %v2561, %v2547
    %v2563 = vadd.f32 %v2562, %v2548
    %v2564 = vadd.f32 %v2563, %v2549
    %v2565 = vadd.f32 %v2564, %v2550
    %v2566 = vadd.f32 %v2565, %v2551
    %v2567 = vadd.f32 %v2566, %v2552
    %v2568 = vadd.f32 %v2567, %v2553
    %v2569 = vadd.f32 %v2568, %v2554
    %v2570 = vadd.f32 %v2569, %v2555
    %v2571 = vadd.f32 %v2570, %v2556
    %v2572 = vadd.f32 %v2571, %v2557
    %v2573 = vrot.slane %v2572, 4
    %v2574 = vadd.f32 %v2572, %v2573
    %v2575 = vrot.slane %v2574, 2
    %v2576 = vadd.f32 %v2574, %v2575
    %v2577 = vrot.slane %v2576, 1
    %v2578 = vadd.f32 %v2576, %v2577
    %v2579 = vmul.f32 %v2578, 0.0078125
    %v2580 = vmul.f32 %v2541, %v2541
    %v2581 = vsub.f32 %v2579, %v2580
    %v2582 = vmax.f32 %v2581, 0.0
    %v2583 = vsub.f32 %v2456, %v2541
    %v2584 = vsub.f32 %v2459, %v2541
    %v2585 = vsub.f32 %v2464, %v2541
    %v2586 = vsub.f32 %v2467, %v2541
    %v2587 = vsub.f32 %v2472, %v2541
    %v2588 = vsub.f32 %v2475, %v2541
    %v2589 = vsub.f32 %v2480, %v2541
    %v2590 = vsub.f32 %v2483, %v2541
    %v2591 = vsub.f32 %v2488, %v2541
    %v2592 = vsub.f32 %v2491, %v2541
    %v2593 = vsub.f32 %v2496, %v2541
    %v2594 = vsub.f32 %v2499, %v2541
    %v2595 = vsub.f32 %v2504, %v2541
    %v2596 = vsub.f32 %v2507, %v2541
    %v2597 = vsub.f32 %v2512, %v2541
    %v2598 = vsub.f32 %v2515, %v2541
    %v2599 = vadd.f32 %v2582, 1e-05
    %v2600 = vrsqrt.pop %v2599
    %v2601 = vmul.f32 %v2583, %v2600
    %v2602 = vmul.f32 %v2584, %v2600
    %v2603 = vmul.f32 %v2585, %v2600
    %v2604 = vmul.f32 %v2586, %v2600
    %v2605 = vmul.f32 %v2587, %v2600
    %v2606 = vmul.f32 %v2588, %v2600
    %v2607 = vmul.f32 %v2589, %v2600
    %v2608 = vmul.f32 %v2590, %v2600
    %v2609 = vmul.f32 %v2591, %v2600
    %v2610 = vmul.f32 %v2592, %v2600
    %v2611 = vmul.f32 %v2593, %v2600
    %v2612 = vmul.f32 %v2594, %v2600
    %v2613 = vmul.f32 %v2595, %v2600
    %v2614 = vmul.f32 %v2596, %v2600
    %v2615 = vmul.f32 %v2597, %v2600
    %v2616 = vmul.f32 %v2598, %v2600
    %v2618 = vlaneseq
    %v2619 = vshrl.u32 %v2618, 7
    %v2620 = vsub.s32 0, %v2619
    %v2621 = vrot.slane %v2518, %v2620
    %v2623 = vmul.f32 %v2601, %v2621
    %v2624 = vmul.f32 %v2602, %v2621
    %v2625 = vmul.f32 %v2603, %v2621
    %v2626 = vmul.f32 %v2604, %v2621
    %v2627 = vmul.f32 %v2605, %v2621
    %v2628 = vmul.f32 %v2606, %v2621
    %v2629 = vmul.f32 %v2607, %v2621
    %v2630 = vmul.f32 %v2608, %v2621
    %v2631 = vmul.f32 %v2609, %v2621
    %v2632 = vmul.f32 %v2610, %v2621
    %v2633 = vmul.f32 %v2611, %v2621
    %v2634 = vmul.f32 %v2612, %v2621
    %v2635 = vmul.f32 %v2613, %v2621
    %v2636 = vmul.f32 %v2614, %v2621
    %v2637 = vmul.f32 %v2615, %v2621
    %v2638 = vmul.f32 %v2616, %v2621
    %v2640 = vlaneseq
    %v2641 = vshrl.u32 %v2640, 7
    %v2642 = vsub.s32 0, %v2641
    %v2643 = vrot.slane %v2519, %v2642
    %v2645 = vadd.f32 %v2623, %v2643
    %v2646 = vadd.f32 %v2624, %v2643
    %v2647 = vadd.f32 %v2625, %v2643
    %v2648 = vadd.f32 %v2626, %v2643
    %v2649 = vadd.f32 %v2627, %v2643
    %v2650 = vadd.f32 %v2628, %v2643
    %v2651 = vadd.f32 %v2629, %v2643
    %v2652 = vadd.f32 %v2630, %v2643
    %v2653 = vadd.f32 %v2631, %v2643
    %v2654 = vadd.f32 %v2632, %v2643
    %v2655 = vadd.f32 %v2633, %v2643
    %v2656 = vadd.f32 %v2634, %v2643
    %v2657 = vadd.f32 %v2635, %v2643
    %v2658 = vadd.f32 %v2636, %v2643
    %v2659 = vadd.f32 %v2637, %v2643
    %v2660 = vadd.f32 %v2638, %v2643
    %v2661 = vmax.f32 %v2645, 0.0
    %v2662 = vmax.f32 %v2646, 0.0
    %v2663 = vmax.f32 %v2647, 0.0
    %v2664 = vmax.f32 %v2648, 0.0
    %v2665 = vmax.f32 %v2649, 0.0
    %v2666 = vmax.f32 %v2650, 0.0
    %v2667 = vmax.f32 %v2651, 0.0
    %v2668 = vmax.f32 %v2652, 0.0
    %v2669 = vmax.f32 %v2653, 0.0
    %v2670 = vmax.f32 %v2654, 0.0
    %v2671 = vmax.f32 %v2655, 0.0
    %v2672 = vmax.f32 %v2656, 0.0
    %v2673 = vmax.f32 %v2657, 0.0
    %v2674 = vmax.f32 %v2658, 0.0
    %v2675 = vmax.f32 %v2659, 0.0
    %v2676 = vmax.f32 %v2660, 0.0
    %v2677 = vpack.c.bf16 %v2662, %v2661
    %v2678 = vpack.c.bf16 %v2664, %v2663
    %v2679 = vpack.c.bf16 %v2666, %v2665
    %v2680 = vpack.c.bf16 %v2668, %v2667
    %v2681 = vpack.c.bf16 %v2670, %v2669
    %v2682 = vpack.c.bf16 %v2672, %v2671
    %v2683 = vpack.c.bf16 %v2674, %v2673
    %v2684 = vpack.c.bf16 %v2676, %v2675
    %v2685 = vld [vmem:[%s4] sm:$0xf]
    %v2686 = vld [vmem:[%s4 + $0x4] sm:$0xf]
    %v2687 = vld [vmem:[%s4 + $0x8] sm:$0xf]
    %v2688 = vld [vmem:[%s4 + $0xc] sm:$0xf]
    %v2689 = vld [vmem:[%s4 + $0x10] sm:$0xf]
    %v2690 = vld [vmem:[%s4 + $0x14] sm:$0xf]
    %v2691 = vld [vmem:[%s4 + $0x18] sm:$0xf]
    %v2692 = vld [vmem:[%s4 + $0x1c] sm:$0xf]
    %v2693 = vld [vmem:[%s4 + $0x20] sm:$0xf]
    %v2694 = vld [vmem:[%s4 + $0x24] sm:$0xf]
    %v2695 = vld [vmem:[%s4 + $0x28] sm:$0xf]
    %v2696 = vld [vmem:[%s4 + $0x2c] sm:$0xf]
    %v2697 = vld [vmem:[%s4 + $0x30] sm:$0xf]
    %v2698 = vld [vmem:[%s4 + $0x34] sm:$0xf]
    %v2699 = vld [vmem:[%s4 + $0x38] sm:$0xf]
    %v2700 = vld [vmem:[%s4 + $0x3c] sm:$0xf]
    %v2717 = vunpack.c.l.b16 %v2685
    %v2718 = vunpack.c.l.b16 %v2686
    %v2719 = vunpack.c.l.b16 %v2687
    %v2720 = vunpack.c.l.b16 %v2688
    %v2721 = vunpack.c.l.b16 %v2689
    %v2722 = vunpack.c.l.b16 %v2690
    %v2723 = vunpack.c.l.b16 %v2691
    %v2724 = vunpack.c.l.b16 %v2692
    %v2725 = vunpack.c.l.b16 %v2693
    %v2726 = vunpack.c.l.b16 %v2694
    %v2727 = vunpack.c.l.b16 %v2695
    %v2728 = vunpack.c.l.b16 %v2696
    %v2729 = vunpack.c.l.b16 %v2697
    %v2730 = vunpack.c.l.b16 %v2698
    %v2731 = vunpack.c.l.b16 %v2699
    %v2732 = vunpack.c.l.b16 %v2700
    %v2733 = vpack.c.b16 %v2718, %v2717
    %v2734 = vpack.c.b16 %v2720, %v2719
    %v2735 = vpack.c.b16 %v2722, %v2721
    %v2736 = vpack.c.b16 %v2724, %v2723
    %v2737 = vpack.c.b16 %v2726, %v2725
    %v2738 = vpack.c.b16 %v2728, %v2727
    %v2739 = vpack.c.b16 %v2730, %v2729
    %v2740 = vpack.c.b16 %v2732, %v2731
    %2749 = vmatprep.subr.bf16.mxu0 0
    %2750 = vmatpush1.bf16.msra.mxu0 %v2740
    %2751 = vmatprep.subr.bf16.mxu0 0
    %2752 = vmatpush1.bf16.msra.mxu0 %v2739
    %2753 = vmatprep.subr.bf16.mxu0 0
    %2754 = vmatpush1.bf16.msra.mxu0 %v2738
    %2755 = vmatprep.subr.bf16.mxu0 0
    %2756 = vmatpush1.bf16.msra.mxu0 %v2737
    %2757 = vmatprep.subr.bf16.mxu0 0
    %2758 = vmatpush1.bf16.msra.mxu0 %v2736
    %2759 = vmatprep.subr.bf16.mxu0 0
    %2760 = vmatpush1.bf16.msra.mxu0 %v2735
    %2761 = vmatprep.subr.bf16.mxu0 0
    %2762 = vmatpush1.bf16.msra.mxu0 %v2734
    %2763 = vmatprep.subr.bf16.mxu0 0
    %2764 = vmatpush1.bf16.msra.mxu0 %v2733
    %2765 = vmatprep.subr.bf16.mxu0 0
    %2766 = vmatpush2.bf16.msra.mxu0 0
    %2767 = vmatprep.subr.bf16.mxu0 0
    %2768 = vmatpush2.bf16.msra.mxu0 0
    %2769 = vmatprep.subr.bf16.mxu0 0
    %2770 = vmatpush2.bf16.msra.mxu0 0
    %2771 = vmatprep.subr.bf16.mxu0 0
    %2772 = vmatpush2.bf16.msra.mxu0 0
    %2773 = vmatprep.subr.bf16.mxu0 0
    %2774 = vmatpush2.bf16.msra.mxu0 0
    %2775 = vmatprep.subr.bf16.mxu0 0
    %2776 = vmatpush2.bf16.msra.mxu0 0
    %2777 = vmatprep.subr.bf16.mxu0 0
    %2778 = vmatpush2.bf16.msra.mxu0 0
    %2779 = vmatprep.subr.bf16.mxu0 0
    %2780 = vmatpush2.bf16.msra.mxu0 0
    %2781 = vmatprep.mubr.bf16.mxu0 0
    %2782 = vmatmul.mubr.bf16.gmra.mxu0 %v2677
    %v2783 = vpop.f32.mrf.mxu0
    %v2784 = vadd.f32 0.0, %v2783
    %v2785 = vpop.f32.mrf.mxu0
    %v2786 = vpop.f32.mrf.mxu0
    %v2787 = vadd.f32 0.0, %v2786
    %v2788 = vpop.f32.mrf.mxu0
    %2789 = vmatprep.mubr.bf16.mxu0 0
    %2790 = vmatmul.mubr.bf16.gmra.mxu0 %v2678
    %v2791 = vpop.f32.mrf.mxu0
    %v2792 = vadd.f32 0.0, %v2791
    %v2793 = vpop.f32.mrf.mxu0
    %v2794 = vpop.f32.mrf.mxu0
    %v2795 = vadd.f32 0.0, %v2794
    %v2796 = vpop.f32.mrf.mxu0
    %2797 = vmatprep.mubr.bf16.mxu0 0
    %2798 = vmatmul.mubr.bf16.gmra.mxu0 %v2679
    %v2799 = vpop.f32.mrf.mxu0
    %v2800 = vadd.f32 0.0, %v2799
    %v2801 = vpop.f32.mrf.mxu0
    %v2802 = vpop.f32.mrf.mxu0
    %v2803 = vadd.f32 0.0, %v2802
    %v2804 = vpop.f32.mrf.mxu0
    %2805 = vmatprep.mubr.bf16.mxu0 0
    %2806 = vmatmul.mubr.bf16.gmra.mxu0 %v2680
    %v2807 = vpop.f32.mrf.mxu0
    %v2808 = vadd.f32 0.0, %v2807
    %v2809 = vpop.f32.mrf.mxu0
    %v2810 = vpop.f32.mrf.mxu0
    %v2811 = vadd.f32 0.0, %v2810
    %v2812 = vpop.f32.mrf.mxu0
    %2813 = vmatprep.mubr.bf16.mxu0 0
    %2814 = vmatmul.mubr.bf16.gmra.mxu0 %v2681
    %v2815 = vpop.f32.mrf.mxu0
    %v2816 = vadd.f32 0.0, %v2815
    %v2817 = vpop.f32.mrf.mxu0
    %v2818 = vpop.f32.mrf.mxu0
    %v2819 = vadd.f32 0.0, %v2818
    %v2820 = vpop.f32.mrf.mxu0
    %2821 = vmatprep.mubr.bf16.mxu0 0
    %2822 = vmatmul.mubr.bf16.gmra.mxu0 %v2682
    %v2823 = vpop.f32.mrf.mxu0
    %v2824 = vadd.f32 0.0, %v2823
    %v2825 = vpop.f32.mrf.mxu0
    %v2826 = vpop.f32.mrf.mxu0
    %v2827 = vadd.f32 0.0, %v2826
    %v2828 = vpop.f32.mrf.mxu0
    %2829 = vmatprep.mubr.bf16.mxu0 0
    %2830 = vmatmul.mubr.bf16.gmra.mxu0 %v2683
    %v2831 = vpop.f32.mrf.mxu0
    %v2832 = vadd.f32 0.0, %v2831
    %v2833 = vpop.f32.mrf.mxu0
    %v2834 = vpop.f32.mrf.mxu0
    %v2835 = vadd.f32 0.0, %v2834
    %v2836 = vpop.f32.mrf.mxu0
    %2837 = vmatprep.mubr.bf16.mxu0 0
    %2838 = vmatmul.mubr.bf16.gmra.mxu0 %v2684
    %v2839 = vpop.f32.mrf.mxu0
    %v2840 = vadd.f32 0.0, %v2839
    %v2841 = vpop.f32.mrf.mxu0
    %v2842 = vpop.f32.mrf.mxu0
    %v2843 = vadd.f32 0.0, %v2842
    %v2844 = vpop.f32.mrf.mxu0
    %2845 = vdwg.mxu0
    %v2846 = vld [vmem:[%s10] sm:$0x1]
    %v2847 = vld [vmem:[%s11] sm:$0x1]
    %v2848 = vadd.f32 %v2784, %v2787
    %v2849 = vadd.f32 %v2848, %v2792
    %v2850 = vadd.f32 %v2849, %v2795
    %v2851 = vadd.f32 %v2850, %v2800
    %v2852 = vadd.f32 %v2851, %v2803
    %v2853 = vadd.f32 %v2852, %v2808
    %v2854 = vadd.f32 %v2853, %v2811
    %v2855 = vadd.f32 %v2854, %v2816
    %v2856 = vadd.f32 %v2855, %v2819
    %v2857 = vadd.f32 %v2856, %v2824
    %v2858 = vadd.f32 %v2857, %v2827
    %v2859 = vadd.f32 %v2858, %v2832
    %v2860 = vadd.f32 %v2859, %v2835
    %v2861 = vadd.f32 %v2860, %v2840
    %v2862 = vadd.f32 %v2861, %v2843
    %v2863 = vrot.slane %v2862, 4
    %v2864 = vadd.f32 %v2862, %v2863
    %v2865 = vrot.slane %v2864, 2
    %v2866 = vadd.f32 %v2864, %v2865
    %v2867 = vrot.slane %v2866, 1
    %v2868 = vadd.f32 %v2866, %v2867
    %v2869 = vmul.f32 %v2868, 0.0078125
    %v2870 = vmul.f32 %v2784, %v2784
    %v2871 = vmul.f32 %v2787, %v2787
    %v2872 = vmul.f32 %v2792, %v2792
    %v2873 = vmul.f32 %v2795, %v2795
    %v2874 = vmul.f32 %v2800, %v2800
    %v2875 = vmul.f32 %v2803, %v2803
    %v2876 = vmul.f32 %v2808, %v2808
    %v2877 = vmul.f32 %v2811, %v2811
    %v2878 = vmul.f32 %v2816, %v2816
    %v2879 = vmul.f32 %v2819, %v2819
    %v2880 = vmul.f32 %v2824, %v2824
    %v2881 = vmul.f32 %v2827, %v2827
    %v2882 = vmul.f32 %v2832, %v2832
    %v2883 = vmul.f32 %v2835, %v2835
    %v2884 = vmul.f32 %v2840, %v2840
    %v2885 = vmul.f32 %v2843, %v2843
    %v2886 = vadd.f32 %v2870, %v2871
    %v2887 = vadd.f32 %v2886, %v2872
    %v2888 = vadd.f32 %v2887, %v2873
    %v2889 = vadd.f32 %v2888, %v2874
    %v2890 = vadd.f32 %v2889, %v2875
    %v2891 = vadd.f32 %v2890, %v2876
    %v2892 = vadd.f32 %v2891, %v2877
    %v2893 = vadd.f32 %v2892, %v2878
    %v2894 = vadd.f32 %v2893, %v2879
    %v2895 = vadd.f32 %v2894, %v2880
    %v2896 = vadd.f32 %v2895, %v2881
    %v2897 = vadd.f32 %v2896, %v2882
    %v2898 = vadd.f32 %v2897, %v2883
    %v2899 = vadd.f32 %v2898, %v2884
    %v2900 = vadd.f32 %v2899, %v2885
    %v2901 = vrot.slane %v2900, 4
    %v2902 = vadd.f32 %v2900, %v2901
    %v2903 = vrot.slane %v2902, 2
    %v2904 = vadd.f32 %v2902, %v2903
    %v2905 = vrot.slane %v2904, 1
    %v2906 = vadd.f32 %v2904, %v2905
    %v2907 = vmul.f32 %v2906, 0.0078125
    %v2908 = vmul.f32 %v2869, %v2869
    %v2909 = vsub.f32 %v2907, %v2908
    %v2910 = vmax.f32 %v2909, 0.0
    %v2911 = vsub.f32 %v2784, %v2869
    %v2912 = vsub.f32 %v2787, %v2869
    %v2913 = vsub.f32 %v2792, %v2869
    %v2914 = vsub.f32 %v2795, %v2869
    %v2915 = vsub.f32 %v2800, %v2869
    %v2916 = vsub.f32 %v2803, %v2869
    %v2917 = vsub.f32 %v2808, %v2869
    %v2918 = vsub.f32 %v2811, %v2869
    %v2919 = vsub.f32 %v2816, %v2869
    %v2920 = vsub.f32 %v2819, %v2869
    %v2921 = vsub.f32 %v2824, %v2869
    %v2922 = vsub.f32 %v2827, %v2869
    %v2923 = vsub.f32 %v2832, %v2869
    %v2924 = vsub.f32 %v2835, %v2869
    %v2925 = vsub.f32 %v2840, %v2869
    %v2926 = vsub.f32 %v2843, %v2869
    %v2927 = vadd.f32 %v2910, 1e-05
    %v2928 = vrsqrt.pop %v2927
    %v2929 = vmul.f32 %v2911, %v2928
    %v2930 = vmul.f32 %v2912, %v2928
    %v2931 = vmul.f32 %v2913, %v2928
    %v2932 = vmul.f32 %v2914, %v2928
    %v2933 = vmul.f32 %v2915, %v2928
    %v2934 = vmul.f32 %v2916, %v2928
    %v2935 = vmul.f32 %v2917, %v2928
    %v2936 = vmul.f32 %v2918, %v2928
    %v2937 = vmul.f32 %v2919, %v2928
    %v2938 = vmul.f32 %v2920, %v2928
    %v2939 = vmul.f32 %v2921, %v2928
    %v2940 = vmul.f32 %v2922, %v2928
    %v2941 = vmul.f32 %v2923, %v2928
    %v2942 = vmul.f32 %v2924, %v2928
    %v2943 = vmul.f32 %v2925, %v2928
    %v2944 = vmul.f32 %v2926, %v2928
    %v2946 = vlaneseq
    %v2947 = vshrl.u32 %v2946, 7
    %v2948 = vsub.s32 0, %v2947
    %v2949 = vrot.slane %v2846, %v2948
    %v2951 = vmul.f32 %v2929, %v2949
    %v2952 = vmul.f32 %v2930, %v2949
    %v2953 = vmul.f32 %v2931, %v2949
    %v2954 = vmul.f32 %v2932, %v2949
    %v2955 = vmul.f32 %v2933, %v2949
    %v2956 = vmul.f32 %v2934, %v2949
    %v2957 = vmul.f32 %v2935, %v2949
    %v2958 = vmul.f32 %v2936, %v2949
    %v2959 = vmul.f32 %v2937, %v2949
    %v2960 = vmul.f32 %v2938, %v2949
    %v2961 = vmul.f32 %v2939, %v2949
    %v2962 = vmul.f32 %v2940, %v2949
    %v2963 = vmul.f32 %v2941, %v2949
    %v2964 = vmul.f32 %v2942, %v2949
    %v2965 = vmul.f32 %v2943, %v2949
    %v2966 = vmul.f32 %v2944, %v2949
    %v2968 = vlaneseq
    %v2969 = vshrl.u32 %v2968, 7
    %v2970 = vsub.s32 0, %v2969
    %v2971 = vrot.slane %v2847, %v2970
    %v2973 = vadd.f32 %v2951, %v2971
    %v2974 = vadd.f32 %v2952, %v2971
    %v2975 = vadd.f32 %v2953, %v2971
    %v2976 = vadd.f32 %v2954, %v2971
    %v2977 = vadd.f32 %v2955, %v2971
    %v2978 = vadd.f32 %v2956, %v2971
    %v2979 = vadd.f32 %v2957, %v2971
    %v2980 = vadd.f32 %v2958, %v2971
    %v2981 = vadd.f32 %v2959, %v2971
    %v2982 = vadd.f32 %v2960, %v2971
    %v2983 = vadd.f32 %v2961, %v2971
    %v2984 = vadd.f32 %v2962, %v2971
    %v2985 = vadd.f32 %v2963, %v2971
    %v2986 = vadd.f32 %v2964, %v2971
    %v2987 = vadd.f32 %v2965, %v2971
    %v2988 = vadd.f32 %v2966, %v2971
    %v2989 = vld [vmem:[%s1] sm:$0xff]
    %v2990 = vld [vmem:[%s1 + $0x8] sm:$0xff]
    %v2991 = vld [vmem:[%s1 + $0x10] sm:$0xff]
    %v2992 = vld [vmem:[%s1 + $0x18] sm:$0xff]
    %v2993 = vld [vmem:[%s1 + $0x20] sm:$0xff]
    %v2994 = vld [vmem:[%s1 + $0x28] sm:$0xff]
    %v2995 = vld [vmem:[%s1 + $0x30] sm:$0xff]
    %v2996 = vld [vmem:[%s1 + $0x38] sm:$0xff]
    %v2997 = vld [vmem:[%s1 + $0x40] sm:$0xff]
    %v2998 = vld [vmem:[%s1 + $0x48] sm:$0xff]
    %v2999 = vld [vmem:[%s1 + $0x50] sm:$0xff]
    %v3000 = vld [vmem:[%s1 + $0x58] sm:$0xff]
    %v3001 = vld [vmem:[%s1 + $0x60] sm:$0xff]
    %v3002 = vld [vmem:[%s1 + $0x68] sm:$0xff]
    %v3003 = vld [vmem:[%s1 + $0x70] sm:$0xff]
    %v3004 = vld [vmem:[%s1 + $0x78] sm:$0xff]
    %v3005 = vpack.c.bf16 %v2990, %v2989
    %v3006 = vpack.c.bf16 %v2992, %v2991
    %v3007 = vpack.c.bf16 %v2994, %v2993
    %v3008 = vpack.c.bf16 %v2996, %v2995
    %v3009 = vpack.c.bf16 %v2998, %v2997
    %v3010 = vpack.c.bf16 %v3000, %v2999
    %v3011 = vpack.c.bf16 %v3002, %v3001
    %v3012 = vpack.c.bf16 %v3004, %v3003
    %v3013 = vld [vmem:[%s5] sm:$0xf]
    %v3014 = vld [vmem:[%s5 + $0x4] sm:$0xf]
    %v3017 = vunpack.c.l.b16 %v3013
    %v3018 = vunpack.c.l.b16 %v3014
    %v3019 = vpack.c.b16 %v3018, %v3017
    %v3022 = vsel %vm153, %v3005, 0
    %v3025 = vsel %vm153, %v3006, 0
    %v3028 = vsel %vm153, %v3007, 0
    %v3031 = vsel %vm153, %v3008, 0
    %v3034 = vsel %vm153, %v3009, 0
    %v3037 = vsel %vm153, %v3010, 0
    %v3040 = vsel %vm153, %v3011, 0
    %v3043 = vsel %vm153, %v3012, 0
    %3045 = vmatprep.subr.bf16.mxu0 0
    %3046 = vmatpush1.bf16.msra.mxu0 0
    %3047 = vmatprep.subr.bf16.mxu0 0
    %3048 = vmatpush1.bf16.msra.mxu0 0
    %3049 = vmatprep.subr.bf16.mxu0 0
    %3050 = vmatpush1.bf16.msra.mxu0 0
    %3051 = vmatprep.subr.bf16.mxu0 0
    %3052 = vmatpush1.bf16.msra.mxu0 0
    %3053 = vmatprep.subr.bf16.mxu0 0
    %3054 = vmatpush1.bf16.msra.mxu0 0
    %3055 = vmatprep.subr.bf16.mxu0 0
    %3056 = vmatpush1.bf16.msra.mxu0 0
    %3057 = vmatprep.subr.bf16.mxu0 0
    %3058 = vmatpush1.bf16.msra.mxu0 0
    %3059 = vmatprep.subr.bf16.mxu0 0
    %3060 = vmatpush1.bf16.msra.mxu0 %v3019
    %3061 = vmatprep.subr.bf16.mxu0 0
    %3062 = vmatpush2.bf16.msra.mxu0 0
    %3063 = vmatprep.subr.bf16.mxu0 0
    %3064 = vmatpush2.bf16.msra.mxu0 0
    %3065 = vmatprep.subr.bf16.mxu0 0
    %3066 = vmatpush2.bf16.msra.mxu0 0
    %3067 = vmatprep.subr.bf16.mxu0 0
    %3068 = vmatpush2.bf16.msra.mxu0 0
    %3069 = vmatprep.subr.bf16.mxu0 0
    %3070 = vmatpush2.bf16.msra.mxu0 0
    %3071 = vmatprep.subr.bf16.mxu0 0
    %3072 = vmatpush2.bf16.msra.mxu0 0
    %3073 = vmatprep.subr.bf16.mxu0 0
    %3074 = vmatpush2.bf16.msra.mxu0 0
    %3075 = vmatprep.subr.bf16.mxu0 0
    %3076 = vmatpush2.bf16.msra.mxu0 0
    %3077 = vmatprep.mubr.bf16.mxu0 0
    %3078 = vmatmul.mubr.bf16.gmra.mxu0 %v3022
    %v3079 = vpop.f32.mrf.mxu0
    %v3080 = vadd.f32 0.0, %v3079
    %v3081 = vpop.f32.mrf.mxu0
    %v3082 = vpop.f32.mrf.mxu0
    %v3083 = vadd.f32 0.0, %v3082
    %v3084 = vpop.f32.mrf.mxu0
    %3085 = vmatprep.mubr.bf16.mxu0 0
    %3086 = vmatmul.mubr.bf16.gmra.mxu0 %v3025
    %v3087 = vpop.f32.mrf.mxu0
    %v3088 = vadd.f32 0.0, %v3087
    %v3089 = vpop.f32.mrf.mxu0
    %v3090 = vpop.f32.mrf.mxu0
    %v3091 = vadd.f32 0.0, %v3090
    %v3092 = vpop.f32.mrf.mxu0
    %3093 = vmatprep.mubr.bf16.mxu0 0
    %3094 = vmatmul.mubr.bf16.gmra.mxu0 %v3028
    %v3095 = vpop.f32.mrf.mxu0
    %v3096 = vadd.f32 0.0, %v3095
    %v3097 = vpop.f32.mrf.mxu0
    %v3098 = vpop.f32.mrf.mxu0
    %v3099 = vadd.f32 0.0, %v3098
    %v3100 = vpop.f32.mrf.mxu0
    %3101 = vmatprep.mubr.bf16.mxu0 0
    %3102 = vmatmul.mubr.bf16.gmra.mxu0 %v3031
    %v3103 = vpop.f32.mrf.mxu0
    %v3104 = vadd.f32 0.0, %v3103
    %v3105 = vpop.f32.mrf.mxu0
    %v3106 = vpop.f32.mrf.mxu0
    %v3107 = vadd.f32 0.0, %v3106
    %v3108 = vpop.f32.mrf.mxu0
    %3109 = vmatprep.mubr.bf16.mxu0 0
    %3110 = vmatmul.mubr.bf16.gmra.mxu0 %v3034
    %v3111 = vpop.f32.mrf.mxu0
    %v3112 = vadd.f32 0.0, %v3111
    %v3113 = vpop.f32.mrf.mxu0
    %v3114 = vpop.f32.mrf.mxu0
    %v3115 = vadd.f32 0.0, %v3114
    %v3116 = vpop.f32.mrf.mxu0
    %3117 = vmatprep.mubr.bf16.mxu0 0
    %3118 = vmatmul.mubr.bf16.gmra.mxu0 %v3037
    %v3119 = vpop.f32.mrf.mxu0
    %v3120 = vadd.f32 0.0, %v3119
    %v3121 = vpop.f32.mrf.mxu0
    %v3122 = vpop.f32.mrf.mxu0
    %v3123 = vadd.f32 0.0, %v3122
    %v3124 = vpop.f32.mrf.mxu0
    %3125 = vmatprep.mubr.bf16.mxu0 0
    %3126 = vmatmul.mubr.bf16.gmra.mxu0 %v3040
    %v3127 = vpop.f32.mrf.mxu0
    %v3128 = vadd.f32 0.0, %v3127
    %v3129 = vpop.f32.mrf.mxu0
    %v3130 = vpop.f32.mrf.mxu0
    %v3131 = vadd.f32 0.0, %v3130
    %v3132 = vpop.f32.mrf.mxu0
    %3133 = vmatprep.mubr.bf16.mxu0 0
    %3134 = vmatmul.mubr.bf16.gmra.mxu0 %v3043
    %v3135 = vpop.f32.mrf.mxu0
    %v3136 = vadd.f32 0.0, %v3135
    %v3137 = vpop.f32.mrf.mxu0
    %v3138 = vpop.f32.mrf.mxu0
    %v3139 = vadd.f32 0.0, %v3138
    %v3140 = vpop.f32.mrf.mxu0
    %3141 = vdwg.mxu0
    %v3142 = vld [vmem:[%s12] sm:$0x1]
    %v3143 = vld [vmem:[%s13] sm:$0x1]
    %v3144 = vadd.f32 %v3080, %v3083
    %v3145 = vadd.f32 %v3144, %v3088
    %v3146 = vadd.f32 %v3145, %v3091
    %v3147 = vadd.f32 %v3146, %v3096
    %v3148 = vadd.f32 %v3147, %v3099
    %v3149 = vadd.f32 %v3148, %v3104
    %v3150 = vadd.f32 %v3149, %v3107
    %v3151 = vadd.f32 %v3150, %v3112
    %v3152 = vadd.f32 %v3151, %v3115
    %v3153 = vadd.f32 %v3152, %v3120
    %v3154 = vadd.f32 %v3153, %v3123
    %v3155 = vadd.f32 %v3154, %v3128
    %v3156 = vadd.f32 %v3155, %v3131
    %v3157 = vadd.f32 %v3156, %v3136
    %v3158 = vadd.f32 %v3157, %v3139
    %v3159 = vrot.slane %v3158, 4
    %v3160 = vadd.f32 %v3158, %v3159
    %v3161 = vrot.slane %v3160, 2
    %v3162 = vadd.f32 %v3160, %v3161
    %v3163 = vrot.slane %v3162, 1
    %v3164 = vadd.f32 %v3162, %v3163
    %v3165 = vmul.f32 %v3164, 0.0078125
    %v3166 = vmul.f32 %v3080, %v3080
    %v3167 = vmul.f32 %v3083, %v3083
    %v3168 = vmul.f32 %v3088, %v3088
    %v3169 = vmul.f32 %v3091, %v3091
    %v3170 = vmul.f32 %v3096, %v3096
    %v3171 = vmul.f32 %v3099, %v3099
    %v3172 = vmul.f32 %v3104, %v3104
    %v3173 = vmul.f32 %v3107, %v3107
    %v3174 = vmul.f32 %v3112, %v3112
    %v3175 = vmul.f32 %v3115, %v3115
    %v3176 = vmul.f32 %v3120, %v3120
    %v3177 = vmul.f32 %v3123, %v3123
    %v3178 = vmul.f32 %v3128, %v3128
    %v3179 = vmul.f32 %v3131, %v3131
    %v3180 = vmul.f32 %v3136, %v3136
    %v3181 = vmul.f32 %v3139, %v3139
    %v3182 = vadd.f32 %v3166, %v3167
    %v3183 = vadd.f32 %v3182, %v3168
    %v3184 = vadd.f32 %v3183, %v3169
    %v3185 = vadd.f32 %v3184, %v3170
    %v3186 = vadd.f32 %v3185, %v3171
    %v3187 = vadd.f32 %v3186, %v3172
    %v3188 = vadd.f32 %v3187, %v3173
    %v3189 = vadd.f32 %v3188, %v3174
    %v3190 = vadd.f32 %v3189, %v3175
    %v3191 = vadd.f32 %v3190, %v3176
    %v3192 = vadd.f32 %v3191, %v3177
    %v3193 = vadd.f32 %v3192, %v3178
    %v3194 = vadd.f32 %v3193, %v3179
    %v3195 = vadd.f32 %v3194, %v3180
    %v3196 = vadd.f32 %v3195, %v3181
    %v3197 = vrot.slane %v3196, 4
    %v3198 = vadd.f32 %v3196, %v3197
    %v3199 = vrot.slane %v3198, 2
    %v3200 = vadd.f32 %v3198, %v3199
    %v3201 = vrot.slane %v3200, 1
    %v3202 = vadd.f32 %v3200, %v3201
    %v3203 = vmul.f32 %v3202, 0.0078125
    %v3204 = vmul.f32 %v3165, %v3165
    %v3205 = vsub.f32 %v3203, %v3204
    %v3206 = vmax.f32 %v3205, 0.0
    %v3207 = vsub.f32 %v3080, %v3165
    %v3208 = vsub.f32 %v3083, %v3165
    %v3209 = vsub.f32 %v3088, %v3165
    %v3210 = vsub.f32 %v3091, %v3165
    %v3211 = vsub.f32 %v3096, %v3165
    %v3212 = vsub.f32 %v3099, %v3165
    %v3213 = vsub.f32 %v3104, %v3165
    %v3214 = vsub.f32 %v3107, %v3165
    %v3215 = vsub.f32 %v3112, %v3165
    %v3216 = vsub.f32 %v3115, %v3165
    %v3217 = vsub.f32 %v3120, %v3165
    %v3218 = vsub.f32 %v3123, %v3165
    %v3219 = vsub.f32 %v3128, %v3165
    %v3220 = vsub.f32 %v3131, %v3165
    %v3221 = vsub.f32 %v3136, %v3165
    %v3222 = vsub.f32 %v3139, %v3165
    %v3223 = vadd.f32 %v3206, 1e-05
    %v3224 = vrsqrt.pop %v3223
    %v3225 = vmul.f32 %v3207, %v3224
    %v3226 = vmul.f32 %v3208, %v3224
    %v3227 = vmul.f32 %v3209, %v3224
    %v3228 = vmul.f32 %v3210, %v3224
    %v3229 = vmul.f32 %v3211, %v3224
    %v3230 = vmul.f32 %v3212, %v3224
    %v3231 = vmul.f32 %v3213, %v3224
    %v3232 = vmul.f32 %v3214, %v3224
    %v3233 = vmul.f32 %v3215, %v3224
    %v3234 = vmul.f32 %v3216, %v3224
    %v3235 = vmul.f32 %v3217, %v3224
    %v3236 = vmul.f32 %v3218, %v3224
    %v3237 = vmul.f32 %v3219, %v3224
    %v3238 = vmul.f32 %v3220, %v3224
    %v3239 = vmul.f32 %v3221, %v3224
    %v3240 = vmul.f32 %v3222, %v3224
    %v3242 = vlaneseq
    %v3243 = vshrl.u32 %v3242, 7
    %v3244 = vsub.s32 0, %v3243
    %v3245 = vrot.slane %v3142, %v3244
    %v3247 = vmul.f32 %v3225, %v3245
    %v3248 = vmul.f32 %v3226, %v3245
    %v3249 = vmul.f32 %v3227, %v3245
    %v3250 = vmul.f32 %v3228, %v3245
    %v3251 = vmul.f32 %v3229, %v3245
    %v3252 = vmul.f32 %v3230, %v3245
    %v3253 = vmul.f32 %v3231, %v3245
    %v3254 = vmul.f32 %v3232, %v3245
    %v3255 = vmul.f32 %v3233, %v3245
    %v3256 = vmul.f32 %v3234, %v3245
    %v3257 = vmul.f32 %v3235, %v3245
    %v3258 = vmul.f32 %v3236, %v3245
    %v3259 = vmul.f32 %v3237, %v3245
    %v3260 = vmul.f32 %v3238, %v3245
    %v3261 = vmul.f32 %v3239, %v3245
    %v3262 = vmul.f32 %v3240, %v3245
    %v3264 = vlaneseq
    %v3265 = vshrl.u32 %v3264, 7
    %v3266 = vsub.s32 0, %v3265
    %v3267 = vrot.slane %v3143, %v3266
    %v3269 = vadd.f32 %v3247, %v3267
    %v3270 = vadd.f32 %v3248, %v3267
    %v3271 = vadd.f32 %v3249, %v3267
    %v3272 = vadd.f32 %v3250, %v3267
    %v3273 = vadd.f32 %v3251, %v3267
    %v3274 = vadd.f32 %v3252, %v3267
    %v3275 = vadd.f32 %v3253, %v3267
    %v3276 = vadd.f32 %v3254, %v3267
    %v3277 = vadd.f32 %v3255, %v3267
    %v3278 = vadd.f32 %v3256, %v3267
    %v3279 = vadd.f32 %v3257, %v3267
    %v3280 = vadd.f32 %v3258, %v3267
    %v3281 = vadd.f32 %v3259, %v3267
    %v3282 = vadd.f32 %v3260, %v3267
    %v3283 = vadd.f32 %v3261, %v3267
    %v3284 = vadd.f32 %v3262, %v3267
    %v3285 = vadd.f32 %v2973, %v3269
    %v3286 = vadd.f32 %v2974, %v3270
    %v3287 = vadd.f32 %v2975, %v3271
    %v3288 = vadd.f32 %v2976, %v3272
    %v3289 = vadd.f32 %v2977, %v3273
    %v3290 = vadd.f32 %v2978, %v3274
    %v3291 = vadd.f32 %v2979, %v3275
    %v3292 = vadd.f32 %v2980, %v3276
    %v3293 = vadd.f32 %v2981, %v3277
    %v3294 = vadd.f32 %v2982, %v3278
    %v3295 = vadd.f32 %v2983, %v3279
    %v3296 = vadd.f32 %v2984, %v3280
    %v3297 = vadd.f32 %v2985, %v3281
    %v3298 = vadd.f32 %v2986, %v3282
    %v3299 = vadd.f32 %v2987, %v3283
    %v3300 = vadd.f32 %v2988, %v3284
    %v3301 = vmax.f32 %v3285, 0.0
    %v3302 = vmax.f32 %v3286, 0.0
    %v3303 = vmax.f32 %v3287, 0.0
    %v3304 = vmax.f32 %v3288, 0.0
    %v3305 = vmax.f32 %v3289, 0.0
    %v3306 = vmax.f32 %v3290, 0.0
    %v3307 = vmax.f32 %v3291, 0.0
    %v3308 = vmax.f32 %v3292, 0.0
    %v3309 = vmax.f32 %v3293, 0.0
    %v3310 = vmax.f32 %v3294, 0.0
    %v3311 = vmax.f32 %v3295, 0.0
    %v3312 = vmax.f32 %v3296, 0.0
    %v3313 = vmax.f32 %v3297, 0.0
    %v3314 = vmax.f32 %v3298, 0.0
    %v3315 = vmax.f32 %v3299, 0.0
    %v3316 = vmax.f32 %v3300, 0.0
    %v3317 = vpack.c.bf16 %v3302, %v3301
    %v3318 = vpack.c.bf16 %v3304, %v3303
    %v3319 = vpack.c.bf16 %v3306, %v3305
    %v3320 = vpack.c.bf16 %v3308, %v3307
    %v3321 = vpack.c.bf16 %v3310, %v3309
    %v3322 = vpack.c.bf16 %v3312, %v3311
    %v3323 = vpack.c.bf16 %v3314, %v3313
    %v3324 = vpack.c.bf16 %v3316, %v3315
    %v3333 = vunpack.c.l.b16 %v3317
    %v3334 = vunpack.c.h.b16 %v3317
    %v3335 = vunpack.c.l.b16 %v3318
    %v3336 = vunpack.c.h.b16 %v3318
    %v3337 = vunpack.c.l.b16 %v3319
    %v3338 = vunpack.c.h.b16 %v3319
    %v3339 = vunpack.c.l.b16 %v3320
    %v3340 = vunpack.c.h.b16 %v3320
    %v3341 = vunpack.c.l.b16 %v3321
    %v3342 = vunpack.c.h.b16 %v3321
    %v3343 = vunpack.c.l.b16 %v3322
    %v3344 = vunpack.c.h.b16 %v3322
    %v3345 = vunpack.c.l.b16 %v3323
    %v3346 = vunpack.c.h.b16 %v3323
    %v3347 = vunpack.c.l.b16 %v3324
    %v3348 = vunpack.c.h.b16 %v3324
    %v3349 = vpack.c.b16 %v3333, %v3333
    %v3350 = vpack.c.b16 %v3334, %v3334
    %v3351 = vpack.c.b16 %v3335, %v3335
    %v3352 = vpack.c.b16 %v3336, %v3336
    %v3353 = vpack.c.b16 %v3337, %v3337
    %v3354 = vpack.c.b16 %v3338, %v3338
    %v3355 = vpack.c.b16 %v3339, %v3339
    %v3356 = vpack.c.b16 %v3340, %v3340
    %v3357 = vpack.c.b16 %v3341, %v3341
    %v3358 = vpack.c.b16 %v3342, %v3342
    %v3359 = vpack.c.b16 %v3343, %v3343
    %v3360 = vpack.c.b16 %v3344, %v3344
    %v3361 = vpack.c.b16 %v3345, %v3345
    %v3362 = vpack.c.b16 %v3346, %v3346
    %v3363 = vpack.c.b16 %v3347, %v3347
    %v3364 = vpack.c.b16 %v3348, %v3348
    %3381 = vst [vmem:[#allocation3] sm:$0xf] %v3349
    %3382 = vst [vmem:[#allocation3 + $0x4] sm:$0xf] %v3350
    %3383 = vst [vmem:[#allocation3 + $0x8] sm:$0xf] %v3351
    %3384 = vst [vmem:[#allocation3 + $0xc] sm:$0xf] %v3352
    %3385 = vst [vmem:[#allocation3 + $0x10] sm:$0xf] %v3353
    %3386 = vst [vmem:[#allocation3 + $0x14] sm:$0xf] %v3354
    %3387 = vst [vmem:[#allocation3 + $0x18] sm:$0xf] %v3355
    %3388 = vst [vmem:[#allocation3 + $0x1c] sm:$0xf] %v3356
    %3389 = vst [vmem:[#allocation3 + $0x20] sm:$0xf] %v3357
    %3390 = vst [vmem:[#allocation3 + $0x24] sm:$0xf] %v3358
    %3391 = vst [vmem:[#allocation3 + $0x28] sm:$0xf] %v3359
    %3392 = vst [vmem:[#allocation3 + $0x2c] sm:$0xf] %v3360
    %3393 = vst [vmem:[#allocation3 + $0x30] sm:$0xf] %v3361
    %3394 = vst [vmem:[#allocation3 + $0x34] sm:$0xf] %v3362
    %3395 = vst [vmem:[#allocation3 + $0x38] sm:$0xf] %v3363
    %3396 = vst [vmem:[#allocation3 + $0x3c] sm:$0xf] %v3364
    // Predicated region
    $region58: #{tpu_custom_call.1} parent=1 // pred_check
      _
    $region59: #{tpu_custom_call.1} parent=1 // pred_check_branch
      %3398 = sbr.rel (0) target = $region61
    $region60: #{tpu_custom_call.1} parent=1 // pred_region
      %s3400 = ssub.s32 1024, 1024
      %3401 = vsyncadd [#allocation4], %s3400
      %s3402 = sshll.u32 [#allocation3], 4
      %s3403 = int_to_ptr.vmem [resolvable:$true] %s3402
      %3408 = dma.vmem_to_hbm [thread:$0]  %s3403, 1024, %s14, [#allocation4], 64, 64, 4
    $region61: #{tpu_custom_call.1} parent=1 // pred_fallthru
      _
    // Predicated region
    $region62: #{tpu_custom_call.1} parent=1 // pred_check
      _
    $region63: #{tpu_custom_call.1} parent=1 // pred_check_branch
      %3410 = sbr.rel (0) target = $region65
    $region64: #{tpu_custom_call.1} parent=1 // pred_region
      %3411 = dma.done [#allocation4], 1024
    $region65: #{tpu_custom_call.1} parent=1 // pred_fallthru
      _
    %3412 = vsyncpa [#allocation4], 1

</llo_original>
